<compile_context>
chip_gen: v7x
topology: tpu7x:2x2x1
jax: 0.10.0
libtpu: 0.0.40
codegen_flags: <defaults>
</compile_context>

<pallas_src>
import functools
import math

import jax
import jax.numpy as jnp
from jax import lax
from jax.experimental import pallas as pl
from jax.experimental.pallas import tpu as pltpu


def _block_kernel(x_ref, mask_ref, w_attn_ref, b_attn_ref, w_proj_ref,
                  b_proj_ref, w_mlp_ref, b_mlp_ref, o_ref,
                  qkv_scratch, y_scratch, *, n_head, head_dim):
    T, C = x_ref.shape   # batch dim squeezed -> (T, C)

    # ---- qkv projection: bf16 operands, f32 accumulation ----
    # (1/sqrt(head_dim) is pre-folded into the q columns of W_attn / b_attn.)
    x_bf = x_ref[...].astype(jnp.bfloat16)
    qkv = jnp.dot(x_bf, w_attn_ref[...],
                  preferred_element_type=jnp.float32) + b_attn_ref[...]   # (T,3C) f32
    qkv_scratch[...] = qkv.astype(jnp.bfloat16)   # park in VMEM; f32 temp dies here

    # ---- per-head causal attention ----
    # Static lane offsets (head_dim=32) keep slicing on the guaranteed lowering
    # path; operands come from the bf16 scratch so only one head's temporaries
    # are live at a time, and each head's values die at the y_scratch store.
    for h in range(n_head):
        lo = h * head_dim
        hi = lo + head_dim
        q_h = qkv_scratch[:, lo:hi]                    # (T, hd) bf16 (pre-scaled)
        k_h = qkv_scratch[:, C + lo:C + hi]            # (T, hd) bf16
        v_h = qkv_scratch[:, 2 * C + lo:2 * C + hi]    # (T, hd) bf16

        # QK^T without materializing k.T (NT dot_general, f32 accumulation)
        s = lax.dot_general(q_h, k_h, (((1,), (1,)), ((), ())),
                            preferred_element_type=jnp.float32)           # (T, T)
        s = s + mask_ref[...]                          # additive causal bias (f32)

        m = jnp.max(s, axis=-1, keepdims=True)
        p = jnp.exp(s - m)                             # unnormalized probs (f32)
        l = jnp.sum(p, axis=-1, keepdims=True)

        y_h = jnp.dot(p.astype(jnp.bfloat16), v_h,
                      preferred_element_type=jnp.float32)                 # (T, hd)
        # normalize after PV: (T, head_dim) multiply instead of (T, T)
        y_h = y_h * pl.reciprocal(l, approx=True)
        y_scratch[:, lo:hi] = y_h.astype(jnp.bfloat16)

    # ---- attention output projection + first residual (f32) ----
    attn_out = jnp.dot(y_scratch[...], w_proj_ref[...],
                       preferred_element_type=jnp.float32) + b_proj_ref[...]
    x1 = x_ref[...] + attn_out                                            # (T, C) f32

    # ---- fused activation-free MLP (single CxC matmul) + second residual ----
    h2 = jnp.dot(x1.astype(jnp.bfloat16), w_mlp_ref[...],
                 preferred_element_type=jnp.float32) + b_mlp_ref[...]     # (T, C)
    o_ref[...] = (x1 + h2).astype(o_ref.dtype)


def block_forward(x, params, *, n_head):
    """x: (B, T, C) float32. params: dict of (in,out) f32 weights + (1,out) biases."""
    B, T, C = x.shape
    head_dim = C // n_head

    # Fold the attention scale into the q columns of W_attn / b_attn (f32).
    scale = 1.0 / math.sqrt(head_dim)
    col_scale = jnp.concatenate(
        [jnp.full((1, C), scale, jnp.float32),
         jnp.ones((1, 2 * C), jnp.float32)], axis=1)
    w_attn = (params["w_attn"] * col_scale).astype(jnp.bfloat16)
    b_attn = params["b_attn"] * col_scale                                   # f32

    w_proj = params["w_proj"].astype(jnp.bfloat16)
    b_proj = params["b_proj"]                                               # f32

    # Algebraic fusion of the activation-free MLP (fold in f32, then cast).
    w_mlp = (params["w_fc"] @ params["w_proj2"]).astype(jnp.bfloat16)       # (C, C)
    b_mlp = params["b_fc"] @ params["w_proj2"] + params["b_proj2"]          # (1, C) f32

    # Additive causal bias, precomputed once on the host (f32; never bf16).
    row = jnp.arange(T)[:, None]
    col = jnp.arange(T)[None, :]
    mask_bias = jnp.where(row >= col, 0.0, -1e30).astype(jnp.float32)       # (T, T)

    kernel = functools.partial(_block_kernel, n_head=n_head, head_dim=head_dim)

    def full(shape):
        return pl.BlockSpec(shape, lambda b, _n=len(shape): (0,) * _n)

    return pl.pallas_call(
        kernel,
        out_shape=jax.ShapeDtypeStruct((B, T, C), x.dtype),
        grid_spec=pltpu.PrefetchScalarGridSpec(
            num_scalar_prefetch=0,
            grid=(B,),
            in_specs=[
                pl.BlockSpec((pl.Squeezed(), T, C), lambda b: (b, 0, 0)),   # x
                full((T, T)),          # causal additive bias (f32)
                full((C, 3 * C)),      # W_attn (bf16, q columns pre-scaled)
                full((1, 3 * C)),      # b_attn (f32, q columns pre-scaled)
                full((C, C)),          # W_proj attn (bf16)
                full((1, C)),          # b_proj attn (f32)
                full((C, C)),          # fused W_mlp = W_fc @ W_proj2 (bf16)
                full((1, C)),          # fused b_mlp (f32)
            ],
            out_specs=pl.BlockSpec((pl.Squeezed(), T, C), lambda b: (b, 0, 0)),
            scratch_shapes=[
                pltpu.VMEM((T, 3 * C), jnp.bfloat16),   # qkv (bf16 MXU operands)
                pltpu.VMEM((T, C), jnp.bfloat16),       # per-head outputs
            ],
        ),
        compiler_params=pltpu.CompilerParams(
            dimension_semantics=("parallel",),
        ),
    )(x, mask_bias, w_attn, b_attn, w_proj, b_proj, w_mlp, b_mlp)


def block_reference(x, params, *, n_head):
    """Pure-JAX f32 reference reproducing the PyTorch Block forward (unfused)."""
    B, T, C = x.shape
    hd = C // n_head
    qkv = x @ params["w_attn"] + params["b_attn"]
    q, k, v = jnp.split(qkv, 3, axis=-1)
    q = q.reshape(B, T, n_head, hd).transpose(0, 2, 1, 3)
    k = k.reshape(B, T, n_head, hd).transpose(0, 2, 1, 3)
    v = v.reshape(B, T, n_head, hd).transpose(0, 2, 1, 3)
    att = (q @ k.transpose(0, 1, 3, 2)) * (1.0 / math.sqrt(hd))
    mask = jnp.tril(jnp.ones((T, T), dtype=bool))
    att = jnp.where(mask[None, None], att, -jnp.inf)
    att = jax.nn.softmax(att, axis=-1)
    y = (att @ v).transpose(0, 2, 1, 3).reshape(B, T, C)
    y = y @ params["w_proj"] + params["b_proj"]
    x = x + y
    h = x @ params["w_fc"] + params["b_fc"]
    h = h @ params["w_proj2"] + params["b_proj2"]
    return x + h


def init_params(key, n_embd):
    C = n_embd
    ks = jax.random.split(key, 8)
    s = 0.02
    return {
        # nn.Linear weight is (out, in); we store transposed (in, out).
        "w_attn":  s * jax.random.normal(ks[0], (C, 3 * C), jnp.float32),
        "b_attn":  s * jax.random.normal(ks[1], (1, 3 * C), jnp.float32),
        "w_proj":  s * jax.random.normal(ks[2], (C, C), jnp.float32),
        "b_proj":  s * jax.random.normal(ks[3], (1, C), jnp.float32),
        "w_fc":    s * jax.random.normal(ks[4], (C, 4 * C), jnp.float32),
        "b_fc":    s * jax.random.normal(ks[5], (1, 4 * C), jnp.float32),
        "w_proj2": s * jax.random.normal(ks[6], (4 * C, C), jnp.float32),
        "b_proj2": s * jax.random.normal(ks[7], (1, C), jnp.float32),
    }


if __name__ == "__main__":
    # Shapes consistent with GPTConfig defaults (n_embd=128, n_head=4, block_size=128).
    B, T, C, n_head = 2, 128, 128, 4

    key = jax.random.PRNGKey(0)
    k_x, k_p = jax.random.split(key)
    x = jax.random.normal(k_x, (B, T, C), jnp.float32)
    params = init_params(k_p, C)

    out = block_forward(x, params, n_head=n_head)
    out = jax.block_until_ready(out)

    ref = block_reference(x, params, n_head=n_head)
    assert out.shape == (B, T, C)
    # bf16 matmul operands with f32 accumulation -> loosened tolerance vs f32 ref.
    assert jnp.allclose(out, ref, atol=2e-2, rtol=2e-2), \
        float(jnp.max(jnp.abs(out - ref)))

    print("KERNEL_OK")
</pallas_src>

<mosaic_0001>
module attributes {stable_mosaic.version = 11 : i64} {
  func.func @_block_kernel(%arg0: i32, %arg1: memref<1x128x128xf32, #tpu.memory_space<vmem>>, %arg2: memref<128x128xf32, #tpu.memory_space<vmem>>, %arg3: memref<128x384xbf16, #tpu.memory_space<vmem>>, %arg4: memref<1x384xf32, #tpu.memory_space<vmem>>, %arg5: memref<128x128xbf16, #tpu.memory_space<vmem>>, %arg6: memref<1x128xf32, #tpu.memory_space<vmem>>, %arg7: memref<128x128xbf16, #tpu.memory_space<vmem>>, %arg8: memref<1x128xf32, #tpu.memory_space<vmem>>, %arg9: memref<1x128x128xf32, #tpu.memory_space<vmem>>, %arg10: memref<128x384xbf16, #tpu.memory_space<vmem>>, %arg11: memref<128x128xbf16, #tpu.memory_space<vmem>>) attributes {dimension_semantics = [#tpu.dimension_semantics<parallel>], iteration_bounds = array<i64: 2>, scalar_prefetch = 0 : i64, scratch_operands = 2 : i64, tpu.core_type = #tpu.core_type<tc>, window_params = [{transform_indices = @transform_0, window_bounds = array<i64: 1, 128, 128>}, {pipeline_mode = #tpu.pipeline_mode<synchronous>, transform_indices = @transform_1, window_bounds = array<i64: 128, 128>}, {pipeline_mode = #tpu.pipeline_mode<synchronous>, transform_indices = @transform_2, window_bounds = array<i64: 128, 384>}, {pipeline_mode = #tpu.pipeline_mode<synchronous>, transform_indices = @transform_3, window_bounds = array<i64: 1, 384>}, {pipeline_mode = #tpu.pipeline_mode<synchronous>, transform_indices = @transform_4, window_bounds = array<i64: 128, 128>}, {pipeline_mode = #tpu.pipeline_mode<synchronous>, transform_indices = @transform_5, window_bounds = array<i64: 1, 128>}, {pipeline_mode = #tpu.pipeline_mode<synchronous>, transform_indices = @transform_6, window_bounds = array<i64: 128, 128>}, {pipeline_mode = #tpu.pipeline_mode<synchronous>, transform_indices = @transform_7, window_bounds = array<i64: 1, 128>}, {transform_indices = @transform_8, window_bounds = array<i64: 1, 128, 128>}]} {
    %c0 = arith.constant 0 : index
    %c0_0 = arith.constant 0 : index
    %c0_1 = arith.constant 0 : index
    %0 = vector.load %arg1[%c0, %c0_0, %c0_1] : memref<1x128x128xf32, #tpu.memory_space<vmem>>, vector<1x128x128xf32>
    %1 = vector.shape_cast %0 : vector<1x128x128xf32> to vector<128x128xf32>
    %2 = arith.truncf %1 : vector<128x128xf32> to vector<128x128xbf16>
    %c0_2 = arith.constant 0 : index
    %c0_3 = arith.constant 0 : index
    %3 = vector.load %arg3[%c0_2, %c0_3] : memref<128x384xbf16, #tpu.memory_space<vmem>>, vector<128x384xbf16>
    %cst = arith.constant dense<0.000000e+00> : vector<128x384xf32>
    %4 = tpu.matmul %2, %3, %cst {dimension_numbers = #tpu.dot_dimension_numbers<[1], [0], [0], [1], [0, 0, 1, 1], [], []>} : vector<128x128xbf16>, vector<128x384xbf16>, vector<128x384xf32> -> vector<128x384xf32>
    %c0_4 = arith.constant 0 : index
    %c0_5 = arith.constant 0 : index
    %5 = vector.load %arg4[%c0_4, %c0_5] : memref<1x384xf32, #tpu.memory_space<vmem>>, vector<1x384xf32>
    %6 = vector.broadcast %5 : vector<1x384xf32> to vector<128x384xf32>
    %7 = arith.addf %4, %6 : vector<128x384xf32>
    %8 = arith.truncf %7 : vector<128x384xf32> to vector<128x384xbf16>
    %c0_6 = arith.constant 0 : index
    %c0_7 = arith.constant 0 : index
    %9 = vector.load %arg10[%c0_6, %c0_7] : memref<128x384xbf16, #tpu.memory_space<vmem>>, vector<128x384xbf16>
    tpu.vector_store %arg10[%c0_6, %c0_7], %8 {strides = array<i32>} : memref<128x384xbf16, #tpu.memory_space<vmem>>, vector<128x384xbf16>,
    %c0_8 = arith.constant 0 : index
    %c0_9 = arith.constant 0 : index
    %10 = vector.load %arg10[%c0_8, %c0_9] : memref<128x384xbf16, #tpu.memory_space<vmem>>, vector<128x32xbf16>
    %c0_10 = arith.constant 0 : index
    %c128 = arith.constant 128 : index
    %11 = vector.load %arg10[%c0_10, %c128] : memref<128x384xbf16, #tpu.memory_space<vmem>>, vector<128x32xbf16>
    %c0_11 = arith.constant 0 : index
    %c256 = arith.constant 256 : index
    %12 = vector.load %arg10[%c0_11, %c256] : memref<128x384xbf16, #tpu.memory_space<vmem>>, vector<128x32xbf16>
    %cst_12 = arith.constant dense<0.000000e+00> : vector<128x128xf32>
    %13 = tpu.matmul %10, %11, %cst_12 {dimension_numbers = #tpu.dot_dimension_numbers<[1], [1], [0], [0], [0, 0, 1, 0], [], []>} : vector<128x32xbf16>, vector<128x32xbf16>, vector<128x128xf32> -> vector<128x128xf32>
    %c0_13 = arith.constant 0 : index
    %c0_14 = arith.constant 0 : index
    %14 = vector.load %arg2[%c0_13, %c0_14] : memref<128x128xf32, #tpu.memory_space<vmem>>, vector<128x128xf32>
    %15 = arith.addf %13, %14 : vector<128x128xf32>
    %cst_15 = arith.constant dense<0xFF800000> : vector<128xf32>
    %16 = vector.multi_reduction <maximumf>, %15, %cst_15 [1] : vector<128x128xf32> to vector<128xf32>
    %17 = vector.shape_cast %16 : vector<128xf32> to vector<128x1xf32>
    %18 = vector.broadcast %17 : vector<128x1xf32> to vector<128x128xf32>
    %19 = arith.subf %15, %18 : vector<128x128xf32>
    %20 = math.exp %19 : vector<128x128xf32>
    %cst_16 = arith.constant dense<0.000000e+00> : vector<128xf32>
    %21 = vector.multi_reduction <add>, %20, %cst_16 [1] : vector<128x128xf32> to vector<128xf32>
    %22 = vector.shape_cast %21 : vector<128xf32> to vector<128x1xf32>
    %23 = arith.truncf %20 : vector<128x128xf32> to vector<128x128xbf16>
    %cst_17 = arith.constant dense<0.000000e+00> : vector<128x32xf32>
    %24 = tpu.matmul %23, %12, %cst_17 {dimension_numbers = #tpu.dot_dimension_numbers<[1], [0], [0], [1], [0, 0, 1, 1], [], []>} : vector<128x128xbf16>, vector<128x32xbf16>, vector<128x32xf32> -> vector<128x32xf32>
    %25 = tpu.reciprocal %22 {approx = true} : vector<128x1xf32> -> vector<128x1xf32>
    %26 = vector.broadcast %25 : vector<128x1xf32> to vector<128x32xf32>
    %27 = arith.mulf %24, %26 : vector<128x32xf32>
    %28 = arith.truncf %27 : vector<128x32xf32> to vector<128x32xbf16>
    %c0_18 = arith.constant 0 : index
    %c0_19 = arith.constant 0 : index
    %29 = vector.load %arg11[%c0_18, %c0_19] : memref<128x128xbf16, #tpu.memory_space<vmem>>, vector<128x32xbf16>
    tpu.vector_store %arg11[%c0_18, %c0_19], %28 {strides = array<i32>} : memref<128x128xbf16, #tpu.memory_space<vmem>>, vector<128x32xbf16>,
    %c0_20 = arith.constant 0 : index
    %c32 = arith.constant 32 : index
    %30 = vector.load %arg10[%c0_20, %c32] : memref<128x384xbf16, #tpu.memory_space<vmem>>, vector<128x32xbf16>
    %c0_21 = arith.constant 0 : index
    %c160 = arith.constant 160 : index
    %31 = vector.load %arg10[%c0_21, %c160] : memref<128x384xbf16, #tpu.memory_space<vmem>>, vector<128x32xbf16>
    %c0_22 = arith.constant 0 : index
    %c288 = arith.constant 288 : index
    %32 = vector.load %arg10[%c0_22, %c288] : memref<128x384xbf16, #tpu.memory_space<vmem>>, vector<128x32xbf16>
    %cst_23 = arith.constant dense<0.000000e+00> : vector<128x128xf32>
    %33 = tpu.matmul %30, %31, %cst_23 {dimension_numbers = #tpu.dot_dimension_numbers<[1], [1], [0], [0], [0, 0, 1, 0], [], []>} : vector<128x32xbf16>, vector<128x32xbf16>, vector<128x128xf32> -> vector<128x128xf32>
    %c0_24 = arith.constant 0 : index
    %c0_25 = arith.constant 0 : index
    %34 = vector.load %arg2[%c0_24, %c0_25] : memref<128x128xf32, #tpu.memory_space<vmem>>, vector<128x128xf32>
    %35 = arith.addf %33, %34 : vector<128x128xf32>
    %cst_26 = arith.constant dense<0xFF800000> : vector<128xf32>
    %36 = vector.multi_reduction <maximumf>, %35, %cst_26 [1] : vector<128x128xf32> to vector<128xf32>
    %37 = vector.shape_cast %36 : vector<128xf32> to vector<128x1xf32>
    %38 = vector.broadcast %37 : vector<128x1xf32> to vector<128x128xf32>
    %39 = arith.subf %35, %38 : vector<128x128xf32>
    %40 = math.exp %39 : vector<128x128xf32>
    %cst_27 = arith.constant dense<0.000000e+00> : vector<128xf32>
    %41 = vector.multi_reduction <add>, %40, %cst_27 [1] : vector<128x128xf32> to vector<128xf32>
    %42 = vector.shape_cast %41 : vector<128xf32> to vector<128x1xf32>
    %43 = arith.truncf %40 : vector<128x128xf32> to vector<128x128xbf16>
    %cst_28 = arith.constant dense<0.000000e+00> : vector<128x32xf32>
    %44 = tpu.matmul %43, %32, %cst_28 {dimension_numbers = #tpu.dot_dimension_numbers<[1], [0], [0], [1], [0, 0, 1, 1], [], []>} : vector<128x128xbf16>, vector<128x32xbf16>, vector<128x32xf32> -> vector<128x32xf32>
    %45 = tpu.reciprocal %42 {approx = true} : vector<128x1xf32> -> vector<128x1xf32>
    %46 = vector.broadcast %45 : vector<128x1xf32> to vector<128x32xf32>
    %47 = arith.mulf %44, %46 : vector<128x32xf32>
    %48 = arith.truncf %47 : vector<128x32xf32> to vector<128x32xbf16>
    %c0_29 = arith.constant 0 : index
    %c32_30 = arith.constant 32 : index
    %49 = vector.load %arg11[%c0_29, %c32_30] : memref<128x128xbf16, #tpu.memory_space<vmem>>, vector<128x32xbf16>
    tpu.vector_store %arg11[%c0_29, %c32_30], %48 {strides = array<i32>} : memref<128x128xbf16, #tpu.memory_space<vmem>>, vector<128x32xbf16>,
    %c0_31 = arith.constant 0 : index
    %c64 = arith.constant 64 : index
    %50 = vector.load %arg10[%c0_31, %c64] : memref<128x384xbf16, #tpu.memory_space<vmem>>, vector<128x32xbf16>
    %c0_32 = arith.constant 0 : index
    %c192 = arith.constant 192 : index
    %51 = vector.load %arg10[%c0_32, %c192] : memref<128x384xbf16, #tpu.memory_space<vmem>>, vector<128x32xbf16>
    %c0_33 = arith.constant 0 : index
    %c320 = arith.constant 320 : index
    %52 = vector.load %arg10[%c0_33, %c320] : memref<128x384xbf16, #tpu.memory_space<vmem>>, vector<128x32xbf16>
    %cst_34 = arith.constant dense<0.000000e+00> : vector<128x128xf32>
    %53 = tpu.matmul %50, %51, %cst_34 {dimension_numbers = #tpu.dot_dimension_numbers<[1], [1], [0], [0], [0, 0, 1, 0], [], []>} : vector<128x32xbf16>, vector<128x32xbf16>, vector<128x128xf32> -> vector<128x128xf32>
    %c0_35 = arith.constant 0 : index
    %c0_36 = arith.constant 0 : index
    %54 = vector.load %arg2[%c0_35, %c0_36] : memref<128x128xf32, #tpu.memory_space<vmem>>, vector<128x128xf32>
    %55 = arith.addf %53, %54 : vector<128x128xf32>
    %cst_37 = arith.constant dense<0xFF800000> : vector<128xf32>
    %56 = vector.multi_reduction <maximumf>, %55, %cst_37 [1] : vector<128x128xf32> to vector<128xf32>
    %57 = vector.shape_cast %56 : vector<128xf32> to vector<128x1xf32>
    %58 = vector.broadcast %57 : vector<128x1xf32> to vector<128x128xf32>
    %59 = arith.subf %55, %58 : vector<128x128xf32>
    %60 = math.exp %59 : vector<128x128xf32>
    %cst_38 = arith.constant dense<0.000000e+00> : vector<128xf32>
    %61 = vector.multi_reduction <add>, %60, %cst_38 [1] : vector<128x128xf32> to vector<128xf32>
    %62 = vector.shape_cast %61 : vector<128xf32> to vector<128x1xf32>
    %63 = arith.truncf %60 : vector<128x128xf32> to vector<128x128xbf16>
    %cst_39 = arith.constant dense<0.000000e+00> : vector<128x32xf32>
    %64 = tpu.matmul %63, %52, %cst_39 {dimension_numbers = #tpu.dot_dimension_numbers<[1], [0], [0], [1], [0, 0, 1, 1], [], []>} : vector<128x128xbf16>, vector<128x32xbf16>, vector<128x32xf32> -> vector<128x32xf32>
    %65 = tpu.reciprocal %62 {approx = true} : vector<128x1xf32> -> vector<128x1xf32>
    %66 = vector.broadcast %65 : vector<128x1xf32> to vector<128x32xf32>
    %67 = arith.mulf %64, %66 : vector<128x32xf32>
    %68 = arith.truncf %67 : vector<128x32xf32> to vector<128x32xbf16>
    %c0_40 = arith.constant 0 : index
    %c64_41 = arith.constant 64 : index
    %69 = vector.load %arg11[%c0_40, %c64_41] : memref<128x128xbf16, #tpu.memory_space<vmem>>, vector<128x32xbf16>
    tpu.vector_store %arg11[%c0_40, %c64_41], %68 {strides = array<i32>} : memref<128x128xbf16, #tpu.memory_space<vmem>>, vector<128x32xbf16>,
    %c0_42 = arith.constant 0 : index
    %c96 = arith.constant 96 : index
    %70 = vector.load %arg10[%c0_42, %c96] : memref<128x384xbf16, #tpu.memory_space<vmem>>, vector<128x32xbf16>
    %c0_43 = arith.constant 0 : index
    %c224 = arith.constant 224 : index
    %71 = vector.load %arg10[%c0_43, %c224] : memref<128x384xbf16, #tpu.memory_space<vmem>>, vector<128x32xbf16>
    %c0_44 = arith.constant 0 : index
    %c352 = arith.constant 352 : index
    %72 = vector.load %arg10[%c0_44, %c352] : memref<128x384xbf16, #tpu.memory_space<vmem>>, vector<128x32xbf16>
    %cst_45 = arith.constant dense<0.000000e+00> : vector<128x128xf32>
    %73 = tpu.matmul %70, %71, %cst_45 {dimension_numbers = #tpu.dot_dimension_numbers<[1], [1], [0], [0], [0, 0, 1, 0], [], []>} : vector<128x32xbf16>, vector<128x32xbf16>, vector<128x128xf32> -> vector<128x128xf32>
    %c0_46 = arith.constant 0 : index
    %c0_47 = arith.constant 0 : index
    %74 = vector.load %arg2[%c0_46, %c0_47] : memref<128x128xf32, #tpu.memory_space<vmem>>, vector<128x128xf32>
    %75 = arith.addf %73, %74 : vector<128x128xf32>
    %cst_48 = arith.constant dense<0xFF800000> : vector<128xf32>
    %76 = vector.multi_reduction <maximumf>, %75, %cst_48 [1] : vector<128x128xf32> to vector<128xf32>
    %77 = vector.shape_cast %76 : vector<128xf32> to vector<128x1xf32>
    %78 = vector.broadcast %77 : vector<128x1xf32> to vector<128x128xf32>
    %79 = arith.subf %75, %78 : vector<128x128xf32>
    %80 = math.exp %79 : vector<128x128xf32>
    %cst_49 = arith.constant dense<0.000000e+00> : vector<128xf32>
    %81 = vector.multi_reduction <add>, %80, %cst_49 [1] : vector<128x128xf32> to vector<128xf32>
    %82 = vector.shape_cast %81 : vector<128xf32> to vector<128x1xf32>
    %83 = arith.truncf %80 : vector<128x128xf32> to vector<128x128xbf16>
    %cst_50 = arith.constant dense<0.000000e+00> : vector<128x32xf32>
    %84 = tpu.matmul %83, %72, %cst_50 {dimension_numbers = #tpu.dot_dimension_numbers<[1], [0], [0], [1], [0, 0, 1, 1], [], []>} : vector<128x128xbf16>, vector<128x32xbf16>, vector<128x32xf32> -> vector<128x32xf32>
    %85 = tpu.reciprocal %82 {approx = true} : vector<128x1xf32> -> vector<128x1xf32>
    %86 = vector.broadcast %85 : vector<128x1xf32> to vector<128x32xf32>
    %87 = arith.mulf %84, %86 : vector<128x32xf32>
    %88 = arith.truncf %87 : vector<128x32xf32> to vector<128x32xbf16>
    %c0_51 = arith.constant 0 : index
    %c96_52 = arith.constant 96 : index
    %89 = vector.load %arg11[%c0_51, %c96_52] : memref<128x128xbf16, #tpu.memory_space<vmem>>, vector<128x32xbf16>
    tpu.vector_store %arg11[%c0_51, %c96_52], %88 {strides = array<i32>} : memref<128x128xbf16, #tpu.memory_space<vmem>>, vector<128x32xbf16>,
    %c0_53 = arith.constant 0 : index
    %c0_54 = arith.constant 0 : index
    %90 = vector.load %arg11[%c0_53, %c0_54] : memref<128x128xbf16, #tpu.memory_space<vmem>>, vector<128x128xbf16>
    %c0_55 = arith.constant 0 : index
    %c0_56 = arith.constant 0 : index
    %91 = vector.load %arg5[%c0_55, %c0_56] : memref<128x128xbf16, #tpu.memory_space<vmem>>, vector<128x128xbf16>
    %cst_57 = arith.constant dense<0.000000e+00> : vector<128x128xf32>
    %92 = tpu.matmul %90, %91, %cst_57 {dimension_numbers = #tpu.dot_dimension_numbers<[1], [0], [0], [1], [0, 0, 1, 1], [], []>} : vector<128x128xbf16>, vector<128x128xbf16>, vector<128x128xf32> -> vector<128x128xf32>
    %c0_58 = arith.constant 0 : index
    %c0_59 = arith.constant 0 : index
    %93 = vector.load %arg6[%c0_58, %c0_59] : memref<1x128xf32, #tpu.memory_space<vmem>>, vector<1x128xf32>
    %94 = vector.broadcast %93 : vector<1x128xf32> to vector<128x128xf32>
    %95 = arith.addf %92, %94 : vector<128x128xf32>
    %c0_60 = arith.constant 0 : index
    %c0_61 = arith.constant 0 : index
    %c0_62 = arith.constant 0 : index
    %96 = vector.load %arg1[%c0_60, %c0_61, %c0_62] : memref<1x128x128xf32, #tpu.memory_space<vmem>>, vector<1x128x128xf32>
    %97 = vector.shape_cast %96 : vector<1x128x128xf32> to vector<128x128xf32>
    %98 = arith.addf %97, %95 : vector<128x128xf32>
    %99 = arith.truncf %98 : vector<128x128xf32> to vector<128x128xbf16>
    %c0_63 = arith.constant 0 : index
    %c0_64 = arith.constant 0 : index
    %100 = vector.load %arg7[%c0_63, %c0_64] : memref<128x128xbf16, #tpu.memory_space<vmem>>, vector<128x128xbf16>
    %cst_65 = arith.constant dense<0.000000e+00> : vector<128x128xf32>
    %101 = tpu.matmul %99, %100, %cst_65 {dimension_numbers = #tpu.dot_dimension_numbers<[1], [0], [0], [1], [0, 0, 1, 1], [], []>} : vector<128x128xbf16>, vector<128x128xbf16>, vector<128x128xf32> -> vector<128x128xf32>
    %c0_66 = arith.constant 0 : index
    %c0_67 = arith.constant 0 : index
    %102 = vector.load %arg8[%c0_66, %c0_67] : memref<1x128xf32, #tpu.memory_space<vmem>>, vector<1x128xf32>
    %103 = vector.broadcast %102 : vector<1x128xf32> to vector<128x128xf32>
    %104 = arith.addf %101, %103 : vector<128x128xf32>
    %105 = arith.addf %98, %104 : vector<128x128xf32>
    %c0_68 = arith.constant 0 : index
    %c0_69 = arith.constant 0 : index
    %c0_70 = arith.constant 0 : index
    %106 = vector.load %arg9[%c0_68, %c0_69, %c0_70] : memref<1x128x128xf32, #tpu.memory_space<vmem>>, vector<1x128x128xf32>
    %107 = vector.shape_cast %106 : vector<1x128x128xf32> to vector<128x128xf32>
    %108 = vector.shape_cast %105 : vector<128x128xf32> to vector<1x128x128xf32>
    tpu.vector_store %arg9[%c0_68, %c0_69, %c0_70], %108 {strides = array<i32>} : memref<1x128x128xf32, #tpu.memory_space<vmem>>, vector<1x128x128xf32>,
    return
  }
  func.func @transform_0(%arg0: i32) -> (i32, i32, i32) {
    %c0_i32 = arith.constant 0 : i32
    %c0_i32_0 = arith.constant 0 : i32
    %c0_i32_1 = arith.constant 0 : i32
    return %arg0, %c0_i32, %c0_i32_0 : i32, i32, i32
  }
  func.func @transform_1(%arg0: i32) -> (i32, i32) {
    %c0_i32 = arith.constant 0 : i32
    %c0_i32_0 = arith.constant 0 : i32
    %c0_i32_1 = arith.constant 0 : i32
    return %c0_i32, %c0_i32_0 : i32, i32
  }
  func.func @transform_2(%arg0: i32) -> (i32, i32) {
    %c0_i32 = arith.constant 0 : i32
    %c0_i32_0 = arith.constant 0 : i32
    %c0_i32_1 = arith.constant 0 : i32
    return %c0_i32, %c0_i32_0 : i32, i32
  }
  func.func @transform_3(%arg0: i32) -> (i32, i32) {
    %c0_i32 = arith.constant 0 : i32
    %c0_i32_0 = arith.constant 0 : i32
    %c0_i32_1 = arith.constant 0 : i32
    return %c0_i32, %c0_i32_0 : i32, i32
  }
  func.func @transform_4(%arg0: i32) -> (i32, i32) {
    %c0_i32 = arith.constant 0 : i32
    %c0_i32_0 = arith.constant 0 : i32
    %c0_i32_1 = arith.constant 0 : i32
    return %c0_i32, %c0_i32_0 : i32, i32
  }
  func.func @transform_5(%arg0: i32) -> (i32, i32) {
    %c0_i32 = arith.constant 0 : i32
    %c0_i32_0 = arith.constant 0 : i32
    %c0_i32_1 = arith.constant 0 : i32
    return %c0_i32, %c0_i32_0 : i32, i32
  }
  func.func @transform_6(%arg0: i32) -> (i32, i32) {
    %c0_i32 = arith.constant 0 : i32
    %c0_i32_0 = arith.constant 0 : i32
    %c0_i32_1 = arith.constant 0 : i32
    return %c0_i32, %c0_i32_0 : i32, i32
  }
  func.func @transform_7(%arg0: i32) -> (i32, i32) {
    %c0_i32 = arith.constant 0 : i32
    %c0_i32_0 = arith.constant 0 : i32
    %c0_i32_1 = arith.constant 0 : i32
    return %c0_i32, %c0_i32_0 : i32, i32
  }
  func.func @transform_8(%arg0: i32) -> (i32, i32, i32) {
    %c0_i32 = arith.constant 0 : i32
    %c0_i32_0 = arith.constant 0 : i32
    %c0_i32_1 = arith.constant 0 : i32
    return %arg0, %c0_i32, %c0_i32_0 : i32, i32, i32
  }
}

</mosaic_0001>

<llo_original>
// kernel: tpu_custom_call.1
$region0: #{tpu_custom_call.1}
  #allocation0 [shape = 'u32[]', space=smem, size = 0x4, offset = 0x4, fixed_abs, tag = 'smem constant byte address 0x4 - core index']
  #allocation1 [shape = 'u32[144,128]{1,0:T(1,128)}', space=vmem, size = 0x12000, scoped, tag = 'internal scratch']
  #allocation2 [shape = 'bf16[128,384]{1,0:T(16,128)(2,1)}', space=vmem, size = 0x18000, scoped, tag = 'scratch operand']
  #allocation3 [shape = 'bf16[128,128]{1,0:T(16,128)(2,1)}', space=vmem, size = 0x8000, scoped, tag = 'scratch operand']
  %s0 = inlined_call_operand.hbm [shape: f32[2,128,128], index: 0, kind: input, shape index: {}]
  %s1 = inlined_call_operand.hbm [shape: f32[128,128], index: 1, kind: input, shape index: {}]
  %s2 = inlined_call_operand.hbm [shape: bf16[128,384], index: 2, kind: input, shape index: {}]
  %s3 = inlined_call_operand.vmem [shape: f32[1,384], index: 3, kind: input, shape index: {}]
  %s4 = inlined_call_operand.hbm [shape: bf16[128,128], index: 4, kind: input, shape index: {}]
  %s5 = inlined_call_operand.vmem [shape: f32[1,128], index: 5, kind: input, shape index: {}]
  %s6 = inlined_call_operand.hbm [shape: bf16[128,128], index: 6, kind: input, shape index: {}]
  %s7 = inlined_call_operand.vmem [shape: f32[1,128], index: 7, kind: input, shape index: {}]
  %s8 = inlined_call_operand.hbm [shape: f32[2,128,128], index: 8, kind: output, shape index: {}]
  %s9 = sld [smem:[#allocation0]]
  $region85: #{tpu_custom_call.1} parent=0
    _
  %s11 = ssub.s32 1, %s9
  %s12 = scalar_select 0, %s11, %s9
  $region1: #{tpu_custom_call.1} parent=0
    #allocation4 [shape = 'u8[131072]{0}', space=vmem, size = 0x20000, scoped, tag = 'input window, operand 0']
    #allocation5 [shape = 's32[2]{0}', space=sflag, size = 0x8, scoped, tag = 'scoped memory for tpu_custom_call.1']
    #allocation6 [shape = 's32[2]{0}', space=sflag, size = 0x8, scoped, tag = 'scoped memory for tpu_custom_call.1']
    #allocation7 [shape = 'u8[65536]{0}', space=vmem, size = 0x10000, scoped, tag = 'input window, operand 1, single buffered']
    #allocation8 [shape = 's32[1]{0}', space=sflag, size = 0x4, scoped, tag = 'scoped memory for tpu_custom_call.1']
    #allocation9 [shape = 'u8[98304]{0}', space=vmem, size = 0x18000, scoped, tag = 'input window, operand 2, single buffered']
    #allocation10 [shape = 'u8[32768]{0}', space=vmem, size = 0x8000, scoped, tag = 'input window, operand 4, single buffered']
    #allocation11 [shape = 's32[1]{0}', space=sflag, size = 0x4, scoped, tag = 'scoped memory for tpu_custom_call.1']
    #allocation12 [shape = 'u8[32768]{0}', space=vmem, size = 0x8000, scoped, tag = 'input window, operand 6, single buffered']
    #allocation13 [shape = 'u8[131072]{0}', space=vmem, size = 0x20000, scoped, tag = 'output window, operand 0']
    %13 = vsyncpa [#allocation5], 0
    %s14 = scalar_lea.sflag [#allocation5], 1
    %15 = vsyncpa %s14, 0
    %16 = vsyncpa [#allocation8], 0
    %17 = vsyncpa [#allocation11], 0
    %18 = vsyncpa [#allocation6], 0
    %s19 = scalar_lea.sflag [#allocation6], 1
    %20 = vsyncpa %s19, 0
    loop: start=0, step=1, limit=4
    $region2: #{tpu_custom_call.1} parent=1 // loop_pre_header
      _
    $region3: #{tpu_custom_call.1} parent=1 // loop_header
      %s22 = sphi 0, %s26
      %p23 = scmp.ge.s32.totalorder %s22, 4
      %s32 = sphi 0, %s34
      %s35 = sphi 0, %s32
      %s36 = sphi 0, %s35
      %s52 = sphi 0, %s36
      %s56 = sphi 0, %s56
      %s58 = sphi 0, %s56
      %s59 = sphi 0, %s58
      %s73 = sphi 0, %s59
      %s77 = sphi 0, %s77
      %s79 = sphi 0, %s77
      %s80 = sphi 0, %s79
      %s94 = sphi 0, %s80
      %s98 = sphi 0, %s98
      %s100 = sphi 0, %s98
      %s101 = sphi 0, %s100
      %s115 = sphi 0, %s101
      %s119 = sphi 0, %s119
      %s121 = sphi 0, %s119
      %s122 = sphi 0, %s121
      %s136 = sphi 0, %s122
      %s140 = sphi 0, %s140
      %s142 = sphi 0, %s140
      %s143 = sphi 0, %s142
      %s157 = sphi 0, %s143
      %s161 = sphi 0, %s161
      %s163 = sphi 0, %s161
      %s164 = sphi 0, %s163
      %s178 = sphi 0, %s164
      %s182 = sphi 0, %s182
      %s184 = sphi 0, %s182
      %s185 = sphi 0, %s184
      %s199 = sphi 0, %s185
      %s205 = sphi 0, %s207
      %s208 = sphi 0, %s205
      %s209 = sphi 0, %s208
      %s225 = sphi 0, %s209
    $region4: #{tpu_custom_call.1} parent=1 // loop_header_branch
      %25 = sbr.rel (%p23) target = $region8
    $region5: #{tpu_custom_call.1} parent=1 // loop_body
      %s27 = ssub.s32 %s22, 1
      %s28 = ssub.s32 %s22, 2
      %s29 = sadd.s32 %s22, 1
      %s30 = ssub.s32 %s22, %s29
      %p31 = scmp.eq.s32.totalorder %s30, 0
      %s33 = sadd.s32 %s32, 1
      %s34 = scalar_select %p31, %s32, %s33
      %p37 = pneg %p31
      %p38 = scmp.eq.s32.totalorder %s22, 1
      %p39 = por %p37, %p38
      %p40 = scmp.ne.s32.totalorder %s32, %s35
      %p41 = scmp.eq.s32.totalorder %s22, 0
      %p42 = por %p40, %p41
      %p43 = scmp.ne.s32.totalorder %s32, %s35
      %p44 = scmp.eq.s32.totalorder %s27, 1
      %p45 = por %p43, %p44
      %p46 = scmp.ne.s32.totalorder %s35, %s36
      %p47 = scmp.eq.s32.totalorder %s27, 0
      %p48 = por %p46, %p47
      %p49 = scmp.ne.s32.totalorder %s35, %s36
      %p50 = scmp.eq.s32.totalorder %s28, 1
      %p51 = por %p49, %p50
      %p53 = scmp.ne.s32.totalorder %s36, %s52
      %p54 = scmp.eq.s32.totalorder %s28, 0
      %p55 = por %p53, %p54
      %s57 = sadd.s32 %s56, 1
      %p60 = scmp.eq.s32.totalorder %s22, 1
      %p61 = scmp.ne.s32.totalorder %s56, %s58
      %p62 = scmp.eq.s32.totalorder %s22, 0
      %p63 = por %p61, %p62
      %p64 = scmp.ne.s32.totalorder %s56, %s58
      %p65 = scmp.eq.s32.totalorder %s27, 1
      %p66 = por %p64, %p65
      %p67 = scmp.ne.s32.totalorder %s58, %s59
      %p68 = scmp.eq.s32.totalorder %s27, 0
      %p69 = por %p67, %p68
      %p70 = scmp.ne.s32.totalorder %s58, %s59
      %p71 = scmp.eq.s32.totalorder %s28, 1
      %p72 = por %p70, %p71
      %p74 = scmp.ne.s32.totalorder %s59, %s73
      %p75 = scmp.eq.s32.totalorder %s28, 0
      %p76 = por %p74, %p75
      %s78 = sadd.s32 %s77, 1
      %p81 = scmp.eq.s32.totalorder %s22, 1
      %p82 = scmp.ne.s32.totalorder %s77, %s79
      %p83 = scmp.eq.s32.totalorder %s22, 0
      %p84 = por %p82, %p83
      %p85 = scmp.ne.s32.totalorder %s77, %s79
      %p86 = scmp.eq.s32.totalorder %s27, 1
      %p87 = por %p85, %p86
      %p88 = scmp.ne.s32.totalorder %s79, %s80
      %p89 = scmp.eq.s32.totalorder %s27, 0
      %p90 = por %p88, %p89
      %p91 = scmp.ne.s32.totalorder %s79, %s80
      %p92 = scmp.eq.s32.totalorder %s28, 1
      %p93 = por %p91, %p92
      %p95 = scmp.ne.s32.totalorder %s80, %s94
      %p96 = scmp.eq.s32.totalorder %s28, 0
      %p97 = por %p95, %p96
      %s99 = sadd.s32 %s98, 1
      %p102 = scmp.eq.s32.totalorder %s22, 1
      %p103 = scmp.ne.s32.totalorder %s98, %s100
      %p104 = scmp.eq.s32.totalorder %s22, 0
      %p105 = por %p103, %p104
      %p106 = scmp.ne.s32.totalorder %s98, %s100
      %p107 = scmp.eq.s32.totalorder %s27, 1
      %p108 = por %p106, %p107
      %p109 = scmp.ne.s32.totalorder %s100, %s101
      %p110 = scmp.eq.s32.totalorder %s27, 0
      %p111 = por %p109, %p110
      %p112 = scmp.ne.s32.totalorder %s100, %s101
      %p113 = scmp.eq.s32.totalorder %s28, 1
      %p114 = por %p112, %p113
      %p116 = scmp.ne.s32.totalorder %s101, %s115
      %p117 = scmp.eq.s32.totalorder %s28, 0
      %p118 = por %p116, %p117
      %s120 = sadd.s32 %s119, 1
      %p123 = scmp.eq.s32.totalorder %s22, 1
      %p124 = scmp.ne.s32.totalorder %s119, %s121
      %p125 = scmp.eq.s32.totalorder %s22, 0
      %p126 = por %p124, %p125
      %p127 = scmp.ne.s32.totalorder %s119, %s121
      %p128 = scmp.eq.s32.totalorder %s27, 1
      %p129 = por %p127, %p128
      %p130 = scmp.ne.s32.totalorder %s121, %s122
      %p131 = scmp.eq.s32.totalorder %s27, 0
      %p132 = por %p130, %p131
      %p133 = scmp.ne.s32.totalorder %s121, %s122
      %p134 = scmp.eq.s32.totalorder %s28, 1
      %p135 = por %p133, %p134
      %p137 = scmp.ne.s32.totalorder %s122, %s136
      %p138 = scmp.eq.s32.totalorder %s28, 0
      %p139 = por %p137, %p138
      %s141 = sadd.s32 %s140, 1
      %p144 = scmp.eq.s32.totalorder %s22, 1
      %p145 = scmp.ne.s32.totalorder %s140, %s142
      %p146 = scmp.eq.s32.totalorder %s22, 0
      %p147 = por %p145, %p146
      %p148 = scmp.ne.s32.totalorder %s140, %s142
      %p149 = scmp.eq.s32.totalorder %s27, 1
      %p150 = por %p148, %p149
      %p151 = scmp.ne.s32.totalorder %s142, %s143
      %p152 = scmp.eq.s32.totalorder %s27, 0
      %p153 = por %p151, %p152
      %p154 = scmp.ne.s32.totalorder %s142, %s143
      %p155 = scmp.eq.s32.totalorder %s28, 1
      %p156 = por %p154, %p155
      %p158 = scmp.ne.s32.totalorder %s143, %s157
      %p159 = scmp.eq.s32.totalorder %s28, 0
      %p160 = por %p158, %p159
      %s162 = sadd.s32 %s161, 1
      %p165 = scmp.eq.s32.totalorder %s22, 1
      %p166 = scmp.ne.s32.totalorder %s161, %s163
      %p167 = scmp.eq.s32.totalorder %s22, 0
      %p168 = por %p166, %p167
      %p169 = scmp.ne.s32.totalorder %s161, %s163
      %p170 = scmp.eq.s32.totalorder %s27, 1
      %p171 = por %p169, %p170
      %p172 = scmp.ne.s32.totalorder %s163, %s164
      %p173 = scmp.eq.s32.totalorder %s27, 0
      %p174 = por %p172, %p173
      %p175 = scmp.ne.s32.totalorder %s163, %s164
      %p176 = scmp.eq.s32.totalorder %s28, 1
      %p177 = por %p175, %p176
      %p179 = scmp.ne.s32.totalorder %s164, %s178
      %p180 = scmp.eq.s32.totalorder %s28, 0
      %p181 = por %p179, %p180
      %s183 = sadd.s32 %s182, 1
      %p186 = scmp.eq.s32.totalorder %s22, 1
      %p187 = scmp.ne.s32.totalorder %s182, %s184
      %p188 = scmp.eq.s32.totalorder %s22, 0
      %p189 = por %p187, %p188
      %p190 = scmp.ne.s32.totalorder %s182, %s184
      %p191 = scmp.eq.s32.totalorder %s27, 1
      %p192 = por %p190, %p191
      %p193 = scmp.ne.s32.totalorder %s184, %s185
      %p194 = scmp.eq.s32.totalorder %s27, 0
      %p195 = por %p193, %p194
      %p196 = scmp.ne.s32.totalorder %s184, %s185
      %p197 = scmp.eq.s32.totalorder %s28, 1
      %p198 = por %p196, %p197
      %p200 = scmp.ne.s32.totalorder %s185, %s199
      %p201 = scmp.eq.s32.totalorder %s28, 0
      %p202 = por %p200, %p201
      %s203 = ssub.s32 %s22, %s29
      %p204 = scmp.eq.s32.totalorder %s203, 0
      %s206 = sadd.s32 %s205, 1
      %s207 = scalar_select %p204, %s205, %s206
      %p210 = pneg %p204
      %p211 = scmp.eq.s32.totalorder %s22, 1
      %p212 = por %p210, %p211
      %p213 = scmp.ne.s32.totalorder %s205, %s208
      %p214 = scmp.eq.s32.totalorder %s22, 0
      %p215 = por %p213, %p214
      %p216 = scmp.ne.s32.totalorder %s205, %s208
      %p217 = scmp.eq.s32.totalorder %s27, 1
      %p218 = por %p216, %p217
      %p219 = scmp.ne.s32.totalorder %s208, %s209
      %p220 = scmp.eq.s32.totalorder %s27, 0
      %p221 = por %p219, %p220
      %p222 = scmp.ne.s32.totalorder %s208, %s209
      %p223 = scmp.eq.s32.totalorder %s28, 1
      %p224 = por %p222, %p223
      %p226 = scmp.ne.s32.totalorder %s209, %s225
      %p227 = scmp.eq.s32.totalorder %s28, 0
      %p228 = por %p226, %p227
      %p229 = scmp.le.s32.totalorder 1, %s22
      %p230 = scmp.lt.s32.totalorder %s22, 3
      %p231 = pnand %p229, %p230
      %p232 = pneg %p231
      // Predicated region
      $region9: #{tpu_custom_call.1} parent=5 // pred_check
        _
      $region10: #{tpu_custom_call.1} parent=5 // pred_check_branch
        %234 = sbr.rel (%p231) target = $region12
      $region11: #{tpu_custom_call.1} parent=5 // pred_region
        %s235 = ssub.s32 %s22, 1
        // Predicated region
        $region13: #{tpu_custom_call.1} parent=11 // pred_check
          %p236 = pneg %p69
        $region14: #{tpu_custom_call.1} parent=11 // pred_check_branch
          %238 = sbr.rel (%p236) target = $region16
        $region15: #{tpu_custom_call.1} parent=11 // pred_region
          %s240 = ssub.s32 2048, 2048
          %241 = vsyncadd [#allocation8], %s240
          %s242 = sshll.u32 [#allocation7], 4
          %s243 = int_to_ptr.vmem [resolvable:$true] %s242
          %248 = dma.hbm_to_vmem [thread:$0]  %s1, 2048, %s243, [#allocation8], 128, 128, 8
        $region16: #{tpu_custom_call.1} parent=11 // pred_fallthru
          _
        // Predicated region
        $region17: #{tpu_custom_call.1} parent=11 // pred_check
          %p249 = pneg %p90
        $region18: #{tpu_custom_call.1} parent=11 // pred_check_branch
          %251 = sbr.rel (%p249) target = $region20
        $region19: #{tpu_custom_call.1} parent=11 // pred_region
          %s253 = ssub.s32 3072, 3072
          %254 = vsyncadd [#allocation8], %s253
          %s255 = sshll.u32 [#allocation9], 4
          %s256 = int_to_ptr.vmem [resolvable:$true] %s255
          %261 = dma.hbm_to_vmem [thread:$0]  %s2, 3072, %s256, [#allocation8], 192, 192, 12
        $region20: #{tpu_custom_call.1} parent=11 // pred_fallthru
          _
        // Predicated region
        $region21: #{tpu_custom_call.1} parent=11 // pred_check
          %p262 = pneg %p111
        $region22: #{tpu_custom_call.1} parent=11 // pred_check_branch
          %264 = sbr.rel (%p262) target = $region24
        $region23: #{tpu_custom_call.1} parent=11 // pred_region
          _
        $region24: #{tpu_custom_call.1} parent=11 // pred_fallthru
          _
        // Predicated region
        $region25: #{tpu_custom_call.1} parent=11 // pred_check
          %p265 = pneg %p132
        $region26: #{tpu_custom_call.1} parent=11 // pred_check_branch
          %267 = sbr.rel (%p265) target = $region28
        $region27: #{tpu_custom_call.1} parent=11 // pred_region
          %s269 = ssub.s32 1024, 1024
          %270 = vsyncadd [#allocation11], %s269
          %s271 = sshll.u32 [#allocation10], 4
          %s272 = int_to_ptr.vmem [resolvable:$true] %s271
          %277 = dma.hbm_to_vmem [thread:$0]  %s4, 1024, %s272, [#allocation11], 64, 64, 4
        $region28: #{tpu_custom_call.1} parent=11 // pred_fallthru
          _
        // Predicated region
        $region29: #{tpu_custom_call.1} parent=11 // pred_check
          %p278 = pneg %p153
        $region30: #{tpu_custom_call.1} parent=11 // pred_check_branch
          %280 = sbr.rel (%p278) target = $region32
        $region31: #{tpu_custom_call.1} parent=11 // pred_region
          _
        $region32: #{tpu_custom_call.1} parent=11 // pred_fallthru
          _
        // Predicated region
        $region33: #{tpu_custom_call.1} parent=11 // pred_check
          %p281 = pneg %p174
        $region34: #{tpu_custom_call.1} parent=11 // pred_check_branch
          %283 = sbr.rel (%p281) target = $region36
        $region35: #{tpu_custom_call.1} parent=11 // pred_region
          %s285 = ssub.s32 1024, 1024
          %286 = vsyncadd [#allocation11], %s285
          %s287 = sshll.u32 [#allocation12], 4
          %s288 = int_to_ptr.vmem [resolvable:$true] %s287
          %293 = dma.hbm_to_vmem [thread:$0]  %s6, 1024, %s288, [#allocation11], 64, 64, 4
        $region36: #{tpu_custom_call.1} parent=11 // pred_fallthru
          _
        // Predicated region
        $region37: #{tpu_custom_call.1} parent=11 // pred_check
          %p294 = pneg %p195
        $region38: #{tpu_custom_call.1} parent=11 // pred_check_branch
          %296 = sbr.rel (%p294) target = $region40
        $region39: #{tpu_custom_call.1} parent=11 // pred_region
          _
        $region40: #{tpu_custom_call.1} parent=11 // pred_fallthru
          _
      $region12: #{tpu_custom_call.1} parent=5 // pred_fallthru
        _
      %p297 = scmp.lt.s32.totalorder %s22, 2
      // Predicated region
      $region41: #{tpu_custom_call.1} parent=5 // pred_check
        %p298 = pneg %p297
      $region42: #{tpu_custom_call.1} parent=5 // pred_check_branch
        %300 = sbr.rel (%p298) target = $region44
      $region43: #{tpu_custom_call.1} parent=5 // pred_region
        // Predicated region
        $region45: #{tpu_custom_call.1} parent=43 // pred_check
          %p301 = pneg %p42
        $region46: #{tpu_custom_call.1} parent=43 // pred_check_branch
          %303 = sbr.rel (%p301) target = $region48
        $region47: #{tpu_custom_call.1} parent=43 // pred_region
          %s304 = sand.u32 %s32, 1
          %s305 = scalar_lea.sflag [#allocation5], %s304
          %s306 = sand.u32 %s32, 1
          %s307 = smul.addr %s306, 128
          %s308 = scalar_lea.vmem [#allocation4], %s307
          %s310 = ssub.s32 2048, 2048
          %311 = vsyncadd %s305, %s310
          %s312 = smul.addr %s22, 16
          %s313 = smul.addr %s312, 128
          %s314 = scalar_lea.hbm %s0, %s313
          %s315 = sshll.u32 %s308, 4
          %s316 = int_to_ptr.vmem [resolvable:$true] %s315
          %321 = dma.hbm_to_vmem [thread:$0]  %s314, 2048, %s316, %s305, 128, 128, 8
        $region48: #{tpu_custom_call.1} parent=43 // pred_fallthru
          _
      $region44: #{tpu_custom_call.1} parent=5 // pred_fallthru
        _
      %p322 = scmp.le.s32.totalorder 1, %s22
      %p323 = scmp.lt.s32.totalorder %s22, 3
      %p324 = pnand %p322, %p323
      %p325 = pneg %p324
      // Predicated region
      $region49: #{tpu_custom_call.1} parent=5 // pred_check
        _
      $region50: #{tpu_custom_call.1} parent=5 // pred_check_branch
        %327 = sbr.rel (%p324) target = $region52
      $region51: #{tpu_custom_call.1} parent=5 // pred_region
        %s328 = ssub.s32 %s22, 1
        %s329 = sand.u32 %s35, 1
        %s330 = scalar_lea.sflag [#allocation5], %s329
        %s331 = sand.u32 %s35, 1
        %s332 = smul.addr %s331, 128
        %s333 = scalar_lea.vmem [#allocation4], %s332
        // Predicated region
        $region53: #{tpu_custom_call.1} parent=51 // pred_check
          %p334 = pneg %p48
        $region54: #{tpu_custom_call.1} parent=51 // pred_check_branch
          %336 = sbr.rel (%p334) target = $region56
        $region55: #{tpu_custom_call.1} parent=51 // pred_region
          %337 = dma.done %s330, 2048
        $region56: #{tpu_custom_call.1} parent=51 // pred_fallthru
          _
        // Predicated region
        $region57: #{tpu_custom_call.1} parent=51 // pred_check
          %p338 = pneg %p69
        $region58: #{tpu_custom_call.1} parent=51 // pred_check_branch
          %340 = sbr.rel (%p338) target = $region60
        $region59: #{tpu_custom_call.1} parent=51 // pred_region
          %341 = dma.done [#allocation8], 2048
        $region60: #{tpu_custom_call.1} parent=51 // pred_fallthru
          _
        // Predicated region
        $region61: #{tpu_custom_call.1} parent=51 // pred_check
          %p342 = pneg %p90
        $region62: #{tpu_custom_call.1} parent=51 // pred_check_branch
          %344 = sbr.rel (%p342) target = $region64
        $region63: #{tpu_custom_call.1} parent=51 // pred_region
          %345 = dma.done [#allocation8], 3072
        $region64: #{tpu_custom_call.1} parent=51 // pred_fallthru
          _
        // Predicated region
        $region65: #{tpu_custom_call.1} parent=51 // pred_check
          %p346 = pneg %p132
        $region66: #{tpu_custom_call.1} parent=51 // pred_check_branch
          %348 = sbr.rel (%p346) target = $region68
        $region67: #{tpu_custom_call.1} parent=51 // pred_region
          %349 = dma.done [#allocation11], 1024
        $region68: #{tpu_custom_call.1} parent=51 // pred_fallthru
          _
        // Predicated region
        $region69: #{tpu_custom_call.1} parent=51 // pred_check
          %p350 = pneg %p174
        $region70: #{tpu_custom_call.1} parent=51 // pred_check_branch
          %352 = sbr.rel (%p350) target = $region72
        $region71: #{tpu_custom_call.1} parent=51 // pred_region
          %353 = dma.done [#allocation11], 1024
        $region72: #{tpu_custom_call.1} parent=51 // pred_fallthru
          _
        %s354 = sand.u32 %s35, 1
        %s355 = scalar_lea.sflag [#allocation5], %s354
        %s356 = sand.u32 %s35, 1
        %s357 = smul.addr %s356, 128
        %s358 = scalar_lea.vmem [#allocation4], %s357
        %p359 = pneg %p48
        %p360 = pneg %p45
        %p361 = pneg %p69
        %p362 = pneg %p66
        %p363 = pneg %p90
        %p364 = pneg %p87
        %p365 = pneg %p111
        %p366 = pneg %p108
        %p367 = pneg %p132
        %p368 = pneg %p129
        %p369 = pneg %p153
        %p370 = pneg %p150
        %p371 = pneg %p174
        %p372 = pneg %p171
        %p373 = pneg %p195
        %p374 = pneg %p192
        %p375 = pneg %p221
        %p376 = pneg %p218
        %s377 = sand.u32 %s208, 1
        %s378 = scalar_lea.sflag [#allocation6], %s377
        %s379 = sand.u32 %s208, 1
        %s380 = smul.addr %s379, 128
        %s381 = scalar_lea.vmem [#allocation13], %s380
        %v383 = vld [vmem:[%s333] sm:$0xff]
        %v384 = vld [vmem:[%s333 + $0x8] sm:$0xff]
        %v385 = vld [vmem:[%s333 + $0x10] sm:$0xff]
        %v386 = vld [vmem:[%s333 + $0x18] sm:$0xff]
        %v387 = vld [vmem:[%s333 + $0x20] sm:$0xff]
        %v388 = vld [vmem:[%s333 + $0x28] sm:$0xff]
        %v389 = vld [vmem:[%s333 + $0x30] sm:$0xff]
        %v390 = vld [vmem:[%s333 + $0x38] sm:$0xff]
        %v391 = vld [vmem:[%s333 + $0x40] sm:$0xff]
        %v392 = vld [vmem:[%s333 + $0x48] sm:$0xff]
        %v393 = vld [vmem:[%s333 + $0x50] sm:$0xff]
        %v394 = vld [vmem:[%s333 + $0x58] sm:$0xff]
        %v395 = vld [vmem:[%s333 + $0x60] sm:$0xff]
        %v396 = vld [vmem:[%s333 + $0x68] sm:$0xff]
        %v397 = vld [vmem:[%s333 + $0x70] sm:$0xff]
        %v398 = vld [vmem:[%s333 + $0x78] sm:$0xff]
        %v399 = vpack.c.bf16 %v384, %v383
        %v400 = vpack.c.bf16 %v386, %v385
        %v401 = vpack.c.bf16 %v388, %v387
        %v402 = vpack.c.bf16 %v390, %v389
        %v403 = vpack.c.bf16 %v392, %v391
        %v404 = vpack.c.bf16 %v394, %v393
        %v405 = vpack.c.bf16 %v396, %v395
        %v406 = vpack.c.bf16 %v398, %v397
        %v407 = vld [vmem:[#allocation9] sm:$0xff]
        %v408 = vld [vmem:[#allocation9 + $0x8] sm:$0xf]
        %v409 = vld [vmem:[#allocation9 + $0xc] sm:$0xff]
        %v410 = vld [vmem:[#allocation9 + $0x14] sm:$0xf]
        %v411 = vld [vmem:[#allocation9 + $0x18] sm:$0xff]
        %v412 = vld [vmem:[#allocation9 + $0x20] sm:$0xf]
        %v413 = vld [vmem:[#allocation9 + $0x24] sm:$0xff]
        %v414 = vld [vmem:[#allocation9 + $0x2c] sm:$0xf]
        %v415 = vld [vmem:[#allocation9 + $0x30] sm:$0xff]
        %v416 = vld [vmem:[#allocation9 + $0x38] sm:$0xf]
        %v417 = vld [vmem:[#allocation9 + $0x3c] sm:$0xff]
        %v418 = vld [vmem:[#allocation9 + $0x44] sm:$0xf]
        %v419 = vld [vmem:[#allocation9 + $0x48] sm:$0xff]
        %v420 = vld [vmem:[#allocation9 + $0x50] sm:$0xf]
        %v421 = vld [vmem:[#allocation9 + $0x54] sm:$0xff]
        %v422 = vld [vmem:[#allocation9 + $0x5c] sm:$0xf]
        %v423 = vld [vmem:[#allocation9 + $0x60] sm:$0xff]
        %v424 = vld [vmem:[#allocation9 + $0x68] sm:$0xf]
        %v425 = vld [vmem:[#allocation9 + $0x6c] sm:$0xff]
        %v426 = vld [vmem:[#allocation9 + $0x74] sm:$0xf]
        %v427 = vld [vmem:[#allocation9 + $0x78] sm:$0xff]
        %v428 = vld [vmem:[#allocation9 + $0x80] sm:$0xf]
        %v429 = vld [vmem:[#allocation9 + $0x84] sm:$0xff]
        %v430 = vld [vmem:[#allocation9 + $0x8c] sm:$0xf]
        %v431 = vld [vmem:[#allocation9 + $0x90] sm:$0xff]
        %v432 = vld [vmem:[#allocation9 + $0x98] sm:$0xf]
        %v433 = vld [vmem:[#allocation9 + $0x9c] sm:$0xff]
        %v434 = vld [vmem:[#allocation9 + $0xa4] sm:$0xf]
        %v435 = vld [vmem:[#allocation9 + $0xa8] sm:$0xff]
        %v436 = vld [vmem:[#allocation9 + $0xb0] sm:$0xf]
        %v437 = vld [vmem:[#allocation9 + $0xb4] sm:$0xff]
        %v438 = vld [vmem:[#allocation9 + $0xbc] sm:$0xf]
        %v439 = vld [vmem:[%s3] sm:$0x7]
        %v441 = vlaneseq
        %v442 = vshrl.u32 %v441, 7
        %v443 = vsub.s32 0, %v442
        %v444 = vrot.slane %v439, %v443
        %v445 = vlaneseq
        %v446 = vshrl.u32 %v445, 7
        %v447 = vsub.s32 1, %v446
        %v448 = vrot.slane %v439, %v447
        %v449 = vlaneseq
        %v450 = vshrl.u32 %v449, 7
        %v451 = vsub.s32 2, %v450
        %v452 = vrot.slane %v439, %v451
        %v488 = vunpack.c.l.b16 %v407
        %v489 = vunpack.c.h.b16 %v407
        %v490 = vunpack.c.l.b16 %v408
        %v491 = vunpack.c.l.b16 %v409
        %v492 = vunpack.c.h.b16 %v409
        %v493 = vunpack.c.l.b16 %v410
        %v494 = vunpack.c.l.b16 %v411
        %v495 = vunpack.c.h.b16 %v411
        %v496 = vunpack.c.l.b16 %v412
        %v497 = vunpack.c.l.b16 %v413
        %v498 = vunpack.c.h.b16 %v413
        %v499 = vunpack.c.l.b16 %v414
        %v500 = vunpack.c.l.b16 %v415
        %v501 = vunpack.c.h.b16 %v415
        %v502 = vunpack.c.l.b16 %v416
        %v503 = vunpack.c.l.b16 %v417
        %v504 = vunpack.c.h.b16 %v417
        %v505 = vunpack.c.l.b16 %v418
        %v506 = vunpack.c.l.b16 %v419
        %v507 = vunpack.c.h.b16 %v419
        %v508 = vunpack.c.l.b16 %v420
        %v509 = vunpack.c.l.b16 %v421
        %v510 = vunpack.c.h.b16 %v421
        %v511 = vunpack.c.l.b16 %v422
        %v512 = vunpack.c.l.b16 %v423
        %v513 = vunpack.c.h.b16 %v423
        %v514 = vunpack.c.l.b16 %v424
        %v515 = vunpack.c.l.b16 %v425
        %v516 = vunpack.c.h.b16 %v425
        %v517 = vunpack.c.l.b16 %v426
        %v518 = vunpack.c.l.b16 %v427
        %v519 = vunpack.c.h.b16 %v427
        %v520 = vunpack.c.l.b16 %v428
        %v521 = vunpack.c.l.b16 %v429
        %v522 = vunpack.c.h.b16 %v429
        %v523 = vunpack.c.l.b16 %v430
        %v524 = vunpack.c.l.b16 %v431
        %v525 = vunpack.c.h.b16 %v431
        %v526 = vunpack.c.l.b16 %v432
        %v527 = vunpack.c.l.b16 %v433
        %v528 = vunpack.c.h.b16 %v433
        %v529 = vunpack.c.l.b16 %v434
        %v530 = vunpack.c.l.b16 %v435
        %v531 = vunpack.c.h.b16 %v435
        %v532 = vunpack.c.l.b16 %v436
        %v533 = vunpack.c.l.b16 %v437
        %v534 = vunpack.c.h.b16 %v437
        %v535 = vunpack.c.l.b16 %v438
        %v536 = vpack.c.b16 %v491, %v488
        %v537 = vpack.c.b16 %v492, %v489
        %v538 = vpack.c.b16 %v493, %v490
        %v539 = vpack.c.b16 %v497, %v494
        %v540 = vpack.c.b16 %v498, %v495
        %v541 = vpack.c.b16 %v499, %v496
        %v542 = vpack.c.b16 %v503, %v500
        %v543 = vpack.c.b16 %v504, %v501
        %v544 = vpack.c.b16 %v505, %v502
        %v545 = vpack.c.b16 %v509, %v506
        %v546 = vpack.c.b16 %v510, %v507
        %v547 = vpack.c.b16 %v511, %v508
        %v548 = vpack.c.b16 %v515, %v512
        %v549 = vpack.c.b16 %v516, %v513
        %v550 = vpack.c.b16 %v517, %v514
        %v551 = vpack.c.b16 %v521, %v518
        %v552 = vpack.c.b16 %v522, %v519
        %v553 = vpack.c.b16 %v523, %v520
        %v554 = vpack.c.b16 %v527, %v524
        %v555 = vpack.c.b16 %v528, %v525
        %v556 = vpack.c.b16 %v529, %v526
        %v557 = vpack.c.b16 %v533, %v530
        %v558 = vpack.c.b16 %v534, %v531
        %v559 = vpack.c.b16 %v535, %v532
        %584 = vmatprep.subr.bf16.mxu0 %v537
        %585 = vmatpush1.bf16.msra.mxu0 %v536
        %586 = vmatprep.subr.bf16.mxu0 %v540
        %587 = vmatpush1.bf16.msra.mxu0 %v539
        %588 = vmatprep.subr.bf16.mxu0 %v543
        %589 = vmatpush1.bf16.msra.mxu0 %v542
        %590 = vmatprep.subr.bf16.mxu0 %v546
        %591 = vmatpush1.bf16.msra.mxu0 %v545
        %592 = vmatprep.subr.bf16.mxu0 %v549
        %593 = vmatpush1.bf16.msra.mxu0 %v548
        %594 = vmatprep.subr.bf16.mxu0 %v552
        %595 = vmatpush1.bf16.msra.mxu0 %v551
        %596 = vmatprep.subr.bf16.mxu0 %v555
        %597 = vmatpush1.bf16.msra.mxu0 %v554
        %598 = vmatprep.subr.bf16.mxu0 %v558
        %599 = vmatpush1.bf16.msra.mxu0 %v557
        %600 = vmatprep.subr.bf16.mxu0 0
        %601 = vmatpush1.bf16.msra.mxu0 0
        %602 = vmatprep.subr.bf16.mxu0 0
        %603 = vmatpush1.bf16.msra.mxu0 0
        %604 = vmatprep.subr.bf16.mxu0 0
        %605 = vmatpush1.bf16.msra.mxu0 0
        %606 = vmatprep.subr.bf16.mxu0 0
        %607 = vmatpush1.bf16.msra.mxu0 0
        %608 = vmatprep.subr.bf16.mxu0 0
        %609 = vmatpush1.bf16.msra.mxu0 0
        %610 = vmatprep.subr.bf16.mxu0 0
        %611 = vmatpush1.bf16.msra.mxu0 0
        %612 = vmatprep.subr.bf16.mxu0 0
        %613 = vmatpush1.bf16.msra.mxu0 0
        %614 = vmatprep.subr.bf16.mxu0 0
        %615 = vmatpush1.bf16.msra.mxu0 0
        %616 = vmatprep.mubr.bf16.mxu0 0
        %617 = vmatmul.mubr.bf16.gmra.mrb[0].mxu0 %v399
        %v618 = vpop.f32.mrb[0].mxu0
        %v619 = vadd.f32 %v444, %v618
        %v620 = vpop.f32.mrb[0].mxu0
        %v621 = vadd.f32 %v448, %v620
        %v622 = vpop.f32.mrb[0].mxu0
        %v623 = vadd.f32 %v444, %v622
        %v624 = vpop.f32.mrb[0].mxu0
        %v625 = vadd.f32 %v448, %v624
        %626 = vmatprep.mubr.bf16.mxu0 0
        %627 = vmatmul.mubr.bf16.gmra.mrb[0].mxu0 %v400
        %v628 = vpop.f32.mrb[0].mxu0
        %v629 = vadd.f32 %v444, %v628
        %v630 = vpop.f32.mrb[0].mxu0
        %v631 = vadd.f32 %v448, %v630
        %v632 = vpop.f32.mrb[0].mxu0
        %v633 = vadd.f32 %v444, %v632
        %v634 = vpop.f32.mrb[0].mxu0
        %v635 = vadd.f32 %v448, %v634
        %636 = vmatprep.mubr.bf16.mxu0 0
        %637 = vmatmul.mubr.bf16.gmra.mrb[0].mxu0 %v401
        %v638 = vpop.f32.mrb[0].mxu0
        %v639 = vadd.f32 %v444, %v638
        %v640 = vpop.f32.mrb[0].mxu0
        %v641 = vadd.f32 %v448, %v640
        %v642 = vpop.f32.mrb[0].mxu0
        %v643 = vadd.f32 %v444, %v642
        %v644 = vpop.f32.mrb[0].mxu0
        %v645 = vadd.f32 %v448, %v644
        %646 = vmatprep.mubr.bf16.mxu0 0
        %647 = vmatmul.mubr.bf16.gmra.mrb[0].mxu0 %v402
        %v648 = vpop.f32.mrb[0].mxu0
        %v649 = vadd.f32 %v444, %v648
        %v650 = vpop.f32.mrb[0].mxu0
        %v651 = vadd.f32 %v448, %v650
        %v652 = vpop.f32.mrb[0].mxu0
        %v653 = vadd.f32 %v444, %v652
        %v654 = vpop.f32.mrb[0].mxu0
        %v655 = vadd.f32 %v448, %v654
        %656 = vmatprep.mubr.bf16.mxu0 0
        %657 = vmatmul.mubr.bf16.gmra.mrb[0].mxu0 %v403
        %v658 = vpop.f32.mrb[0].mxu0
        %v659 = vadd.f32 %v444, %v658
        %v660 = vpop.f32.mrb[0].mxu0
        %v661 = vadd.f32 %v448, %v660
        %v662 = vpop.f32.mrb[0].mxu0
        %v663 = vadd.f32 %v444, %v662
        %v664 = vpop.f32.mrb[0].mxu0
        %v665 = vadd.f32 %v448, %v664
        %666 = vmatprep.mubr.bf16.mxu0 0
        %667 = vmatmul.mubr.bf16.gmra.mrb[0].mxu0 %v404
        %v668 = vpop.f32.mrb[0].mxu0
        %v669 = vadd.f32 %v444, %v668
        %v670 = vpop.f32.mrb[0].mxu0
        %v671 = vadd.f32 %v448, %v670
        %v672 = vpop.f32.mrb[0].mxu0
        %v673 = vadd.f32 %v444, %v672
        %v674 = vpop.f32.mrb[0].mxu0
        %v675 = vadd.f32 %v448, %v674
        %676 = vmatprep.mubr.bf16.mxu0 0
        %677 = vmatmul.mubr.bf16.gmra.mrb[0].mxu0 %v405
        %v678 = vpop.f32.mrb[0].mxu0
        %v679 = vadd.f32 %v444, %v678
        %v680 = vpop.f32.mrb[0].mxu0
        %v681 = vadd.f32 %v448, %v680
        %v682 = vpop.f32.mrb[0].mxu0
        %v683 = vadd.f32 %v444, %v682
        %v684 = vpop.f32.mrb[0].mxu0
        %v685 = vadd.f32 %v448, %v684
        %686 = vmatprep.mubr.bf16.mxu0 0
        %687 = vmatmul.mubr.bf16.gmra.mrb[0].mxu0 %v406
        %v688 = vpop.f32.mrb[0].mxu0
        %v689 = vadd.f32 %v444, %v688
        %v690 = vpop.f32.mrb[0].mxu0
        %v691 = vadd.f32 %v448, %v690
        %v692 = vpop.f32.mrb[0].mxu0
        %v693 = vadd.f32 %v444, %v692
        %v694 = vpop.f32.mrb[0].mxu0
        %v695 = vadd.f32 %v448, %v694
        %696 = vdwg.mxu0
        %697 = vmatprep.subr.bf16.mxu0 0
        %698 = vmatpush1.bf16.msra.mxu0 %v538
        %699 = vmatprep.subr.bf16.mxu0 0
        %700 = vmatpush1.bf16.msra.mxu0 %v541
        %701 = vmatprep.subr.bf16.mxu0 0
        %702 = vmatpush1.bf16.msra.mxu0 %v544
        %703 = vmatprep.subr.bf16.mxu0 0
        %704 = vmatpush1.bf16.msra.mxu0 %v547
        %705 = vmatprep.subr.bf16.mxu0 0
        %706 = vmatpush1.bf16.msra.mxu0 %v550
        %707 = vmatprep.subr.bf16.mxu0 0
        %708 = vmatpush1.bf16.msra.mxu0 %v553
        %709 = vmatprep.subr.bf16.mxu0 0
        %710 = vmatpush1.bf16.msra.mxu0 %v556
        %711 = vmatprep.subr.bf16.mxu0 0
        %712 = vmatpush1.bf16.msra.mxu0 %v559
        %713 = vmatprep.subr.bf16.mxu0 0
        %714 = vmatpush1.bf16.msra.mxu0 0
        %715 = vmatprep.subr.bf16.mxu0 0
        %716 = vmatpush1.bf16.msra.mxu0 0
        %717 = vmatprep.subr.bf16.mxu0 0
        %718 = vmatpush1.bf16.msra.mxu0 0
        %719 = vmatprep.subr.bf16.mxu0 0
        %720 = vmatpush1.bf16.msra.mxu0 0
        %721 = vmatprep.subr.bf16.mxu0 0
        %722 = vmatpush1.bf16.msra.mxu0 0
        %723 = vmatprep.subr.bf16.mxu0 0
        %724 = vmatpush1.bf16.msra.mxu0 0
        %725 = vmatprep.subr.bf16.mxu0 0
        %726 = vmatpush1.bf16.msra.mxu0 0
        %727 = vmatprep.subr.bf16.mxu0 0
        %728 = vmatpush1.bf16.msra.mxu0 0
        %729 = vmatprep.mubr.bf16.mxu0 0
        %730 = vmatmul.mubr.bf16.gmra.mrb[0].mxu0 %v399
        %v731 = vpop.f32.mrb[0].mxu0
        %v732 = vadd.f32 %v452, %v731
        %v733 = vpop.f32.mrb[0].mxu0
        %v734 = vpop.f32.mrb[0].mxu0
        %v735 = vadd.f32 %v452, %v734
        %v736 = vpop.f32.mrb[0].mxu0
        %737 = vmatprep.mubr.bf16.mxu0 0
        %738 = vmatmul.mubr.bf16.gmra.mrb[0].mxu0 %v400
        %v739 = vpop.f32.mrb[0].mxu0
        %v740 = vadd.f32 %v452, %v739
        %v741 = vpop.f32.mrb[0].mxu0
        %v742 = vpop.f32.mrb[0].mxu0
        %v743 = vadd.f32 %v452, %v742
        %v744 = vpop.f32.mrb[0].mxu0
        %745 = vmatprep.mubr.bf16.mxu0 0
        %746 = vmatmul.mubr.bf16.gmra.mrb[0].mxu0 %v401
        %v747 = vpop.f32.mrb[0].mxu0
        %v748 = vadd.f32 %v452, %v747
        %v749 = vpop.f32.mrb[0].mxu0
        %v750 = vpop.f32.mrb[0].mxu0
        %v751 = vadd.f32 %v452, %v750
        %v752 = vpop.f32.mrb[0].mxu0
        %753 = vmatprep.mubr.bf16.mxu0 0
        %754 = vmatmul.mubr.bf16.gmra.mrb[0].mxu0 %v402
        %v755 = vpop.f32.mrb[0].mxu0
        %v756 = vadd.f32 %v452, %v755
        %v757 = vpop.f32.mrb[0].mxu0
        %v758 = vpop.f32.mrb[0].mxu0
        %v759 = vadd.f32 %v452, %v758
        %v760 = vpop.f32.mrb[0].mxu0
        %761 = vmatprep.mubr.bf16.mxu0 0
        %762 = vmatmul.mubr.bf16.gmra.mrb[0].mxu0 %v403
        %v763 = vpop.f32.mrb[0].mxu0
        %v764 = vadd.f32 %v452, %v763
        %v765 = vpop.f32.mrb[0].mxu0
        %v766 = vpop.f32.mrb[0].mxu0
        %v767 = vadd.f32 %v452, %v766
        %v768 = vpop.f32.mrb[0].mxu0
        %769 = vmatprep.mubr.bf16.mxu0 0
        %770 = vmatmul.mubr.bf16.gmra.mrb[0].mxu0 %v404
        %v771 = vpop.f32.mrb[0].mxu0
        %v772 = vadd.f32 %v452, %v771
        %v773 = vpop.f32.mrb[0].mxu0
        %v774 = vpop.f32.mrb[0].mxu0
        %v775 = vadd.f32 %v452, %v774
        %v776 = vpop.f32.mrb[0].mxu0
        %777 = vmatprep.mubr.bf16.mxu0 0
        %778 = vmatmul.mubr.bf16.gmra.mrb[0].mxu0 %v405
        %v779 = vpop.f32.mrb[0].mxu0
        %v780 = vadd.f32 %v452, %v779
        %v781 = vpop.f32.mrb[0].mxu0
        %v782 = vpop.f32.mrb[0].mxu0
        %v783 = vadd.f32 %v452, %v782
        %v784 = vpop.f32.mrb[0].mxu0
        %785 = vmatprep.mubr.bf16.mxu0 0
        %786 = vmatmul.mubr.bf16.gmra.mrb[0].mxu0 %v406
        %v787 = vpop.f32.mrb[0].mxu0
        %v788 = vadd.f32 %v452, %v787
        %v789 = vpop.f32.mrb[0].mxu0
        %v790 = vpop.f32.mrb[0].mxu0
        %v791 = vadd.f32 %v452, %v790
        %v792 = vpop.f32.mrb[0].mxu0
        %793 = vdwg.mxu0
        %v794 = vpack.c.bf16 %v623, %v619
        %v795 = vpack.c.bf16 %v625, %v621
        %v796 = vpack.c.bf16 %v735, %v732
        %v797 = vpack.c.bf16 %v633, %v629
        %v798 = vpack.c.bf16 %v635, %v631
        %v799 = vpack.c.bf16 %v743, %v740
        %v800 = vpack.c.bf16 %v643, %v639
        %v801 = vpack.c.bf16 %v645, %v641
        %v802 = vpack.c.bf16 %v751, %v748
        %v803 = vpack.c.bf16 %v653, %v649
        %v804 = vpack.c.bf16 %v655, %v651
        %v805 = vpack.c.bf16 %v759, %v756
        %v806 = vpack.c.bf16 %v663, %v659
        %v807 = vpack.c.bf16 %v665, %v661
        %v808 = vpack.c.bf16 %v767, %v764
        %v809 = vpack.c.bf16 %v673, %v669
        %v810 = vpack.c.bf16 %v675, %v671
        %v811 = vpack.c.bf16 %v775, %v772
        %v812 = vpack.c.bf16 %v683, %v679
        %v813 = vpack.c.bf16 %v685, %v681
        %v814 = vpack.c.bf16 %v783, %v780
        %v815 = vpack.c.bf16 %v693, %v689
        %v816 = vpack.c.bf16 %v695, %v691
        %v817 = vpack.c.bf16 %v791, %v788
        %818 = vst [vmem:[#allocation2] sm:$0xff] %v794
        %819 = vst [vmem:[#allocation2 + $0x8] sm:$0xff] %v795
        %820 = vst [vmem:[#allocation2 + $0x10] sm:$0xff] %v796
        %821 = vst [vmem:[#allocation2 + $0x18] sm:$0xff] %v797
        %822 = vst [vmem:[#allocation2 + $0x20] sm:$0xff] %v798
        %823 = vst [vmem:[#allocation2 + $0x28] sm:$0xff] %v799
        %824 = vst [vmem:[#allocation2 + $0x30] sm:$0xff] %v800
        %825 = vst [vmem:[#allocation2 + $0x38] sm:$0xff] %v801
        %826 = vst [vmem:[#allocation2 + $0x40] sm:$0xff] %v802
        %827 = vst [vmem:[#allocation2 + $0x48] sm:$0xff] %v803
        %828 = vst [vmem:[#allocation2 + $0x50] sm:$0xff] %v804
        %829 = vst [vmem:[#allocation2 + $0x58] sm:$0xff] %v805
        %830 = vst [vmem:[#allocation2 + $0x60] sm:$0xff] %v806
        %831 = vst [vmem:[#allocation2 + $0x68] sm:$0xff] %v807
        %832 = vst [vmem:[#allocation2 + $0x70] sm:$0xff] %v808
        %833 = vst [vmem:[#allocation2 + $0x78] sm:$0xff] %v809
        %834 = vst [vmem:[#allocation2 + $0x80] sm:$0xff] %v810
        %835 = vst [vmem:[#allocation2 + $0x88] sm:$0xff] %v811
        %836 = vst [vmem:[#allocation2 + $0x90] sm:$0xff] %v812
        %837 = vst [vmem:[#allocation2 + $0x98] sm:$0xff] %v813
        %838 = vst [vmem:[#allocation2 + $0xa0] sm:$0xff] %v814
        %839 = vst [vmem:[#allocation2 + $0xa8] sm:$0xff] %v815
        %840 = vst [vmem:[#allocation2 + $0xb0] sm:$0xff] %v816
        %841 = vst [vmem:[#allocation2 + $0xb8] sm:$0xff] %v817
        %v842 = vld [vmem:[#allocation2] sm:$0xff]
        %v843 = vld [vmem:[#allocation2 + $0x18] sm:$0xff]
        %v844 = vld [vmem:[#allocation2 + $0x30] sm:$0xff]
        %v845 = vld [vmem:[#allocation2 + $0x48] sm:$0xff]
        %v846 = vld [vmem:[#allocation2 + $0x60] sm:$0xff]
        %v847 = vld [vmem:[#allocation2 + $0x78] sm:$0xff]
        %v848 = vld [vmem:[#allocation2 + $0x90] sm:$0xff]
        %v849 = vld [vmem:[#allocation2 + $0xa8] sm:$0xff]
        %v850 = vld [vmem:[#allocation2 + $0x8] sm:$0xff]
        %v851 = vld [vmem:[#allocation2 + $0x20] sm:$0xff]
        %v852 = vld [vmem:[#allocation2 + $0x38] sm:$0xff]
        %v853 = vld [vmem:[#allocation2 + $0x50] sm:$0xff]
        %v854 = vld [vmem:[#allocation2 + $0x68] sm:$0xff]
        %v855 = vld [vmem:[#allocation2 + $0x80] sm:$0xff]
        %v856 = vld [vmem:[#allocation2 + $0x98] sm:$0xff]
        %v857 = vld [vmem:[#allocation2 + $0xb0] sm:$0xff]
        %v858 = vld [vmem:[#allocation2 + $0x10] sm:$0xff]
        %v859 = vld [vmem:[#allocation2 + $0x28] sm:$0xff]
        %v860 = vld [vmem:[#allocation2 + $0x40] sm:$0xff]
        %v861 = vld [vmem:[#allocation2 + $0x58] sm:$0xff]
        %v862 = vld [vmem:[#allocation2 + $0x70] sm:$0xff]
        %v863 = vld [vmem:[#allocation2 + $0x88] sm:$0xff]
        %v864 = vld [vmem:[#allocation2 + $0xa0] sm:$0xff]
        %v865 = vld [vmem:[#allocation2 + $0xb8] sm:$0xff]
        %v866 = vld [vmem:[#allocation7] sm:$0xff]
        %v867 = vld [vmem:[#allocation7 + $0x8] sm:$0xff]
        %v868 = vld [vmem:[#allocation7 + $0x10] sm:$0xff]
        %v869 = vld [vmem:[#allocation7 + $0x18] sm:$0xff]
        %v870 = vld [vmem:[#allocation7 + $0x20] sm:$0xff]
        %v871 = vld [vmem:[#allocation7 + $0x28] sm:$0xff]
        %v872 = vld [vmem:[#allocation7 + $0x30] sm:$0xff]
        %v873 = vld [vmem:[#allocation7 + $0x38] sm:$0xff]
        %v874 = vld [vmem:[#allocation7 + $0x40] sm:$0xff]
        %v875 = vld [vmem:[#allocation7 + $0x48] sm:$0xff]
        %v876 = vld [vmem:[#allocation7 + $0x50] sm:$0xff]
        %v877 = vld [vmem:[#allocation7 + $0x58] sm:$0xff]
        %v878 = vld [vmem:[#allocation7 + $0x60] sm:$0xff]
        %v879 = vld [vmem:[#allocation7 + $0x68] sm:$0xff]
        %v880 = vld [vmem:[#allocation7 + $0x70] sm:$0xff]
        %v881 = vld [vmem:[#allocation7 + $0x78] sm:$0xff]
        %vm882 = vcmask 261120
        %v884 = vsel %vm882, %v842, 0
        %v887 = vsel %vm882, %v843, 0
        %v890 = vsel %vm882, %v844, 0
        %v893 = vsel %vm882, %v845, 0
        %v896 = vsel %vm882, %v846, 0
        %v899 = vsel %vm882, %v847, 0
        %v902 = vsel %vm882, %v848, 0
        %v905 = vsel %vm882, %v849, 0
        %v908 = vsel %vm882, %v850, 0
        %v911 = vsel %vm882, %v851, 0
        %v914 = vsel %vm882, %v852, 0
        %v917 = vsel %vm882, %v853, 0
        %v920 = vsel %vm882, %v854, 0
        %v923 = vsel %vm882, %v855, 0
        %v926 = vsel %vm882, %v856, 0
        %v929 = vsel %vm882, %v857, 0
        %931 = vmatprep.subr.bf16.mxu0 0
        %932 = vmatpush1.bf16.xpose.msra.mxu0 %v908
        %933 = vmatprep.subr.bf16.mxu0 0
        %934 = vmatpush1.bf16.xpose.msra.mxu0 %v911
        %935 = vmatprep.subr.bf16.mxu0 0
        %936 = vmatpush1.bf16.xpose.msra.mxu0 %v914
        %937 = vmatprep.subr.bf16.mxu0 0
        %938 = vmatpush1.bf16.xpose.msra.mxu0 %v917
        %939 = vmatprep.subr.bf16.mxu0 0
        %940 = vmatpush1.bf16.xpose.msra.mxu0 %v920
        %941 = vmatprep.subr.bf16.mxu0 0
        %942 = vmatpush1.bf16.xpose.msra.mxu0 %v923
        %943 = vmatprep.subr.bf16.mxu0 0
        %944 = vmatpush1.bf16.xpose.msra.mxu0 %v926
        %945 = vmatprep.subr.bf16.mxu0 0
        %946 = vmatpush1.bf16.xpose.msra.mxu0 %v929
        %947 = vmatprep.subr.bf16.mxu0 0
        %948 = vmatpush1.bf16.xpose.msra.mxu0 0
        %949 = vmatprep.subr.bf16.mxu0 0
        %950 = vmatpush1.bf16.xpose.msra.mxu0 0
        %951 = vmatprep.subr.bf16.mxu0 0
        %952 = vmatpush1.bf16.xpose.msra.mxu0 0
        %953 = vmatprep.subr.bf16.mxu0 0
        %954 = vmatpush1.bf16.xpose.msra.mxu0 0
        %955 = vmatprep.subr.bf16.mxu0 0
        %956 = vmatpush1.bf16.xpose.msra.mxu0 0
        %957 = vmatprep.subr.bf16.mxu0 0
        %958 = vmatpush1.bf16.xpose.msra.mxu0 0
        %959 = vmatprep.subr.bf16.mxu0 0
        %960 = vmatpush1.bf16.xpose.msra.mxu0 0
        %961 = vmatprep.subr.bf16.mxu0 0
        %962 = vmatpush1.bf16.xpose.msra.mxu0 0
        %963 = vmatprep.mubr.bf16.mxu0 0
        %964 = vmatmul.mubr.bf16.gmra.mrb[0].mxu0 %v884
        %v965 = vpop.f32.mrb[0].mxu0
        %v966 = vadd.f32 %v866, %v965
        %v967 = vpop.f32.mrb[0].mxu0
        %v968 = vpop.f32.mrb[0].mxu0
        %v969 = vadd.f32 %v867, %v968
        %v970 = vpop.f32.mrb[0].mxu0
        %971 = vmatprep.mubr.bf16.mxu0 0
        %972 = vmatmul.mubr.bf16.gmra.mrb[0].mxu0 %v887
        %v973 = vpop.f32.mrb[0].mxu0
        %v974 = vadd.f32 %v868, %v973
        %v975 = vpop.f32.mrb[0].mxu0
        %v976 = vpop.f32.mrb[0].mxu0
        %v977 = vadd.f32 %v869, %v976
        %v978 = vpop.f32.mrb[0].mxu0
        %979 = vmatprep.mubr.bf16.mxu0 0
        %980 = vmatmul.mubr.bf16.gmra.mrb[0].mxu0 %v890
        %v981 = vpop.f32.mrb[0].mxu0
        %v982 = vadd.f32 %v870, %v981
        %v983 = vpop.f32.mrb[0].mxu0
        %v984 = vpop.f32.mrb[0].mxu0
        %v985 = vadd.f32 %v871, %v984
        %v986 = vpop.f32.mrb[0].mxu0
        %987 = vmatprep.mubr.bf16.mxu0 0
        %988 = vmatmul.mubr.bf16.gmra.mrb[0].mxu0 %v893
        %v989 = vpop.f32.mrb[0].mxu0
        %v990 = vadd.f32 %v872, %v989
        %v991 = vpop.f32.mrb[0].mxu0
        %v992 = vpop.f32.mrb[0].mxu0
        %v993 = vadd.f32 %v873, %v992
        %v994 = vpop.f32.mrb[0].mxu0
        %995 = vmatprep.mubr.bf16.mxu0 0
        %996 = vmatmul.mubr.bf16.gmra.mrb[0].mxu0 %v896
        %v997 = vpop.f32.mrb[0].mxu0
        %v998 = vadd.f32 %v874, %v997
        %v999 = vpop.f32.mrb[0].mxu0
        %v1000 = vpop.f32.mrb[0].mxu0
        %v1001 = vadd.f32 %v875, %v1000
        %v1002 = vpop.f32.mrb[0].mxu0
        %1003 = vmatprep.mubr.bf16.mxu0 0
        %1004 = vmatmul.mubr.bf16.gmra.mrb[0].mxu0 %v899
        %v1005 = vpop.f32.mrb[0].mxu0
        %v1006 = vadd.f32 %v876, %v1005
        %v1007 = vpop.f32.mrb[0].mxu0
        %v1008 = vpop.f32.mrb[0].mxu0
        %v1009 = vadd.f32 %v877, %v1008
        %v1010 = vpop.f32.mrb[0].mxu0
        %1011 = vmatprep.mubr.bf16.mxu0 0
        %1012 = vmatmul.mubr.bf16.gmra.mrb[0].mxu0 %v902
        %v1013 = vpop.f32.mrb[0].mxu0
        %v1014 = vadd.f32 %v878, %v1013
        %v1015 = vpop.f32.mrb[0].mxu0
        %v1016 = vpop.f32.mrb[0].mxu0
        %v1017 = vadd.f32 %v879, %v1016
        %v1018 = vpop.f32.mrb[0].mxu0
        %1019 = vmatprep.mubr.bf16.mxu0 0
        %1020 = vmatmul.mubr.bf16.gmra.mrb[0].mxu0 %v905
        %v1021 = vpop.f32.mrb[0].mxu0
        %v1022 = vadd.f32 %v880, %v1021
        %v1023 = vpop.f32.mrb[0].mxu0
        %v1024 = vpop.f32.mrb[0].mxu0
        %v1025 = vadd.f32 %v881, %v1024
        %v1026 = vpop.f32.mrb[0].mxu0
        %1027 = vdwg.mxu0
        %1028 = vmax.xlane.f32.xlu0 %v966
        %v1029 = vpop.xlane.xlu0 %1028
        %1030 = vmax.xlane.f32.xlu0 %v969
        %v1031 = vpop.xlane.xlu0 %1030
        %1032 = vmax.xlane.f32.xlu0 %v974
        %v1033 = vpop.xlane.xlu0 %1032
        %1034 = vmax.xlane.f32.xlu0 %v977
        %v1035 = vpop.xlane.xlu0 %1034
        %1036 = vmax.xlane.f32.xlu0 %v982
        %v1037 = vpop.xlane.xlu0 %1036
        %1038 = vmax.xlane.f32.xlu0 %v985
        %v1039 = vpop.xlane.xlu0 %1038
        %1040 = vmax.xlane.f32.xlu0 %v990
        %v1041 = vpop.xlane.xlu0 %1040
        %1042 = vmax.xlane.f32.xlu0 %v993
        %v1043 = vpop.xlane.xlu0 %1042
        %1044 = vmax.xlane.f32.xlu0 %v998
        %v1045 = vpop.xlane.xlu0 %1044
        %1046 = vmax.xlane.f32.xlu0 %v1001
        %v1047 = vpop.xlane.xlu0 %1046
        %1048 = vmax.xlane.f32.xlu0 %v1006
        %v1049 = vpop.xlane.xlu0 %1048
        %1050 = vmax.xlane.f32.xlu0 %v1009
        %v1051 = vpop.xlane.xlu0 %1050
        %1052 = vmax.xlane.f32.xlu0 %v1014
        %v1053 = vpop.xlane.xlu0 %1052
        %1054 = vmax.xlane.f32.xlu0 %v1017
        %v1055 = vpop.xlane.xlu0 %1054
        %1056 = vmax.xlane.f32.xlu0 %v1022
        %v1057 = vpop.xlane.xlu0 %1056
        %1058 = vmax.xlane.f32.xlu0 %v1025
        %v1059 = vpop.xlane.xlu0 %1058
        %v1060 = vsub.f32 %v966, %v1029
        %v1061 = vsub.f32 %v969, %v1031
        %v1062 = vsub.f32 %v974, %v1033
        %v1063 = vsub.f32 %v977, %v1035
        %v1064 = vsub.f32 %v982, %v1037
        %v1065 = vsub.f32 %v985, %v1039
        %v1066 = vsub.f32 %v990, %v1041
        %v1067 = vsub.f32 %v993, %v1043
        %v1068 = vsub.f32 %v998, %v1045
        %v1069 = vsub.f32 %v1001, %v1047
        %v1070 = vsub.f32 %v1006, %v1049
        %v1071 = vsub.f32 %v1009, %v1051
        %v1072 = vsub.f32 %v1014, %v1053
        %v1073 = vsub.f32 %v1017, %v1055
        %v1074 = vsub.f32 %v1022, %v1057
        %v1075 = vsub.f32 %v1025, %v1059
        %v1076 = vmul.f32 %v1060, 1.442695
        %v1077 = vpow.pop %v1076
        %v1078 = vmul.f32 %v1061, 1.442695
        %v1079 = vpow.pop %v1078
        %v1080 = vmul.f32 %v1062, 1.442695
        %v1081 = vpow.pop %v1080
        %v1082 = vmul.f32 %v1063, 1.442695
        %v1083 = vpow.pop %v1082
        %v1084 = vmul.f32 %v1064, 1.442695
        %v1085 = vpow.pop %v1084
        %v1086 = vmul.f32 %v1065, 1.442695
        %v1087 = vpow.pop %v1086
        %v1088 = vmul.f32 %v1066, 1.442695
        %v1089 = vpow.pop %v1088
        %v1090 = vmul.f32 %v1067, 1.442695
        %v1091 = vpow.pop %v1090
        %v1092 = vmul.f32 %v1068, 1.442695
        %v1093 = vpow.pop %v1092
        %v1094 = vmul.f32 %v1069, 1.442695
        %v1095 = vpow.pop %v1094
        %v1096 = vmul.f32 %v1070, 1.442695
        %v1097 = vpow.pop %v1096
        %v1098 = vmul.f32 %v1071, 1.442695
        %v1099 = vpow.pop %v1098
        %v1100 = vmul.f32 %v1072, 1.442695
        %v1101 = vpow.pop %v1100
        %v1102 = vmul.f32 %v1073, 1.442695
        %v1103 = vpow.pop %v1102
        %v1104 = vmul.f32 %v1074, 1.442695
        %v1105 = vpow.pop %v1104
        %v1106 = vmul.f32 %v1075, 1.442695
        %v1107 = vpow.pop %v1106
        %1108 = vadd.xlane.f32.xlu0 %v1077
        %v1109 = vpop.xlane.xlu0 %1108
        %1110 = vadd.xlane.f32.xlu0 %v1079
        %v1111 = vpop.xlane.xlu0 %1110
        %1112 = vadd.xlane.f32.xlu0 %v1081
        %v1113 = vpop.xlane.xlu0 %1112
        %1114 = vadd.xlane.f32.xlu0 %v1083
        %v1115 = vpop.xlane.xlu0 %1114
        %1116 = vadd.xlane.f32.xlu0 %v1085
        %v1117 = vpop.xlane.xlu0 %1116
        %1118 = vadd.xlane.f32.xlu0 %v1087
        %v1119 = vpop.xlane.xlu0 %1118
        %1120 = vadd.xlane.f32.xlu0 %v1089
        %v1121 = vpop.xlane.xlu0 %1120
        %1122 = vadd.xlane.f32.xlu0 %v1091
        %v1123 = vpop.xlane.xlu0 %1122
        %1124 = vadd.xlane.f32.xlu0 %v1093
        %v1125 = vpop.xlane.xlu0 %1124
        %1126 = vadd.xlane.f32.xlu0 %v1095
        %v1127 = vpop.xlane.xlu0 %1126
        %1128 = vadd.xlane.f32.xlu0 %v1097
        %v1129 = vpop.xlane.xlu0 %1128
        %1130 = vadd.xlane.f32.xlu0 %v1099
        %v1131 = vpop.xlane.xlu0 %1130
        %1132 = vadd.xlane.f32.xlu0 %v1101
        %v1133 = vpop.xlane.xlu0 %1132
        %1134 = vadd.xlane.f32.xlu0 %v1103
        %v1135 = vpop.xlane.xlu0 %1134
        %1136 = vadd.xlane.f32.xlu0 %v1105
        %v1137 = vpop.xlane.xlu0 %1136
        %1138 = vadd.xlane.f32.xlu0 %v1107
        %v1139 = vpop.xlane.xlu0 %1138
        %v1140 = vpack.c.bf16 %v1079, %v1077
        %v1141 = vpack.c.bf16 %v1083, %v1081
        %v1142 = vpack.c.bf16 %v1087, %v1085
        %v1143 = vpack.c.bf16 %v1091, %v1089
        %v1144 = vpack.c.bf16 %v1095, %v1093
        %v1145 = vpack.c.bf16 %v1099, %v1097
        %v1146 = vpack.c.bf16 %v1103, %v1101
        %v1147 = vpack.c.bf16 %v1107, %v1105
        %1148 = vmatprep.subr.bf16.mxu0 0
        %1149 = vmatpush1.bf16.msra.mxu0 %v858
        %1150 = vmatprep.subr.bf16.mxu0 0
        %1151 = vmatpush1.bf16.msra.mxu0 %v859
        %1152 = vmatprep.subr.bf16.mxu0 0
        %1153 = vmatpush1.bf16.msra.mxu0 %v860
        %1154 = vmatprep.subr.bf16.mxu0 0
        %1155 = vmatpush1.bf16.msra.mxu0 %v861
        %1156 = vmatprep.subr.bf16.mxu0 0
        %1157 = vmatpush1.bf16.msra.mxu0 %v862
        %1158 = vmatprep.subr.bf16.mxu0 0
        %1159 = vmatpush1.bf16.msra.mxu0 %v863
        %1160 = vmatprep.subr.bf16.mxu0 0
        %1161 = vmatpush1.bf16.msra.mxu0 %v864
        %1162 = vmatprep.subr.bf16.mxu0 0
        %1163 = vmatpush1.bf16.msra.mxu0 %v865
        %1164 = vmatprep.subr.bf16.mxu0 0
        %1165 = vmatpush1.bf16.msra.mxu0 0
        %1166 = vmatprep.subr.bf16.mxu0 0
        %1167 = vmatpush1.bf16.msra.mxu0 0
        %1168 = vmatprep.subr.bf16.mxu0 0
        %1169 = vmatpush1.bf16.msra.mxu0 0
        %1170 = vmatprep.subr.bf16.mxu0 0
        %1171 = vmatpush1.bf16.msra.mxu0 0
        %1172 = vmatprep.subr.bf16.mxu0 0
        %1173 = vmatpush1.bf16.msra.mxu0 0
        %1174 = vmatprep.subr.bf16.mxu0 0
        %1175 = vmatpush1.bf16.msra.mxu0 0
        %1176 = vmatprep.subr.bf16.mxu0 0
        %1177 = vmatpush1.bf16.msra.mxu0 0
        %1178 = vmatprep.subr.bf16.mxu0 0
        %1179 = vmatpush1.bf16.msra.mxu0 0
        %1180 = vmatprep.mubr.bf16.mxu0 0
        %1181 = vmatmul.mubr.bf16.gmra.mrb[0].mxu0 %v1140
        %v1182 = vpop.f32.mrb[0].mxu0
        %v1183 = vadd.f32 0.0, %v1182
        %v1184 = vpop.f32.mrb[0].mxu0
        %v1185 = vpop.f32.mrb[0].mxu0
        %v1186 = vadd.f32 0.0, %v1185
        %v1187 = vpop.f32.mrb[0].mxu0
        %1188 = vmatprep.mubr.bf16.mxu0 0
        %1189 = vmatmul.mubr.bf16.gmra.mrb[0].mxu0 %v1141
        %v1190 = vpop.f32.mrb[0].mxu0
        %v1191 = vadd.f32 0.0, %v1190
        %v1192 = vpop.f32.mrb[0].mxu0
        %v1193 = vpop.f32.mrb[0].mxu0
        %v1194 = vadd.f32 0.0, %v1193
        %v1195 = vpop.f32.mrb[0].mxu0
        %1196 = vmatprep.mubr.bf16.mxu0 0
        %1197 = vmatmul.mubr.bf16.gmra.mrb[0].mxu0 %v1142
        %v1198 = vpop.f32.mrb[0].mxu0
        %v1199 = vadd.f32 0.0, %v1198
        %v1200 = vpop.f32.mrb[0].mxu0
        %v1201 = vpop.f32.mrb[0].mxu0
        %v1202 = vadd.f32 0.0, %v1201
        %v1203 = vpop.f32.mrb[0].mxu0
        %1204 = vmatprep.mubr.bf16.mxu0 0
        %1205 = vmatmul.mubr.bf16.gmra.mrb[0].mxu0 %v1143
        %v1206 = vpop.f32.mrb[0].mxu0
        %v1207 = vadd.f32 0.0, %v1206
        %v1208 = vpop.f32.mrb[0].mxu0
        %v1209 = vpop.f32.mrb[0].mxu0
        %v1210 = vadd.f32 0.0, %v1209
        %v1211 = vpop.f32.mrb[0].mxu0
        %1212 = vmatprep.mubr.bf16.mxu0 0
        %1213 = vmatmul.mubr.bf16.gmra.mrb[0].mxu0 %v1144
        %v1214 = vpop.f32.mrb[0].mxu0
        %v1215 = vadd.f32 0.0, %v1214
        %v1216 = vpop.f32.mrb[0].mxu0
        %v1217 = vpop.f32.mrb[0].mxu0
        %v1218 = vadd.f32 0.0, %v1217
        %v1219 = vpop.f32.mrb[0].mxu0
        %1220 = vmatprep.mubr.bf16.mxu0 0
        %1221 = vmatmul.mubr.bf16.gmra.mrb[0].mxu0 %v1145
        %v1222 = vpop.f32.mrb[0].mxu0
        %v1223 = vadd.f32 0.0, %v1222
        %v1224 = vpop.f32.mrb[0].mxu0
        %v1225 = vpop.f32.mrb[0].mxu0
        %v1226 = vadd.f32 0.0, %v1225
        %v1227 = vpop.f32.mrb[0].mxu0
        %1228 = vmatprep.mubr.bf16.mxu0 0
        %1229 = vmatmul.mubr.bf16.gmra.mrb[0].mxu0 %v1146
        %v1230 = vpop.f32.mrb[0].mxu0
        %v1231 = vadd.f32 0.0, %v1230
        %v1232 = vpop.f32.mrb[0].mxu0
        %v1233 = vpop.f32.mrb[0].mxu0
        %v1234 = vadd.f32 0.0, %v1233
        %v1235 = vpop.f32.mrb[0].mxu0
        %1236 = vmatprep.mubr.bf16.mxu0 0
        %1237 = vmatmul.mubr.bf16.gmra.mrb[0].mxu0 %v1147
        %v1238 = vpop.f32.mrb[0].mxu0
        %v1239 = vadd.f32 0.0, %v1238
        %v1240 = vpop.f32.mrb[0].mxu0
        %v1241 = vpop.f32.mrb[0].mxu0
        %v1242 = vadd.f32 0.0, %v1241
        %v1243 = vpop.f32.mrb[0].mxu0
        %1244 = vdwg.mxu0
        %v1245 = vrcp.pop %v1109
        %v1246 = vrcp.pop %v1111
        %v1247 = vrcp.pop %v1113
        %v1248 = vrcp.pop %v1115
        %v1249 = vrcp.pop %v1117
        %v1250 = vrcp.pop %v1119
        %v1251 = vrcp.pop %v1121
        %v1252 = vrcp.pop %v1123
        %v1253 = vrcp.pop %v1125
        %v1254 = vrcp.pop %v1127
        %v1255 = vrcp.pop %v1129
        %v1256 = vrcp.pop %v1131
        %v1257 = vrcp.pop %v1133
        %v1258 = vrcp.pop %v1135
        %v1259 = vrcp.pop %v1137
        %v1260 = vrcp.pop %v1139
        %v1261 = vmul.f32 %v1183, %v1245
        %v1262 = vmul.f32 %v1186, %v1246
        %v1263 = vmul.f32 %v1191, %v1247
        %v1264 = vmul.f32 %v1194, %v1248
        %v1265 = vmul.f32 %v1199, %v1249
        %v1266 = vmul.f32 %v1202, %v1250
        %v1267 = vmul.f32 %v1207, %v1251
        %v1268 = vmul.f32 %v1210, %v1252
        %v1269 = vmul.f32 %v1215, %v1253
        %v1270 = vmul.f32 %v1218, %v1254
        %v1271 = vmul.f32 %v1223, %v1255
        %v1272 = vmul.f32 %v1226, %v1256
        %v1273 = vmul.f32 %v1231, %v1257
        %v1274 = vmul.f32 %v1234, %v1258
        %v1275 = vmul.f32 %v1239, %v1259
        %v1276 = vmul.f32 %v1242, %v1260
        %v1277 = vpack.c.bf16 %v1262, %v1261
        %v1278 = vpack.c.bf16 %v1264, %v1263
        %v1279 = vpack.c.bf16 %v1266, %v1265
        %v1280 = vpack.c.bf16 %v1268, %v1267
        %v1281 = vpack.c.bf16 %v1270, %v1269
        %v1282 = vpack.c.bf16 %v1272, %v1271
        %v1283 = vpack.c.bf16 %v1274, %v1273
        %v1284 = vpack.c.bf16 %v1276, %v1275
        %1285 = vst.msk [vmem:[#allocation3] sm:$0xff] %vm882, %v1277
        %1286 = vst.msk [vmem:[#allocation3 + $0x8] sm:$0xff] %vm882, %v1278
        %1287 = vst.msk [vmem:[#allocation3 + $0x10] sm:$0xff] %vm882, %v1279
        %1288 = vst.msk [vmem:[#allocation3 + $0x18] sm:$0xff] %vm882, %v1280
        %1289 = vst.msk [vmem:[#allocation3 + $0x20] sm:$0xff] %vm882, %v1281
        %1290 = vst.msk [vmem:[#allocation3 + $0x28] sm:$0xff] %vm882, %v1282
        %1291 = vst.msk [vmem:[#allocation3 + $0x30] sm:$0xff] %vm882, %v1283
        %1292 = vst.msk [vmem:[#allocation3 + $0x38] sm:$0xff] %vm882, %v1284
        %v1293 = vld [vmem:[#allocation2] sm:$0xff]
        %v1294 = vld [vmem:[#allocation2 + $0x18] sm:$0xff]
        %v1295 = vld [vmem:[#allocation2 + $0x30] sm:$0xff]
        %v1296 = vld [vmem:[#allocation2 + $0x48] sm:$0xff]
        %v1297 = vld [vmem:[#allocation2 + $0x60] sm:$0xff]
        %v1298 = vld [vmem:[#allocation2 + $0x78] sm:$0xff]
        %v1299 = vld [vmem:[#allocation2 + $0x90] sm:$0xff]
        %v1300 = vld [vmem:[#allocation2 + $0xa8] sm:$0xff]
        %v1301 = vld [vmem:[#allocation2 + $0x8] sm:$0xff]
        %v1302 = vld [vmem:[#allocation2 + $0x20] sm:$0xff]
        %v1303 = vld [vmem:[#allocation2 + $0x38] sm:$0xff]
        %v1304 = vld [vmem:[#allocation2 + $0x50] sm:$0xff]
        %v1305 = vld [vmem:[#allocation2 + $0x68] sm:$0xff]
        %v1306 = vld [vmem:[#allocation2 + $0x80] sm:$0xff]
        %v1307 = vld [vmem:[#allocation2 + $0x98] sm:$0xff]
        %v1308 = vld [vmem:[#allocation2 + $0xb0] sm:$0xff]
        %v1309 = vld [vmem:[#allocation2 + $0x10] sm:$0xff]
        %v1310 = vld [vmem:[#allocation2 + $0x28] sm:$0xff]
        %v1311 = vld [vmem:[#allocation2 + $0x40] sm:$0xff]
        %v1312 = vld [vmem:[#allocation2 + $0x58] sm:$0xff]
        %v1313 = vld [vmem:[#allocation2 + $0x70] sm:$0xff]
        %v1314 = vld [vmem:[#allocation2 + $0x88] sm:$0xff]
        %v1315 = vld [vmem:[#allocation2 + $0xa0] sm:$0xff]
        %v1316 = vld [vmem:[#allocation2 + $0xb8] sm:$0xff]
        %v1317 = vld [vmem:[#allocation7] sm:$0xff]
        %v1318 = vld [vmem:[#allocation7 + $0x8] sm:$0xff]
        %v1319 = vld [vmem:[#allocation7 + $0x10] sm:$0xff]
        %v1320 = vld [vmem:[#allocation7 + $0x18] sm:$0xff]
        %v1321 = vld [vmem:[#allocation7 + $0x20] sm:$0xff]
        %v1322 = vld [vmem:[#allocation7 + $0x28] sm:$0xff]
        %v1323 = vld [vmem:[#allocation7 + $0x30] sm:$0xff]
        %v1324 = vld [vmem:[#allocation7 + $0x38] sm:$0xff]
        %v1325 = vld [vmem:[#allocation7 + $0x40] sm:$0xff]
        %v1326 = vld [vmem:[#allocation7 + $0x48] sm:$0xff]
        %v1327 = vld [vmem:[#allocation7 + $0x50] sm:$0xff]
        %v1328 = vld [vmem:[#allocation7 + $0x58] sm:$0xff]
        %v1329 = vld [vmem:[#allocation7 + $0x60] sm:$0xff]
        %v1330 = vld [vmem:[#allocation7 + $0x68] sm:$0xff]
        %v1331 = vld [vmem:[#allocation7 + $0x70] sm:$0xff]
        %v1332 = vld [vmem:[#allocation7 + $0x78] sm:$0xff]
        %1341 = vrot.lane.b32.xlu0 %v1293, 96
        %v1342 = vpop.permute.xlu0 %1341
        %1343 = vrot.lane.b32.xlu0 %v1294, 96
        %v1344 = vpop.permute.xlu0 %1343
        %1345 = vrot.lane.b32.xlu0 %v1295, 96
        %v1346 = vpop.permute.xlu0 %1345
        %1347 = vrot.lane.b32.xlu0 %v1296, 96
        %v1348 = vpop.permute.xlu0 %1347
        %1349 = vrot.lane.b32.xlu0 %v1297, 96
        %v1350 = vpop.permute.xlu0 %1349
        %1351 = vrot.lane.b32.xlu0 %v1298, 96
        %v1352 = vpop.permute.xlu0 %1351
        %1353 = vrot.lane.b32.xlu0 %v1299, 96
        %v1354 = vpop.permute.xlu0 %1353
        %1355 = vrot.lane.b32.xlu0 %v1300, 96
        %v1356 = vpop.permute.xlu0 %1355
        %1365 = vrot.lane.b32.xlu0 %v1301, 96
        %v1366 = vpop.permute.xlu0 %1365
        %1367 = vrot.lane.b32.xlu0 %v1302, 96
        %v1368 = vpop.permute.xlu0 %1367
        %1369 = vrot.lane.b32.xlu0 %v1303, 96
        %v1370 = vpop.permute.xlu0 %1369
        %1371 = vrot.lane.b32.xlu0 %v1304, 96
        %v1372 = vpop.permute.xlu0 %1371
        %1373 = vrot.lane.b32.xlu0 %v1305, 96
        %v1374 = vpop.permute.xlu0 %1373
        %1375 = vrot.lane.b32.xlu0 %v1306, 96
        %v1376 = vpop.permute.xlu0 %1375
        %1377 = vrot.lane.b32.xlu0 %v1307, 96
        %v1378 = vpop.permute.xlu0 %1377
        %1379 = vrot.lane.b32.xlu0 %v1308, 96
        %v1380 = vpop.permute.xlu0 %1379
        %v1382 = vsel %vm882, %v1342, 0
        %v1385 = vsel %vm882, %v1344, 0
        %v1388 = vsel %vm882, %v1346, 0
        %v1391 = vsel %vm882, %v1348, 0
        %v1394 = vsel %vm882, %v1350, 0
        %v1397 = vsel %vm882, %v1352, 0
        %v1400 = vsel %vm882, %v1354, 0
        %v1403 = vsel %vm882, %v1356, 0
        %v1406 = vsel %vm882, %v1366, 0
        %v1409 = vsel %vm882, %v1368, 0
        %v1412 = vsel %vm882, %v1370, 0
        %v1415 = vsel %vm882, %v1372, 0
        %v1418 = vsel %vm882, %v1374, 0
        %v1421 = vsel %vm882, %v1376, 0
        %v1424 = vsel %vm882, %v1378, 0
        %v1427 = vsel %vm882, %v1380, 0
        %1429 = vmatprep.subr.bf16.mxu0 0
        %1430 = vmatpush1.bf16.xpose.msra.mxu0 %v1406
        %1431 = vmatprep.subr.bf16.mxu0 0
        %1432 = vmatpush1.bf16.xpose.msra.mxu0 %v1409
        %1433 = vmatprep.subr.bf16.mxu0 0
        %1434 = vmatpush1.bf16.xpose.msra.mxu0 %v1412
        %1435 = vmatprep.subr.bf16.mxu0 0
        %1436 = vmatpush1.bf16.xpose.msra.mxu0 %v1415
        %1437 = vmatprep.subr.bf16.mxu0 0
        %1438 = vmatpush1.bf16.xpose.msra.mxu0 %v1418
        %1439 = vmatprep.subr.bf16.mxu0 0
        %1440 = vmatpush1.bf16.xpose.msra.mxu0 %v1421
        %1441 = vmatprep.subr.bf16.mxu0 0
        %1442 = vmatpush1.bf16.xpose.msra.mxu0 %v1424
        %1443 = vmatprep.subr.bf16.mxu0 0
        %1444 = vmatpush1.bf16.xpose.msra.mxu0 %v1427
        %1445 = vmatprep.subr.bf16.mxu0 0
        %1446 = vmatpush1.bf16.xpose.msra.mxu0 0
        %1447 = vmatprep.subr.bf16.mxu0 0
        %1448 = vmatpush1.bf16.xpose.msra.mxu0 0
        %1449 = vmatprep.subr.bf16.mxu0 0
        %1450 = vmatpush1.bf16.xpose.msra.mxu0 0
        %1451 = vmatprep.subr.bf16.mxu0 0
        %1452 = vmatpush1.bf16.xpose.msra.mxu0 0
        %1453 = vmatprep.subr.bf16.mxu0 0
        %1454 = vmatpush1.bf16.xpose.msra.mxu0 0
        %1455 = vmatprep.subr.bf16.mxu0 0
        %1456 = vmatpush1.bf16.xpose.msra.mxu0 0
        %1457 = vmatprep.subr.bf16.mxu0 0
        %1458 = vmatpush1.bf16.xpose.msra.mxu0 0
        %1459 = vmatprep.subr.bf16.mxu0 0
        %1460 = vmatpush1.bf16.xpose.msra.mxu0 0
        %1461 = vmatprep.mubr.bf16.mxu0 0
        %1462 = vmatmul.mubr.bf16.gmra.mrb[0].mxu0 %v1382
        %v1463 = vpop.f32.mrb[0].mxu0
        %v1464 = vadd.f32 %v1317, %v1463
        %v1465 = vpop.f32.mrb[0].mxu0
        %v1466 = vpop.f32.mrb[0].mxu0
        %v1467 = vadd.f32 %v1318, %v1466
        %v1468 = vpop.f32.mrb[0].mxu0
        %1469 = vmatprep.mubr.bf16.mxu0 0
        %1470 = vmatmul.mubr.bf16.gmra.mrb[0].mxu0 %v1385
        %v1471 = vpop.f32.mrb[0].mxu0
        %v1472 = vadd.f32 %v1319, %v1471
        %v1473 = vpop.f32.mrb[0].mxu0
        %v1474 = vpop.f32.mrb[0].mxu0
        %v1475 = vadd.f32 %v1320, %v1474
        %v1476 = vpop.f32.mrb[0].mxu0
        %1477 = vmatprep.mubr.bf16.mxu0 0
        %1478 = vmatmul.mubr.bf16.gmra.mrb[0].mxu0 %v1388
        %v1479 = vpop.f32.mrb[0].mxu0
        %v1480 = vadd.f32 %v1321, %v1479
        %v1481 = vpop.f32.mrb[0].mxu0
        %v1482 = vpop.f32.mrb[0].mxu0
        %v1483 = vadd.f32 %v1322, %v1482
        %v1484 = vpop.f32.mrb[0].mxu0
        %1485 = vmatprep.mubr.bf16.mxu0 0
        %1486 = vmatmul.mubr.bf16.gmra.mrb[0].mxu0 %v1391
        %v1487 = vpop.f32.mrb[0].mxu0
        %v1488 = vadd.f32 %v1323, %v1487
        %v1489 = vpop.f32.mrb[0].mxu0
        %v1490 = vpop.f32.mrb[0].mxu0
        %v1491 = vadd.f32 %v1324, %v1490
        %v1492 = vpop.f32.mrb[0].mxu0
        %1493 = vmatprep.mubr.bf16.mxu0 0
        %1494 = vmatmul.mubr.bf16.gmra.mrb[0].mxu0 %v1394
        %v1495 = vpop.f32.mrb[0].mxu0
        %v1496 = vadd.f32 %v1325, %v1495
        %v1497 = vpop.f32.mrb[0].mxu0
        %v1498 = vpop.f32.mrb[0].mxu0
        %v1499 = vadd.f32 %v1326, %v1498
        %v1500 = vpop.f32.mrb[0].mxu0
        %1501 = vmatprep.mubr.bf16.mxu0 0
        %1502 = vmatmul.mubr.bf16.gmra.mrb[0].mxu0 %v1397
        %v1503 = vpop.f32.mrb[0].mxu0
        %v1504 = vadd.f32 %v1327, %v1503
        %v1505 = vpop.f32.mrb[0].mxu0
        %v1506 = vpop.f32.mrb[0].mxu0
        %v1507 = vadd.f32 %v1328, %v1506
        %v1508 = vpop.f32.mrb[0].mxu0
        %1509 = vmatprep.mubr.bf16.mxu0 0
        %1510 = vmatmul.mubr.bf16.gmra.mrb[0].mxu0 %v1400
        %v1511 = vpop.f32.mrb[0].mxu0
        %v1512 = vadd.f32 %v1329, %v1511
        %v1513 = vpop.f32.mrb[0].mxu0
        %v1514 = vpop.f32.mrb[0].mxu0
        %v1515 = vadd.f32 %v1330, %v1514
        %v1516 = vpop.f32.mrb[0].mxu0
        %1517 = vmatprep.mubr.bf16.mxu0 0
        %1518 = vmatmul.mubr.bf16.gmra.mrb[0].mxu0 %v1403
        %v1519 = vpop.f32.mrb[0].mxu0
        %v1520 = vadd.f32 %v1331, %v1519
        %v1521 = vpop.f32.mrb[0].mxu0
        %v1522 = vpop.f32.mrb[0].mxu0
        %v1523 = vadd.f32 %v1332, %v1522
        %v1524 = vpop.f32.mrb[0].mxu0
        %1525 = vdwg.mxu0
        %1526 = vmax.xlane.f32.xlu0 %v1464
        %v1527 = vpop.xlane.xlu0 %1526
        %1528 = vmax.xlane.f32.xlu0 %v1467
        %v1529 = vpop.xlane.xlu0 %1528
        %1530 = vmax.xlane.f32.xlu0 %v1472
        %v1531 = vpop.xlane.xlu0 %1530
        %1532 = vmax.xlane.f32.xlu0 %v1475
        %v1533 = vpop.xlane.xlu0 %1532
        %1534 = vmax.xlane.f32.xlu0 %v1480
        %v1535 = vpop.xlane.xlu0 %1534
        %1536 = vmax.xlane.f32.xlu0 %v1483
        %v1537 = vpop.xlane.xlu0 %1536
        %1538 = vmax.xlane.f32.xlu0 %v1488
        %v1539 = vpop.xlane.xlu0 %1538
        %1540 = vmax.xlane.f32.xlu0 %v1491
        %v1541 = vpop.xlane.xlu0 %1540
        %1542 = vmax.xlane.f32.xlu0 %v1496
        %v1543 = vpop.xlane.xlu0 %1542
        %1544 = vmax.xlane.f32.xlu0 %v1499
        %v1545 = vpop.xlane.xlu0 %1544
        %1546 = vmax.xlane.f32.xlu0 %v1504
        %v1547 = vpop.xlane.xlu0 %1546
        %1548 = vmax.xlane.f32.xlu0 %v1507
        %v1549 = vpop.xlane.xlu0 %1548
        %1550 = vmax.xlane.f32.xlu0 %v1512
        %v1551 = vpop.xlane.xlu0 %1550
        %1552 = vmax.xlane.f32.xlu0 %v1515
        %v1553 = vpop.xlane.xlu0 %1552
        %1554 = vmax.xlane.f32.xlu0 %v1520
        %v1555 = vpop.xlane.xlu0 %1554
        %1556 = vmax.xlane.f32.xlu0 %v1523
        %v1557 = vpop.xlane.xlu0 %1556
        %v1558 = vsub.f32 %v1464, %v1527
        %v1559 = vsub.f32 %v1467, %v1529
        %v1560 = vsub.f32 %v1472, %v1531
        %v1561 = vsub.f32 %v1475, %v1533
        %v1562 = vsub.f32 %v1480, %v1535
        %v1563 = vsub.f32 %v1483, %v1537
        %v1564 = vsub.f32 %v1488, %v1539
        %v1565 = vsub.f32 %v1491, %v1541
        %v1566 = vsub.f32 %v1496, %v1543
        %v1567 = vsub.f32 %v1499, %v1545
        %v1568 = vsub.f32 %v1504, %v1547
        %v1569 = vsub.f32 %v1507, %v1549
        %v1570 = vsub.f32 %v1512, %v1551
        %v1571 = vsub.f32 %v1515, %v1553
        %v1572 = vsub.f32 %v1520, %v1555
        %v1573 = vsub.f32 %v1523, %v1557
        %v1574 = vmul.f32 %v1558, 1.442695
        %v1575 = vpow.pop %v1574
        %v1576 = vmul.f32 %v1559, 1.442695
        %v1577 = vpow.pop %v1576
        %v1578 = vmul.f32 %v1560, 1.442695
        %v1579 = vpow.pop %v1578
        %v1580 = vmul.f32 %v1561, 1.442695
        %v1581 = vpow.pop %v1580
        %v1582 = vmul.f32 %v1562, 1.442695
        %v1583 = vpow.pop %v1582
        %v1584 = vmul.f32 %v1563, 1.442695
        %v1585 = vpow.pop %v1584
        %v1586 = vmul.f32 %v1564, 1.442695
        %v1587 = vpow.pop %v1586
        %v1588 = vmul.f32 %v1565, 1.442695
        %v1589 = vpow.pop %v1588
        %v1590 = vmul.f32 %v1566, 1.442695
        %v1591 = vpow.pop %v1590
        %v1592 = vmul.f32 %v1567, 1.442695
        %v1593 = vpow.pop %v1592
        %v1594 = vmul.f32 %v1568, 1.442695
        %v1595 = vpow.pop %v1594
        %v1596 = vmul.f32 %v1569, 1.442695
        %v1597 = vpow.pop %v1596
        %v1598 = vmul.f32 %v1570, 1.442695
        %v1599 = vpow.pop %v1598
        %v1600 = vmul.f32 %v1571, 1.442695
        %v1601 = vpow.pop %v1600
        %v1602 = vmul.f32 %v1572, 1.442695
        %v1603 = vpow.pop %v1602
        %v1604 = vmul.f32 %v1573, 1.442695
        %v1605 = vpow.pop %v1604
        %1606 = vadd.xlane.f32.xlu0 %v1575
        %v1607 = vpop.xlane.xlu0 %1606
        %1608 = vadd.xlane.f32.xlu0 %v1577
        %v1609 = vpop.xlane.xlu0 %1608
        %1610 = vadd.xlane.f32.xlu0 %v1579
        %v1611 = vpop.xlane.xlu0 %1610
        %1612 = vadd.xlane.f32.xlu0 %v1581
        %v1613 = vpop.xlane.xlu0 %1612
        %1614 = vadd.xlane.f32.xlu0 %v1583
        %v1615 = vpop.xlane.xlu0 %1614
        %1616 = vadd.xlane.f32.xlu0 %v1585
        %v1617 = vpop.xlane.xlu0 %1616
        %1618 = vadd.xlane.f32.xlu0 %v1587
        %v1619 = vpop.xlane.xlu0 %1618
        %1620 = vadd.xlane.f32.xlu0 %v1589
        %v1621 = vpop.xlane.xlu0 %1620
        %1622 = vadd.xlane.f32.xlu0 %v1591
        %v1623 = vpop.xlane.xlu0 %1622
        %1624 = vadd.xlane.f32.xlu0 %v1593
        %v1625 = vpop.xlane.xlu0 %1624
        %1626 = vadd.xlane.f32.xlu0 %v1595
        %v1627 = vpop.xlane.xlu0 %1626
        %1628 = vadd.xlane.f32.xlu0 %v1597
        %v1629 = vpop.xlane.xlu0 %1628
        %1630 = vadd.xlane.f32.xlu0 %v1599
        %v1631 = vpop.xlane.xlu0 %1630
        %1632 = vadd.xlane.f32.xlu0 %v1601
        %v1633 = vpop.xlane.xlu0 %1632
        %1634 = vadd.xlane.f32.xlu0 %v1603
        %v1635 = vpop.xlane.xlu0 %1634
        %1636 = vadd.xlane.f32.xlu0 %v1605
        %v1637 = vpop.xlane.xlu0 %1636
        %v1638 = vpack.c.bf16 %v1577, %v1575
        %v1639 = vpack.c.bf16 %v1581, %v1579
        %v1640 = vpack.c.bf16 %v1585, %v1583
        %v1641 = vpack.c.bf16 %v1589, %v1587
        %v1642 = vpack.c.bf16 %v1593, %v1591
        %v1643 = vpack.c.bf16 %v1597, %v1595
        %v1644 = vpack.c.bf16 %v1601, %v1599
        %v1645 = vpack.c.bf16 %v1605, %v1603
        %1654 = vrot.lane.b32.xlu0 %v1309, 96
        %v1655 = vpop.permute.xlu0 %1654
        %1656 = vrot.lane.b32.xlu0 %v1310, 96
        %v1657 = vpop.permute.xlu0 %1656
        %1658 = vrot.lane.b32.xlu0 %v1311, 96
        %v1659 = vpop.permute.xlu0 %1658
        %1660 = vrot.lane.b32.xlu0 %v1312, 96
        %v1661 = vpop.permute.xlu0 %1660
        %1662 = vrot.lane.b32.xlu0 %v1313, 96
        %v1663 = vpop.permute.xlu0 %1662
        %1664 = vrot.lane.b32.xlu0 %v1314, 96
        %v1665 = vpop.permute.xlu0 %1664
        %1666 = vrot.lane.b32.xlu0 %v1315, 96
        %v1667 = vpop.permute.xlu0 %1666
        %1668 = vrot.lane.b32.xlu0 %v1316, 96
        %v1669 = vpop.permute.xlu0 %1668
        %1678 = vmatprep.subr.bf16.mxu0 0
        %1679 = vmatpush1.bf16.msra.mxu0 %v1655
        %1680 = vmatprep.subr.bf16.mxu0 0
        %1681 = vmatpush1.bf16.msra.mxu0 %v1657
        %1682 = vmatprep.subr.bf16.mxu0 0
        %1683 = vmatpush1.bf16.msra.mxu0 %v1659
        %1684 = vmatprep.subr.bf16.mxu0 0
        %1685 = vmatpush1.bf16.msra.mxu0 %v1661
        %1686 = vmatprep.subr.bf16.mxu0 0
        %1687 = vmatpush1.bf16.msra.mxu0 %v1663
        %1688 = vmatprep.subr.bf16.mxu0 0
        %1689 = vmatpush1.bf16.msra.mxu0 %v1665
        %1690 = vmatprep.subr.bf16.mxu0 0
        %1691 = vmatpush1.bf16.msra.mxu0 %v1667
        %1692 = vmatprep.subr.bf16.mxu0 0
        %1693 = vmatpush1.bf16.msra.mxu0 %v1669
        %1694 = vmatprep.subr.bf16.mxu0 0
        %1695 = vmatpush1.bf16.msra.mxu0 0
        %1696 = vmatprep.subr.bf16.mxu0 0
        %1697 = vmatpush1.bf16.msra.mxu0 0
        %1698 = vmatprep.subr.bf16.mxu0 0
        %1699 = vmatpush1.bf16.msra.mxu0 0
        %1700 = vmatprep.subr.bf16.mxu0 0
        %1701 = vmatpush1.bf16.msra.mxu0 0
        %1702 = vmatprep.subr.bf16.mxu0 0
        %1703 = vmatpush1.bf16.msra.mxu0 0
        %1704 = vmatprep.subr.bf16.mxu0 0
        %1705 = vmatpush1.bf16.msra.mxu0 0
        %1706 = vmatprep.subr.bf16.mxu0 0
        %1707 = vmatpush1.bf16.msra.mxu0 0
        %1708 = vmatprep.subr.bf16.mxu0 0
        %1709 = vmatpush1.bf16.msra.mxu0 0
        %1710 = vmatprep.mubr.bf16.mxu0 0
        %1711 = vmatmul.mubr.bf16.gmra.mrb[0].mxu0 %v1638
        %v1712 = vpop.f32.mrb[0].mxu0
        %v1713 = vadd.f32 0.0, %v1712
        %v1714 = vpop.f32.mrb[0].mxu0
        %v1715 = vpop.f32.mrb[0].mxu0
        %v1716 = vadd.f32 0.0, %v1715
        %v1717 = vpop.f32.mrb[0].mxu0
        %1718 = vmatprep.mubr.bf16.mxu0 0
        %1719 = vmatmul.mubr.bf16.gmra.mrb[0].mxu0 %v1639
        %v1720 = vpop.f32.mrb[0].mxu0
        %v1721 = vadd.f32 0.0, %v1720
        %v1722 = vpop.f32.mrb[0].mxu0
        %v1723 = vpop.f32.mrb[0].mxu0
        %v1724 = vadd.f32 0.0, %v1723
        %v1725 = vpop.f32.mrb[0].mxu0
        %1726 = vmatprep.mubr.bf16.mxu0 0
        %1727 = vmatmul.mubr.bf16.gmra.mrb[0].mxu0 %v1640
        %v1728 = vpop.f32.mrb[0].mxu0
        %v1729 = vadd.f32 0.0, %v1728
        %v1730 = vpop.f32.mrb[0].mxu0
        %v1731 = vpop.f32.mrb[0].mxu0
        %v1732 = vadd.f32 0.0, %v1731
        %v1733 = vpop.f32.mrb[0].mxu0
        %1734 = vmatprep.mubr.bf16.mxu0 0
        %1735 = vmatmul.mubr.bf16.gmra.mrb[0].mxu0 %v1641
        %v1736 = vpop.f32.mrb[0].mxu0
        %v1737 = vadd.f32 0.0, %v1736
        %v1738 = vpop.f32.mrb[0].mxu0
        %v1739 = vpop.f32.mrb[0].mxu0
        %v1740 = vadd.f32 0.0, %v1739
        %v1741 = vpop.f32.mrb[0].mxu0
        %1742 = vmatprep.mubr.bf16.mxu0 0
        %1743 = vmatmul.mubr.bf16.gmra.mrb[0].mxu0 %v1642
        %v1744 = vpop.f32.mrb[0].mxu0
        %v1745 = vadd.f32 0.0, %v1744
        %v1746 = vpop.f32.mrb[0].mxu0
        %v1747 = vpop.f32.mrb[0].mxu0
        %v1748 = vadd.f32 0.0, %v1747
        %v1749 = vpop.f32.mrb[0].mxu0
        %1750 = vmatprep.mubr.bf16.mxu0 0
        %1751 = vmatmul.mubr.bf16.gmra.mrb[0].mxu0 %v1643
        %v1752 = vpop.f32.mrb[0].mxu0
        %v1753 = vadd.f32 0.0, %v1752
        %v1754 = vpop.f32.mrb[0].mxu0
        %v1755 = vpop.f32.mrb[0].mxu0
        %v1756 = vadd.f32 0.0, %v1755
        %v1757 = vpop.f32.mrb[0].mxu0
        %1758 = vmatprep.mubr.bf16.mxu0 0
        %1759 = vmatmul.mubr.bf16.gmra.mrb[0].mxu0 %v1644
        %v1760 = vpop.f32.mrb[0].mxu0
        %v1761 = vadd.f32 0.0, %v1760
        %v1762 = vpop.f32.mrb[0].mxu0
        %v1763 = vpop.f32.mrb[0].mxu0
        %v1764 = vadd.f32 0.0, %v1763
        %v1765 = vpop.f32.mrb[0].mxu0
        %1766 = vmatprep.mubr.bf16.mxu0 0
        %1767 = vmatmul.mubr.bf16.gmra.mrb[0].mxu0 %v1645
        %v1768 = vpop.f32.mrb[0].mxu0
        %v1769 = vadd.f32 0.0, %v1768
        %v1770 = vpop.f32.mrb[0].mxu0
        %v1771 = vpop.f32.mrb[0].mxu0
        %v1772 = vadd.f32 0.0, %v1771
        %v1773 = vpop.f32.mrb[0].mxu0
        %1774 = vdwg.mxu0
        %v1775 = vrcp.pop %v1607
        %v1776 = vrcp.pop %v1609
        %v1777 = vrcp.pop %v1611
        %v1778 = vrcp.pop %v1613
        %v1779 = vrcp.pop %v1615
        %v1780 = vrcp.pop %v1617
        %v1781 = vrcp.pop %v1619
        %v1782 = vrcp.pop %v1621
        %v1783 = vrcp.pop %v1623
        %v1784 = vrcp.pop %v1625
        %v1785 = vrcp.pop %v1627
        %v1786 = vrcp.pop %v1629
        %v1787 = vrcp.pop %v1631
        %v1788 = vrcp.pop %v1633
        %v1789 = vrcp.pop %v1635
        %v1790 = vrcp.pop %v1637
        %v1791 = vmul.f32 %v1713, %v1775
        %v1792 = vmul.f32 %v1716, %v1776
        %v1793 = vmul.f32 %v1721, %v1777
        %v1794 = vmul.f32 %v1724, %v1778
        %v1795 = vmul.f32 %v1729, %v1779
        %v1796 = vmul.f32 %v1732, %v1780
        %v1797 = vmul.f32 %v1737, %v1781
        %v1798 = vmul.f32 %v1740, %v1782
        %v1799 = vmul.f32 %v1745, %v1783
        %v1800 = vmul.f32 %v1748, %v1784
        %v1801 = vmul.f32 %v1753, %v1785
        %v1802 = vmul.f32 %v1756, %v1786
        %v1803 = vmul.f32 %v1761, %v1787
        %v1804 = vmul.f32 %v1764, %v1788
        %v1805 = vmul.f32 %v1769, %v1789
        %v1806 = vmul.f32 %v1772, %v1790
        %v1807 = vpack.c.bf16 %v1792, %v1791
        %v1808 = vpack.c.bf16 %v1794, %v1793
        %v1809 = vpack.c.bf16 %v1796, %v1795
        %v1810 = vpack.c.bf16 %v1798, %v1797
        %v1811 = vpack.c.bf16 %v1800, %v1799
        %v1812 = vpack.c.bf16 %v1802, %v1801
        %v1813 = vpack.c.bf16 %v1804, %v1803
        %v1814 = vpack.c.bf16 %v1806, %v1805
        %1823 = vrot.lane.b32.xlu0 %v1807, 32
        %v1824 = vpop.permute.xlu0 %1823
        %1825 = vrot.lane.b32.xlu0 %v1808, 32
        %v1826 = vpop.permute.xlu0 %1825
        %1827 = vrot.lane.b32.xlu0 %v1809, 32
        %v1828 = vpop.permute.xlu0 %1827
        %1829 = vrot.lane.b32.xlu0 %v1810, 32
        %v1830 = vpop.permute.xlu0 %1829
        %1831 = vrot.lane.b32.xlu0 %v1811, 32
        %v1832 = vpop.permute.xlu0 %1831
        %1833 = vrot.lane.b32.xlu0 %v1812, 32
        %v1834 = vpop.permute.xlu0 %1833
        %1835 = vrot.lane.b32.xlu0 %v1813, 32
        %v1836 = vpop.permute.xlu0 %1835
        %1837 = vrot.lane.b32.xlu0 %v1814, 32
        %v1838 = vpop.permute.xlu0 %1837
        %vm1847 = vcmask 523520
        %1848 = vst.msk [vmem:[#allocation3] sm:$0xff] %vm1847, %v1824
        %1849 = vst.msk [vmem:[#allocation3 + $0x8] sm:$0xff] %vm1847, %v1826
        %1850 = vst.msk [vmem:[#allocation3 + $0x10] sm:$0xff] %vm1847, %v1828
        %1851 = vst.msk [vmem:[#allocation3 + $0x18] sm:$0xff] %vm1847, %v1830
        %1852 = vst.msk [vmem:[#allocation3 + $0x20] sm:$0xff] %vm1847, %v1832
        %1853 = vst.msk [vmem:[#allocation3 + $0x28] sm:$0xff] %vm1847, %v1834
        %1854 = vst.msk [vmem:[#allocation3 + $0x30] sm:$0xff] %vm1847, %v1836
        %1855 = vst.msk [vmem:[#allocation3 + $0x38] sm:$0xff] %vm1847, %v1838
        %v1856 = vld [vmem:[#allocation2] sm:$0xff]
        %v1857 = vld [vmem:[#allocation2 + $0x18] sm:$0xff]
        %v1858 = vld [vmem:[#allocation2 + $0x30] sm:$0xff]
        %v1859 = vld [vmem:[#allocation2 + $0x48] sm:$0xff]
        %v1860 = vld [vmem:[#allocation2 + $0x60] sm:$0xff]
        %v1861 = vld [vmem:[#allocation2 + $0x78] sm:$0xff]
        %v1862 = vld [vmem:[#allocation2 + $0x90] sm:$0xff]
        %v1863 = vld [vmem:[#allocation2 + $0xa8] sm:$0xff]
        %v1864 = vld [vmem:[#allocation2 + $0x8] sm:$0xff]
        %v1865 = vld [vmem:[#allocation2 + $0x20] sm:$0xff]
        %v1866 = vld [vmem:[#allocation2 + $0x38] sm:$0xff]
        %v1867 = vld [vmem:[#allocation2 + $0x50] sm:$0xff]
        %v1868 = vld [vmem:[#allocation2 + $0x68] sm:$0xff]
        %v1869 = vld [vmem:[#allocation2 + $0x80] sm:$0xff]
        %v1870 = vld [vmem:[#allocation2 + $0x98] sm:$0xff]
        %v1871 = vld [vmem:[#allocation2 + $0xb0] sm:$0xff]
        %v1872 = vld [vmem:[#allocation2 + $0x10] sm:$0xff]
        %v1873 = vld [vmem:[#allocation2 + $0x28] sm:$0xff]
        %v1874 = vld [vmem:[#allocation2 + $0x40] sm:$0xff]
        %v1875 = vld [vmem:[#allocation2 + $0x58] sm:$0xff]
        %v1876 = vld [vmem:[#allocation2 + $0x70] sm:$0xff]
        %v1877 = vld [vmem:[#allocation2 + $0x88] sm:$0xff]
        %v1878 = vld [vmem:[#allocation2 + $0xa0] sm:$0xff]
        %v1879 = vld [vmem:[#allocation2 + $0xb8] sm:$0xff]
        %v1880 = vld [vmem:[#allocation7] sm:$0xff]
        %v1881 = vld [vmem:[#allocation7 + $0x8] sm:$0xff]
        %v1882 = vld [vmem:[#allocation7 + $0x10] sm:$0xff]
        %v1883 = vld [vmem:[#allocation7 + $0x18] sm:$0xff]
        %v1884 = vld [vmem:[#allocation7 + $0x20] sm:$0xff]
        %v1885 = vld [vmem:[#allocation7 + $0x28] sm:$0xff]
        %v1886 = vld [vmem:[#allocation7 + $0x30] sm:$0xff]
        %v1887 = vld [vmem:[#allocation7 + $0x38] sm:$0xff]
        %v1888 = vld [vmem:[#allocation7 + $0x40] sm:$0xff]
        %v1889 = vld [vmem:[#allocation7 + $0x48] sm:$0xff]
        %v1890 = vld [vmem:[#allocation7 + $0x50] sm:$0xff]
        %v1891 = vld [vmem:[#allocation7 + $0x58] sm:$0xff]
        %v1892 = vld [vmem:[#allocation7 + $0x60] sm:$0xff]
        %v1893 = vld [vmem:[#allocation7 + $0x68] sm:$0xff]
        %v1894 = vld [vmem:[#allocation7 + $0x70] sm:$0xff]
        %v1895 = vld [vmem:[#allocation7 + $0x78] sm:$0xff]
        %1904 = vrot.lane.b32.xlu0 %v1856, 64
        %v1905 = vpop.permute.xlu0 %1904
        %1906 = vrot.lane.b32.xlu0 %v1857, 64
        %v1907 = vpop.permute.xlu0 %1906
        %1908 = vrot.lane.b32.xlu0 %v1858, 64
        %v1909 = vpop.permute.xlu0 %1908
        %1910 = vrot.lane.b32.xlu0 %v1859, 64
        %v1911 = vpop.permute.xlu0 %1910
        %1912 = vrot.lane.b32.xlu0 %v1860, 64
        %v1913 = vpop.permute.xlu0 %1912
        %1914 = vrot.lane.b32.xlu0 %v1861, 64
        %v1915 = vpop.permute.xlu0 %1914
        %1916 = vrot.lane.b32.xlu0 %v1862, 64
        %v1917 = vpop.permute.xlu0 %1916
        %1918 = vrot.lane.b32.xlu0 %v1863, 64
        %v1919 = vpop.permute.xlu0 %1918
        %1928 = vrot.lane.b32.xlu0 %v1864, 64
        %v1929 = vpop.permute.xlu0 %1928
        %1930 = vrot.lane.b32.xlu0 %v1865, 64
        %v1931 = vpop.permute.xlu0 %1930
        %1932 = vrot.lane.b32.xlu0 %v1866, 64
        %v1933 = vpop.permute.xlu0 %1932
        %1934 = vrot.lane.b32.xlu0 %v1867, 64
        %v1935 = vpop.permute.xlu0 %1934
        %1936 = vrot.lane.b32.xlu0 %v1868, 64
        %v1937 = vpop.permute.xlu0 %1936
        %1938 = vrot.lane.b32.xlu0 %v1869, 64
        %v1939 = vpop.permute.xlu0 %1938
        %1940 = vrot.lane.b32.xlu0 %v1870, 64
        %v1941 = vpop.permute.xlu0 %1940
        %1942 = vrot.lane.b32.xlu0 %v1871, 64
        %v1943 = vpop.permute.xlu0 %1942
        %v1945 = vsel %vm882, %v1905, 0
        %v1948 = vsel %vm882, %v1907, 0
        %v1951 = vsel %vm882, %v1909, 0
        %v1954 = vsel %vm882, %v1911, 0
        %v1957 = vsel %vm882, %v1913, 0
        %v1960 = vsel %vm882, %v1915, 0
        %v1963 = vsel %vm882, %v1917, 0
        %v1966 = vsel %vm882, %v1919, 0
        %v1969 = vsel %vm882, %v1929, 0
        %v1972 = vsel %vm882, %v1931, 0
        %v1975 = vsel %vm882, %v1933, 0
        %v1978 = vsel %vm882, %v1935, 0
        %v1981 = vsel %vm882, %v1937, 0
        %v1984 = vsel %vm882, %v1939, 0
        %v1987 = vsel %vm882, %v1941, 0
        %v1990 = vsel %vm882, %v1943, 0
        %1992 = vmatprep.subr.bf16.mxu0 0
        %1993 = vmatpush1.bf16.xpose.msra.mxu0 %v1969
        %1994 = vmatprep.subr.bf16.mxu0 0
        %1995 = vmatpush1.bf16.xpose.msra.mxu0 %v1972
        %1996 = vmatprep.subr.bf16.mxu0 0
        %1997 = vmatpush1.bf16.xpose.msra.mxu0 %v1975
        %1998 = vmatprep.subr.bf16.mxu0 0
        %1999 = vmatpush1.bf16.xpose.msra.mxu0 %v1978
        %2000 = vmatprep.subr.bf16.mxu0 0
        %2001 = vmatpush1.bf16.xpose.msra.mxu0 %v1981
        %2002 = vmatprep.subr.bf16.mxu0 0
        %2003 = vmatpush1.bf16.xpose.msra.mxu0 %v1984
        %2004 = vmatprep.subr.bf16.mxu0 0
        %2005 = vmatpush1.bf16.xpose.msra.mxu0 %v1987
        %2006 = vmatprep.subr.bf16.mxu0 0
        %2007 = vmatpush1.bf16.xpose.msra.mxu0 %v1990
        %2008 = vmatprep.subr.bf16.mxu0 0
        %2009 = vmatpush1.bf16.xpose.msra.mxu0 0
        %2010 = vmatprep.subr.bf16.mxu0 0
        %2011 = vmatpush1.bf16.xpose.msra.mxu0 0
        %2012 = vmatprep.subr.bf16.mxu0 0
        %2013 = vmatpush1.bf16.xpose.msra.mxu0 0
        %2014 = vmatprep.subr.bf16.mxu0 0
        %2015 = vmatpush1.bf16.xpose.msra.mxu0 0
        %2016 = vmatprep.subr.bf16.mxu0 0
        %2017 = vmatpush1.bf16.xpose.msra.mxu0 0
        %2018 = vmatprep.subr.bf16.mxu0 0
        %2019 = vmatpush1.bf16.xpose.msra.mxu0 0
        %2020 = vmatprep.subr.bf16.mxu0 0
        %2021 = vmatpush1.bf16.xpose.msra.mxu0 0
        %2022 = vmatprep.subr.bf16.mxu0 0
        %2023 = vmatpush1.bf16.xpose.msra.mxu0 0
        %2024 = vmatprep.mubr.bf16.mxu0 0
        %2025 = vmatmul.mubr.bf16.gmra.mrb[0].mxu0 %v1945
        %v2026 = vpop.f32.mrb[0].mxu0
        %v2027 = vadd.f32 %v1880, %v2026
        %v2028 = vpop.f32.mrb[0].mxu0
        %v2029 = vpop.f32.mrb[0].mxu0
        %v2030 = vadd.f32 %v1881, %v2029
        %v2031 = vpop.f32.mrb[0].mxu0
        %2032 = vmatprep.mubr.bf16.mxu0 0
        %2033 = vmatmul.mubr.bf16.gmra.mrb[0].mxu0 %v1948
        %v2034 = vpop.f32.mrb[0].mxu0
        %v2035 = vadd.f32 %v1882, %v2034
        %v2036 = vpop.f32.mrb[0].mxu0
        %v2037 = vpop.f32.mrb[0].mxu0
        %v2038 = vadd.f32 %v1883, %v2037
        %v2039 = vpop.f32.mrb[0].mxu0
        %2040 = vmatprep.mubr.bf16.mxu0 0
        %2041 = vmatmul.mubr.bf16.gmra.mrb[0].mxu0 %v1951
        %v2042 = vpop.f32.mrb[0].mxu0
        %v2043 = vadd.f32 %v1884, %v2042
        %v2044 = vpop.f32.mrb[0].mxu0
        %v2045 = vpop.f32.mrb[0].mxu0
        %v2046 = vadd.f32 %v1885, %v2045
        %v2047 = vpop.f32.mrb[0].mxu0
        %2048 = vmatprep.mubr.bf16.mxu0 0
        %2049 = vmatmul.mubr.bf16.gmra.mrb[0].mxu0 %v1954
        %v2050 = vpop.f32.mrb[0].mxu0
        %v2051 = vadd.f32 %v1886, %v2050
        %v2052 = vpop.f32.mrb[0].mxu0
        %v2053 = vpop.f32.mrb[0].mxu0
        %v2054 = vadd.f32 %v1887, %v2053
        %v2055 = vpop.f32.mrb[0].mxu0
        %2056 = vmatprep.mubr.bf16.mxu0 0
        %2057 = vmatmul.mubr.bf16.gmra.mrb[0].mxu0 %v1957
        %v2058 = vpop.f32.mrb[0].mxu0
        %v2059 = vadd.f32 %v1888, %v2058
        %v2060 = vpop.f32.mrb[0].mxu0
        %v2061 = vpop.f32.mrb[0].mxu0
        %v2062 = vadd.f32 %v1889, %v2061
        %v2063 = vpop.f32.mrb[0].mxu0
        %2064 = vmatprep.mubr.bf16.mxu0 0
        %2065 = vmatmul.mubr.bf16.gmra.mrb[0].mxu0 %v1960
        %v2066 = vpop.f32.mrb[0].mxu0
        %v2067 = vadd.f32 %v1890, %v2066
        %v2068 = vpop.f32.mrb[0].mxu0
        %v2069 = vpop.f32.mrb[0].mxu0
        %v2070 = vadd.f32 %v1891, %v2069
        %v2071 = vpop.f32.mrb[0].mxu0
        %2072 = vmatprep.mubr.bf16.mxu0 0
        %2073 = vmatmul.mubr.bf16.gmra.mrb[0].mxu0 %v1963
        %v2074 = vpop.f32.mrb[0].mxu0
        %v2075 = vadd.f32 %v1892, %v2074
        %v2076 = vpop.f32.mrb[0].mxu0
        %v2077 = vpop.f32.mrb[0].mxu0
        %v2078 = vadd.f32 %v1893, %v2077
        %v2079 = vpop.f32.mrb[0].mxu0
        %2080 = vmatprep.mubr.bf16.mxu0 0
        %2081 = vmatmul.mubr.bf16.gmra.mrb[0].mxu0 %v1966
        %v2082 = vpop.f32.mrb[0].mxu0
        %v2083 = vadd.f32 %v1894, %v2082
        %v2084 = vpop.f32.mrb[0].mxu0
        %v2085 = vpop.f32.mrb[0].mxu0
        %v2086 = vadd.f32 %v1895, %v2085
        %v2087 = vpop.f32.mrb[0].mxu0
        %2088 = vdwg.mxu0
        %2089 = vmax.xlane.f32.xlu0 %v2027
        %v2090 = vpop.xlane.xlu0 %2089
        %2091 = vmax.xlane.f32.xlu0 %v2030
        %v2092 = vpop.xlane.xlu0 %2091
        %2093 = vmax.xlane.f32.xlu0 %v2035
        %v2094 = vpop.xlane.xlu0 %2093
        %2095 = vmax.xlane.f32.xlu0 %v2038
        %v2096 = vpop.xlane.xlu0 %2095
        %2097 = vmax.xlane.f32.xlu0 %v2043
        %v2098 = vpop.xlane.xlu0 %2097
        %2099 = vmax.xlane.f32.xlu0 %v2046
        %v2100 = vpop.xlane.xlu0 %2099
        %2101 = vmax.xlane.f32.xlu0 %v2051
        %v2102 = vpop.xlane.xlu0 %2101
        %2103 = vmax.xlane.f32.xlu0 %v2054
        %v2104 = vpop.xlane.xlu0 %2103
        %2105 = vmax.xlane.f32.xlu0 %v2059
        %v2106 = vpop.xlane.xlu0 %2105
        %2107 = vmax.xlane.f32.xlu0 %v2062
        %v2108 = vpop.xlane.xlu0 %2107
        %2109 = vmax.xlane.f32.xlu0 %v2067
        %v2110 = vpop.xlane.xlu0 %2109
        %2111 = vmax.xlane.f32.xlu0 %v2070
        %v2112 = vpop.xlane.xlu0 %2111
        %2113 = vmax.xlane.f32.xlu0 %v2075
        %v2114 = vpop.xlane.xlu0 %2113
        %2115 = vmax.xlane.f32.xlu0 %v2078
        %v2116 = vpop.xlane.xlu0 %2115
        %2117 = vmax.xlane.f32.xlu0 %v2083
        %v2118 = vpop.xlane.xlu0 %2117
        %2119 = vmax.xlane.f32.xlu0 %v2086
        %v2120 = vpop.xlane.xlu0 %2119
        %v2121 = vsub.f32 %v2027, %v2090
        %v2122 = vsub.f32 %v2030, %v2092
        %v2123 = vsub.f32 %v2035, %v2094
        %v2124 = vsub.f32 %v2038, %v2096
        %v2125 = vsub.f32 %v2043, %v2098
        %v2126 = vsub.f32 %v2046, %v2100
        %v2127 = vsub.f32 %v2051, %v2102
        %v2128 = vsub.f32 %v2054, %v2104
        %v2129 = vsub.f32 %v2059, %v2106
        %v2130 = vsub.f32 %v2062, %v2108
        %v2131 = vsub.f32 %v2067, %v2110
        %v2132 = vsub.f32 %v2070, %v2112
        %v2133 = vsub.f32 %v2075, %v2114
        %v2134 = vsub.f32 %v2078, %v2116
        %v2135 = vsub.f32 %v2083, %v2118
        %v2136 = vsub.f32 %v2086, %v2120
        %v2137 = vmul.f32 %v2121, 1.442695
        %v2138 = vpow.pop %v2137
        %v2139 = vmul.f32 %v2122, 1.442695
        %v2140 = vpow.pop %v2139
        %v2141 = vmul.f32 %v2123, 1.442695
        %v2142 = vpow.pop %v2141
        %v2143 = vmul.f32 %v2124, 1.442695
        %v2144 = vpow.pop %v2143
        %v2145 = vmul.f32 %v2125, 1.442695
        %v2146 = vpow.pop %v2145
        %v2147 = vmul.f32 %v2126, 1.442695
        %v2148 = vpow.pop %v2147
        %v2149 = vmul.f32 %v2127, 1.442695
        %v2150 = vpow.pop %v2149
        %v2151 = vmul.f32 %v2128, 1.442695
        %v2152 = vpow.pop %v2151
        %v2153 = vmul.f32 %v2129, 1.442695
        %v2154 = vpow.pop %v2153
        %v2155 = vmul.f32 %v2130, 1.442695
        %v2156 = vpow.pop %v2155
        %v2157 = vmul.f32 %v2131, 1.442695
        %v2158 = vpow.pop %v2157
        %v2159 = vmul.f32 %v2132, 1.442695
        %v2160 = vpow.pop %v2159
        %v2161 = vmul.f32 %v2133, 1.442695
        %v2162 = vpow.pop %v2161
        %v2163 = vmul.f32 %v2134, 1.442695
        %v2164 = vpow.pop %v2163
        %v2165 = vmul.f32 %v2135, 1.442695
        %v2166 = vpow.pop %v2165
        %v2167 = vmul.f32 %v2136, 1.442695
        %v2168 = vpow.pop %v2167
        %2169 = vadd.xlane.f32.xlu0 %v2138
        %v2170 = vpop.xlane.xlu0 %2169
        %2171 = vadd.xlane.f32.xlu0 %v2140
        %v2172 = vpop.xlane.xlu0 %2171
        %2173 = vadd.xlane.f32.xlu0 %v2142
        %v2174 = vpop.xlane.xlu0 %2173
        %2175 = vadd.xlane.f32.xlu0 %v2144
        %v2176 = vpop.xlane.xlu0 %2175
        %2177 = vadd.xlane.f32.xlu0 %v2146
        %v2178 = vpop.xlane.xlu0 %2177
        %2179 = vadd.xlane.f32.xlu0 %v2148
        %v2180 = vpop.xlane.xlu0 %2179
        %2181 = vadd.xlane.f32.xlu0 %v2150
        %v2182 = vpop.xlane.xlu0 %2181
        %2183 = vadd.xlane.f32.xlu0 %v2152
        %v2184 = vpop.xlane.xlu0 %2183
        %2185 = vadd.xlane.f32.xlu0 %v2154
        %v2186 = vpop.xlane.xlu0 %2185
        %2187 = vadd.xlane.f32.xlu0 %v2156
        %v2188 = vpop.xlane.xlu0 %2187
        %2189 = vadd.xlane.f32.xlu0 %v2158
        %v2190 = vpop.xlane.xlu0 %2189
        %2191 = vadd.xlane.f32.xlu0 %v2160
        %v2192 = vpop.xlane.xlu0 %2191
        %2193 = vadd.xlane.f32.xlu0 %v2162
        %v2194 = vpop.xlane.xlu0 %2193
        %2195 = vadd.xlane.f32.xlu0 %v2164
        %v2196 = vpop.xlane.xlu0 %2195
        %2197 = vadd.xlane.f32.xlu0 %v2166
        %v2198 = vpop.xlane.xlu0 %2197
        %2199 = vadd.xlane.f32.xlu0 %v2168
        %v2200 = vpop.xlane.xlu0 %2199
        %v2201 = vpack.c.bf16 %v2140, %v2138
        %v2202 = vpack.c.bf16 %v2144, %v2142
        %v2203 = vpack.c.bf16 %v2148, %v2146
        %v2204 = vpack.c.bf16 %v2152, %v2150
        %v2205 = vpack.c.bf16 %v2156, %v2154
        %v2206 = vpack.c.bf16 %v2160, %v2158
        %v2207 = vpack.c.bf16 %v2164, %v2162
        %v2208 = vpack.c.bf16 %v2168, %v2166
        %2217 = vrot.lane.b32.xlu0 %v1872, 64
        %v2218 = vpop.permute.xlu0 %2217
        %2219 = vrot.lane.b32.xlu0 %v1873, 64
        %v2220 = vpop.permute.xlu0 %2219
        %2221 = vrot.lane.b32.xlu0 %v1874, 64
        %v2222 = vpop.permute.xlu0 %2221
        %2223 = vrot.lane.b32.xlu0 %v1875, 64
        %v2224 = vpop.permute.xlu0 %2223
        %2225 = vrot.lane.b32.xlu0 %v1876, 64
        %v2226 = vpop.permute.xlu0 %2225
        %2227 = vrot.lane.b32.xlu0 %v1877, 64
        %v2228 = vpop.permute.xlu0 %2227
        %2229 = vrot.lane.b32.xlu0 %v1878, 64
        %v2230 = vpop.permute.xlu0 %2229
        %2231 = vrot.lane.b32.xlu0 %v1879, 64
        %v2232 = vpop.permute.xlu0 %2231
        %2241 = vmatprep.subr.bf16.mxu0 0
        %2242 = vmatpush1.bf16.msra.mxu0 %v2218
        %2243 = vmatprep.subr.bf16.mxu0 0
        %2244 = vmatpush1.bf16.msra.mxu0 %v2220
        %2245 = vmatprep.subr.bf16.mxu0 0
        %2246 = vmatpush1.bf16.msra.mxu0 %v2222
        %2247 = vmatprep.subr.bf16.mxu0 0
        %2248 = vmatpush1.bf16.msra.mxu0 %v2224
        %2249 = vmatprep.subr.bf16.mxu0 0
        %2250 = vmatpush1.bf16.msra.mxu0 %v2226
        %2251 = vmatprep.subr.bf16.mxu0 0
        %2252 = vmatpush1.bf16.msra.mxu0 %v2228
        %2253 = vmatprep.subr.bf16.mxu0 0
        %2254 = vmatpush1.bf16.msra.mxu0 %v2230
        %2255 = vmatprep.subr.bf16.mxu0 0
        %2256 = vmatpush1.bf16.msra.mxu0 %v2232
        %2257 = vmatprep.subr.bf16.mxu0 0
        %2258 = vmatpush1.bf16.msra.mxu0 0
        %2259 = vmatprep.subr.bf16.mxu0 0
        %2260 = vmatpush1.bf16.msra.mxu0 0
        %2261 = vmatprep.subr.bf16.mxu0 0
        %2262 = vmatpush1.bf16.msra.mxu0 0
        %2263 = vmatprep.subr.bf16.mxu0 0
        %2264 = vmatpush1.bf16.msra.mxu0 0
        %2265 = vmatprep.subr.bf16.mxu0 0
        %2266 = vmatpush1.bf16.msra.mxu0 0
        %2267 = vmatprep.subr.bf16.mxu0 0
        %2268 = vmatpush1.bf16.msra.mxu0 0
        %2269 = vmatprep.subr.bf16.mxu0 0
        %2270 = vmatpush1.bf16.msra.mxu0 0
        %2271 = vmatprep.subr.bf16.mxu0 0
        %2272 = vmatpush1.bf16.msra.mxu0 0
        %2273 = vmatprep.mubr.bf16.mxu0 0
        %2274 = vmatmul.mubr.bf16.gmra.mrb[0].mxu0 %v2201
        %v2275 = vpop.f32.mrb[0].mxu0
        %v2276 = vadd.f32 0.0, %v2275
        %v2277 = vpop.f32.mrb[0].mxu0
        %v2278 = vpop.f32.mrb[0].mxu0
        %v2279 = vadd.f32 0.0, %v2278
        %v2280 = vpop.f32.mrb[0].mxu0
        %2281 = vmatprep.mubr.bf16.mxu0 0
        %2282 = vmatmul.mubr.bf16.gmra.mrb[0].mxu0 %v2202
        %v2283 = vpop.f32.mrb[0].mxu0
        %v2284 = vadd.f32 0.0, %v2283
        %v2285 = vpop.f32.mrb[0].mxu0
        %v2286 = vpop.f32.mrb[0].mxu0
        %v2287 = vadd.f32 0.0, %v2286
        %v2288 = vpop.f32.mrb[0].mxu0
        %2289 = vmatprep.mubr.bf16.mxu0 0
        %2290 = vmatmul.mubr.bf16.gmra.mrb[0].mxu0 %v2203
        %v2291 = vpop.f32.mrb[0].mxu0
        %v2292 = vadd.f32 0.0, %v2291
        %v2293 = vpop.f32.mrb[0].mxu0
        %v2294 = vpop.f32.mrb[0].mxu0
        %v2295 = vadd.f32 0.0, %v2294
        %v2296 = vpop.f32.mrb[0].mxu0
        %2297 = vmatprep.mubr.bf16.mxu0 0
        %2298 = vmatmul.mubr.bf16.gmra.mrb[0].mxu0 %v2204
        %v2299 = vpop.f32.mrb[0].mxu0
        %v2300 = vadd.f32 0.0, %v2299
        %v2301 = vpop.f32.mrb[0].mxu0
        %v2302 = vpop.f32.mrb[0].mxu0
        %v2303 = vadd.f32 0.0, %v2302
        %v2304 = vpop.f32.mrb[0].mxu0
        %2305 = vmatprep.mubr.bf16.mxu0 0
        %2306 = vmatmul.mubr.bf16.gmra.mrb[0].mxu0 %v2205
        %v2307 = vpop.f32.mrb[0].mxu0
        %v2308 = vadd.f32 0.0, %v2307
        %v2309 = vpop.f32.mrb[0].mxu0
        %v2310 = vpop.f32.mrb[0].mxu0
        %v2311 = vadd.f32 0.0, %v2310
        %v2312 = vpop.f32.mrb[0].mxu0
        %2313 = vmatprep.mubr.bf16.mxu0 0
        %2314 = vmatmul.mubr.bf16.gmra.mrb[0].mxu0 %v2206
        %v2315 = vpop.f32.mrb[0].mxu0
        %v2316 = vadd.f32 0.0, %v2315
        %v2317 = vpop.f32.mrb[0].mxu0
        %v2318 = vpop.f32.mrb[0].mxu0
        %v2319 = vadd.f32 0.0, %v2318
        %v2320 = vpop.f32.mrb[0].mxu0
        %2321 = vmatprep.mubr.bf16.mxu0 0
        %2322 = vmatmul.mubr.bf16.gmra.mrb[0].mxu0 %v2207
        %v2323 = vpop.f32.mrb[0].mxu0
        %v2324 = vadd.f32 0.0, %v2323
        %v2325 = vpop.f32.mrb[0].mxu0
        %v2326 = vpop.f32.mrb[0].mxu0
        %v2327 = vadd.f32 0.0, %v2326
        %v2328 = vpop.f32.mrb[0].mxu0
        %2329 = vmatprep.mubr.bf16.mxu0 0
        %2330 = vmatmul.mubr.bf16.gmra.mrb[0].mxu0 %v2208
        %v2331 = vpop.f32.mrb[0].mxu0
        %v2332 = vadd.f32 0.0, %v2331
        %v2333 = vpop.f32.mrb[0].mxu0
        %v2334 = vpop.f32.mrb[0].mxu0
        %v2335 = vadd.f32 0.0, %v2334
        %v2336 = vpop.f32.mrb[0].mxu0
        %2337 = vdwg.mxu0
        %v2338 = vrcp.pop %v2170
        %v2339 = vrcp.pop %v2172
        %v2340 = vrcp.pop %v2174
        %v2341 = vrcp.pop %v2176
        %v2342 = vrcp.pop %v2178
        %v2343 = vrcp.pop %v2180
        %v2344 = vrcp.pop %v2182
        %v2345 = vrcp.pop %v2184
        %v2346 = vrcp.pop %v2186
        %v2347 = vrcp.pop %v2188
        %v2348 = vrcp.pop %v2190
        %v2349 = vrcp.pop %v2192
        %v2350 = vrcp.pop %v2194
        %v2351 = vrcp.pop %v2196
        %v2352 = vrcp.pop %v2198
        %v2353 = vrcp.pop %v2200
        %v2354 = vmul.f32 %v2276, %v2338
        %v2355 = vmul.f32 %v2279, %v2339
        %v2356 = vmul.f32 %v2284, %v2340
        %v2357 = vmul.f32 %v2287, %v2341
        %v2358 = vmul.f32 %v2292, %v2342
        %v2359 = vmul.f32 %v2295, %v2343
        %v2360 = vmul.f32 %v2300, %v2344
        %v2361 = vmul.f32 %v2303, %v2345
        %v2362 = vmul.f32 %v2308, %v2346
        %v2363 = vmul.f32 %v2311, %v2347
        %v2364 = vmul.f32 %v2316, %v2348
        %v2365 = vmul.f32 %v2319, %v2349
        %v2366 = vmul.f32 %v2324, %v2350
        %v2367 = vmul.f32 %v2327, %v2351
        %v2368 = vmul.f32 %v2332, %v2352
        %v2369 = vmul.f32 %v2335, %v2353
        %v2370 = vpack.c.bf16 %v2355, %v2354
        %v2371 = vpack.c.bf16 %v2357, %v2356
        %v2372 = vpack.c.bf16 %v2359, %v2358
        %v2373 = vpack.c.bf16 %v2361, %v2360
        %v2374 = vpack.c.bf16 %v2363, %v2362
        %v2375 = vpack.c.bf16 %v2365, %v2364
        %v2376 = vpack.c.bf16 %v2367, %v2366
        %v2377 = vpack.c.bf16 %v2369, %v2368
        %2386 = vrot.lane.b32.xlu0 %v2370, 64
        %v2387 = vpop.permute.xlu0 %2386
        %2388 = vrot.lane.b32.xlu0 %v2371, 64
        %v2389 = vpop.permute.xlu0 %2388
        %2390 = vrot.lane.b32.xlu0 %v2372, 64
        %v2391 = vpop.permute.xlu0 %2390
        %2392 = vrot.lane.b32.xlu0 %v2373, 64
        %v2393 = vpop.permute.xlu0 %2392
        %2394 = vrot.lane.b32.xlu0 %v2374, 64
        %v2395 = vpop.permute.xlu0 %2394
        %2396 = vrot.lane.b32.xlu0 %v2375, 64
        %v2397 = vpop.permute.xlu0 %2396
        %2398 = vrot.lane.b32.xlu0 %v2376, 64
        %v2399 = vpop.permute.xlu0 %2398
        %2400 = vrot.lane.b32.xlu0 %v2377, 64
        %v2401 = vpop.permute.xlu0 %2400
        %vm2410 = vcmask 785920
        %2411 = vst.msk [vmem:[#allocation3] sm:$0xff] %vm2410, %v2387
        %2412 = vst.msk [vmem:[#allocation3 + $0x8] sm:$0xff] %vm2410, %v2389
        %2413 = vst.msk [vmem:[#allocation3 + $0x10] sm:$0xff] %vm2410, %v2391
        %2414 = vst.msk [vmem:[#allocation3 + $0x18] sm:$0xff] %vm2410, %v2393
        %2415 = vst.msk [vmem:[#allocation3 + $0x20] sm:$0xff] %vm2410, %v2395
        %2416 = vst.msk [vmem:[#allocation3 + $0x28] sm:$0xff] %vm2410, %v2397
        %2417 = vst.msk [vmem:[#allocation3 + $0x30] sm:$0xff] %vm2410, %v2399
        %2418 = vst.msk [vmem:[#allocation3 + $0x38] sm:$0xff] %vm2410, %v2401
        %v2419 = vld [vmem:[#allocation2] sm:$0xff]
        %v2420 = vld [vmem:[#allocation2 + $0x18] sm:$0xff]
        %v2421 = vld [vmem:[#allocation2 + $0x30] sm:$0xff]
        %v2422 = vld [vmem:[#allocation2 + $0x48] sm:$0xff]
        %v2423 = vld [vmem:[#allocation2 + $0x60] sm:$0xff]
        %v2424 = vld [vmem:[#allocation2 + $0x78] sm:$0xff]
        %v2425 = vld [vmem:[#allocation2 + $0x90] sm:$0xff]
        %v2426 = vld [vmem:[#allocation2 + $0xa8] sm:$0xff]
        %v2427 = vld [vmem:[#allocation2 + $0x8] sm:$0xff]
        %v2428 = vld [vmem:[#allocation2 + $0x20] sm:$0xff]
        %v2429 = vld [vmem:[#allocation2 + $0x38] sm:$0xff]
        %v2430 = vld [vmem:[#allocation2 + $0x50] sm:$0xff]
        %v2431 = vld [vmem:[#allocation2 + $0x68] sm:$0xff]
        %v2432 = vld [vmem:[#allocation2 + $0x80] sm:$0xff]
        %v2433 = vld [vmem:[#allocation2 + $0x98] sm:$0xff]
        %v2434 = vld [vmem:[#allocation2 + $0xb0] sm:$0xff]
        %v2435 = vld [vmem:[#allocation2 + $0x10] sm:$0xff]
        %v2436 = vld [vmem:[#allocation2 + $0x28] sm:$0xff]
        %v2437 = vld [vmem:[#allocation2 + $0x40] sm:$0xff]
        %v2438 = vld [vmem:[#allocation2 + $0x58] sm:$0xff]
        %v2439 = vld [vmem:[#allocation2 + $0x70] sm:$0xff]
        %v2440 = vld [vmem:[#allocation2 + $0x88] sm:$0xff]
        %v2441 = vld [vmem:[#allocation2 + $0xa0] sm:$0xff]
        %v2442 = vld [vmem:[#allocation2 + $0xb8] sm:$0xff]
        %v2443 = vld [vmem:[#allocation7] sm:$0xff]
        %v2444 = vld [vmem:[#allocation7 + $0x8] sm:$0xff]
        %v2445 = vld [vmem:[#allocation7 + $0x10] sm:$0xff]
        %v2446 = vld [vmem:[#allocation7 + $0x18] sm:$0xff]
        %v2447 = vld [vmem:[#allocation7 + $0x20] sm:$0xff]
        %v2448 = vld [vmem:[#allocation7 + $0x28] sm:$0xff]
        %v2449 = vld [vmem:[#allocation7 + $0x30] sm:$0xff]
        %v2450 = vld [vmem:[#allocation7 + $0x38] sm:$0xff]
        %v2451 = vld [vmem:[#allocation7 + $0x40] sm:$0xff]
        %v2452 = vld [vmem:[#allocation7 + $0x48] sm:$0xff]
        %v2453 = vld [vmem:[#allocation7 + $0x50] sm:$0xff]
        %v2454 = vld [vmem:[#allocation7 + $0x58] sm:$0xff]
        %v2455 = vld [vmem:[#allocation7 + $0x60] sm:$0xff]
        %v2456 = vld [vmem:[#allocation7 + $0x68] sm:$0xff]
        %v2457 = vld [vmem:[#allocation7 + $0x70] sm:$0xff]
        %v2458 = vld [vmem:[#allocation7 + $0x78] sm:$0xff]
        %2467 = vrot.lane.b32.xlu0 %v2419, 32
        %v2468 = vpop.permute.xlu0 %2467
        %2469 = vrot.lane.b32.xlu0 %v2420, 32
        %v2470 = vpop.permute.xlu0 %2469
        %2471 = vrot.lane.b32.xlu0 %v2421, 32
        %v2472 = vpop.permute.xlu0 %2471
        %2473 = vrot.lane.b32.xlu0 %v2422, 32
        %v2474 = vpop.permute.xlu0 %2473
        %2475 = vrot.lane.b32.xlu0 %v2423, 32
        %v2476 = vpop.permute.xlu0 %2475
        %2477 = vrot.lane.b32.xlu0 %v2424, 32
        %v2478 = vpop.permute.xlu0 %2477
        %2479 = vrot.lane.b32.xlu0 %v2425, 32
        %v2480 = vpop.permute.xlu0 %2479
        %2481 = vrot.lane.b32.xlu0 %v2426, 32
        %v2482 = vpop.permute.xlu0 %2481
        %2491 = vrot.lane.b32.xlu0 %v2427, 32
        %v2492 = vpop.permute.xlu0 %2491
        %2493 = vrot.lane.b32.xlu0 %v2428, 32
        %v2494 = vpop.permute.xlu0 %2493
        %2495 = vrot.lane.b32.xlu0 %v2429, 32
        %v2496 = vpop.permute.xlu0 %2495
        %2497 = vrot.lane.b32.xlu0 %v2430, 32
        %v2498 = vpop.permute.xlu0 %2497
        %2499 = vrot.lane.b32.xlu0 %v2431, 32
        %v2500 = vpop.permute.xlu0 %2499
        %2501 = vrot.lane.b32.xlu0 %v2432, 32
        %v2502 = vpop.permute.xlu0 %2501
        %2503 = vrot.lane.b32.xlu0 %v2433, 32
        %v2504 = vpop.permute.xlu0 %2503
        %2505 = vrot.lane.b32.xlu0 %v2434, 32
        %v2506 = vpop.permute.xlu0 %2505
        %v2508 = vsel %vm882, %v2468, 0
        %v2511 = vsel %vm882, %v2470, 0
        %v2514 = vsel %vm882, %v2472, 0
        %v2517 = vsel %vm882, %v2474, 0
        %v2520 = vsel %vm882, %v2476, 0
        %v2523 = vsel %vm882, %v2478, 0
        %v2526 = vsel %vm882, %v2480, 0
        %v2529 = vsel %vm882, %v2482, 0
        %v2532 = vsel %vm882, %v2492, 0
        %v2535 = vsel %vm882, %v2494, 0
        %v2538 = vsel %vm882, %v2496, 0
        %v2541 = vsel %vm882, %v2498, 0
        %v2544 = vsel %vm882, %v2500, 0
        %v2547 = vsel %vm882, %v2502, 0
        %v2550 = vsel %vm882, %v2504, 0
        %v2553 = vsel %vm882, %v2506, 0
        %2555 = vmatprep.subr.bf16.mxu0 0
        %2556 = vmatpush1.bf16.xpose.msra.mxu0 %v2532
        %2557 = vmatprep.subr.bf16.mxu0 0
        %2558 = vmatpush1.bf16.xpose.msra.mxu0 %v2535
        %2559 = vmatprep.subr.bf16.mxu0 0
        %2560 = vmatpush1.bf16.xpose.msra.mxu0 %v2538
        %2561 = vmatprep.subr.bf16.mxu0 0
        %2562 = vmatpush1.bf16.xpose.msra.mxu0 %v2541
        %2563 = vmatprep.subr.bf16.mxu0 0
        %2564 = vmatpush1.bf16.xpose.msra.mxu0 %v2544
        %2565 = vmatprep.subr.bf16.mxu0 0
        %2566 = vmatpush1.bf16.xpose.msra.mxu0 %v2547
        %2567 = vmatprep.subr.bf16.mxu0 0
        %2568 = vmatpush1.bf16.xpose.msra.mxu0 %v2550
        %2569 = vmatprep.subr.bf16.mxu0 0
        %2570 = vmatpush1.bf16.xpose.msra.mxu0 %v2553
        %2571 = vmatprep.subr.bf16.mxu0 0
        %2572 = vmatpush1.bf16.xpose.msra.mxu0 0
        %2573 = vmatprep.subr.bf16.mxu0 0
        %2574 = vmatpush1.bf16.xpose.msra.mxu0 0
        %2575 = vmatprep.subr.bf16.mxu0 0
        %2576 = vmatpush1.bf16.xpose.msra.mxu0 0
        %2577 = vmatprep.subr.bf16.mxu0 0
        %2578 = vmatpush1.bf16.xpose.msra.mxu0 0
        %2579 = vmatprep.subr.bf16.mxu0 0
        %2580 = vmatpush1.bf16.xpose.msra.mxu0 0
        %2581 = vmatprep.subr.bf16.mxu0 0
        %2582 = vmatpush1.bf16.xpose.msra.mxu0 0
        %2583 = vmatprep.subr.bf16.mxu0 0
        %2584 = vmatpush1.bf16.xpose.msra.mxu0 0
        %2585 = vmatprep.subr.bf16.mxu0 0
        %2586 = vmatpush1.bf16.xpose.msra.mxu0 0
        %2587 = vmatprep.mubr.bf16.mxu0 0
        %2588 = vmatmul.mubr.bf16.gmra.mrb[0].mxu0 %v2508
        %v2589 = vpop.f32.mrb[0].mxu0
        %v2590 = vadd.f32 %v2443, %v2589
        %v2591 = vpop.f32.mrb[0].mxu0
        %v2592 = vpop.f32.mrb[0].mxu0
        %v2593 = vadd.f32 %v2444, %v2592
        %v2594 = vpop.f32.mrb[0].mxu0
        %2595 = vmatprep.mubr.bf16.mxu0 0
        %2596 = vmatmul.mubr.bf16.gmra.mrb[0].mxu0 %v2511
        %v2597 = vpop.f32.mrb[0].mxu0
        %v2598 = vadd.f32 %v2445, %v2597
        %v2599 = vpop.f32.mrb[0].mxu0
        %v2600 = vpop.f32.mrb[0].mxu0
        %v2601 = vadd.f32 %v2446, %v2600
        %v2602 = vpop.f32.mrb[0].mxu0
        %2603 = vmatprep.mubr.bf16.mxu0 0
        %2604 = vmatmul.mubr.bf16.gmra.mrb[0].mxu0 %v2514
        %v2605 = vpop.f32.mrb[0].mxu0
        %v2606 = vadd.f32 %v2447, %v2605
        %v2607 = vpop.f32.mrb[0].mxu0
        %v2608 = vpop.f32.mrb[0].mxu0
        %v2609 = vadd.f32 %v2448, %v2608
        %v2610 = vpop.f32.mrb[0].mxu0
        %2611 = vmatprep.mubr.bf16.mxu0 0
        %2612 = vmatmul.mubr.bf16.gmra.mrb[0].mxu0 %v2517
        %v2613 = vpop.f32.mrb[0].mxu0
        %v2614 = vadd.f32 %v2449, %v2613
        %v2615 = vpop.f32.mrb[0].mxu0
        %v2616 = vpop.f32.mrb[0].mxu0
        %v2617 = vadd.f32 %v2450, %v2616
        %v2618 = vpop.f32.mrb[0].mxu0
        %2619 = vmatprep.mubr.bf16.mxu0 0
        %2620 = vmatmul.mubr.bf16.gmra.mrb[0].mxu0 %v2520
        %v2621 = vpop.f32.mrb[0].mxu0
        %v2622 = vadd.f32 %v2451, %v2621
        %v2623 = vpop.f32.mrb[0].mxu0
        %v2624 = vpop.f32.mrb[0].mxu0
        %v2625 = vadd.f32 %v2452, %v2624
        %v2626 = vpop.f32.mrb[0].mxu0
        %2627 = vmatprep.mubr.bf16.mxu0 0
        %2628 = vmatmul.mubr.bf16.gmra.mrb[0].mxu0 %v2523
        %v2629 = vpop.f32.mrb[0].mxu0
        %v2630 = vadd.f32 %v2453, %v2629
        %v2631 = vpop.f32.mrb[0].mxu0
        %v2632 = vpop.f32.mrb[0].mxu0
        %v2633 = vadd.f32 %v2454, %v2632
        %v2634 = vpop.f32.mrb[0].mxu0
        %2635 = vmatprep.mubr.bf16.mxu0 0
        %2636 = vmatmul.mubr.bf16.gmra.mrb[0].mxu0 %v2526
        %v2637 = vpop.f32.mrb[0].mxu0
        %v2638 = vadd.f32 %v2455, %v2637
        %v2639 = vpop.f32.mrb[0].mxu0
        %v2640 = vpop.f32.mrb[0].mxu0
        %v2641 = vadd.f32 %v2456, %v2640
        %v2642 = vpop.f32.mrb[0].mxu0
        %2643 = vmatprep.mubr.bf16.mxu0 0
        %2644 = vmatmul.mubr.bf16.gmra.mrb[0].mxu0 %v2529
        %v2645 = vpop.f32.mrb[0].mxu0
        %v2646 = vadd.f32 %v2457, %v2645
        %v2647 = vpop.f32.mrb[0].mxu0
        %v2648 = vpop.f32.mrb[0].mxu0
        %v2649 = vadd.f32 %v2458, %v2648
        %v2650 = vpop.f32.mrb[0].mxu0
        %2651 = vdwg.mxu0
        %2652 = vmax.xlane.f32.xlu0 %v2590
        %v2653 = vpop.xlane.xlu0 %2652
        %2654 = vmax.xlane.f32.xlu0 %v2593
        %v2655 = vpop.xlane.xlu0 %2654
        %2656 = vmax.xlane.f32.xlu0 %v2598
        %v2657 = vpop.xlane.xlu0 %2656
        %2658 = vmax.xlane.f32.xlu0 %v2601
        %v2659 = vpop.xlane.xlu0 %2658
        %2660 = vmax.xlane.f32.xlu0 %v2606
        %v2661 = vpop.xlane.xlu0 %2660
        %2662 = vmax.xlane.f32.xlu0 %v2609
        %v2663 = vpop.xlane.xlu0 %2662
        %2664 = vmax.xlane.f32.xlu0 %v2614
        %v2665 = vpop.xlane.xlu0 %2664
        %2666 = vmax.xlane.f32.xlu0 %v2617
        %v2667 = vpop.xlane.xlu0 %2666
        %2668 = vmax.xlane.f32.xlu0 %v2622
        %v2669 = vpop.xlane.xlu0 %2668
        %2670 = vmax.xlane.f32.xlu0 %v2625
        %v2671 = vpop.xlane.xlu0 %2670
        %2672 = vmax.xlane.f32.xlu0 %v2630
        %v2673 = vpop.xlane.xlu0 %2672
        %2674 = vmax.xlane.f32.xlu0 %v2633
        %v2675 = vpop.xlane.xlu0 %2674
        %2676 = vmax.xlane.f32.xlu0 %v2638
        %v2677 = vpop.xlane.xlu0 %2676
        %2678 = vmax.xlane.f32.xlu0 %v2641
        %v2679 = vpop.xlane.xlu0 %2678
        %2680 = vmax.xlane.f32.xlu0 %v2646
        %v2681 = vpop.xlane.xlu0 %2680
        %2682 = vmax.xlane.f32.xlu0 %v2649
        %v2683 = vpop.xlane.xlu0 %2682
        %v2684 = vsub.f32 %v2590, %v2653
        %v2685 = vsub.f32 %v2593, %v2655
        %v2686 = vsub.f32 %v2598, %v2657
        %v2687 = vsub.f32 %v2601, %v2659
        %v2688 = vsub.f32 %v2606, %v2661
        %v2689 = vsub.f32 %v2609, %v2663
        %v2690 = vsub.f32 %v2614, %v2665
        %v2691 = vsub.f32 %v2617, %v2667
        %v2692 = vsub.f32 %v2622, %v2669
        %v2693 = vsub.f32 %v2625, %v2671
        %v2694 = vsub.f32 %v2630, %v2673
        %v2695 = vsub.f32 %v2633, %v2675
        %v2696 = vsub.f32 %v2638, %v2677
        %v2697 = vsub.f32 %v2641, %v2679
        %v2698 = vsub.f32 %v2646, %v2681
        %v2699 = vsub.f32 %v2649, %v2683
        %v2700 = vmul.f32 %v2684, 1.442695
        %v2701 = vpow.pop %v2700
        %v2702 = vmul.f32 %v2685, 1.442695
        %v2703 = vpow.pop %v2702
        %v2704 = vmul.f32 %v2686, 1.442695
        %v2705 = vpow.pop %v2704
        %v2706 = vmul.f32 %v2687, 1.442695
        %v2707 = vpow.pop %v2706
        %v2708 = vmul.f32 %v2688, 1.442695
        %v2709 = vpow.pop %v2708
        %v2710 = vmul.f32 %v2689, 1.442695
        %v2711 = vpow.pop %v2710
        %v2712 = vmul.f32 %v2690, 1.442695
        %v2713 = vpow.pop %v2712
        %v2714 = vmul.f32 %v2691, 1.442695
        %v2715 = vpow.pop %v2714
        %v2716 = vmul.f32 %v2692, 1.442695
        %v2717 = vpow.pop %v2716
        %v2718 = vmul.f32 %v2693, 1.442695
        %v2719 = vpow.pop %v2718
        %v2720 = vmul.f32 %v2694, 1.442695
        %v2721 = vpow.pop %v2720
        %v2722 = vmul.f32 %v2695, 1.442695
        %v2723 = vpow.pop %v2722
        %v2724 = vmul.f32 %v2696, 1.442695
        %v2725 = vpow.pop %v2724
        %v2726 = vmul.f32 %v2697, 1.442695
        %v2727 = vpow.pop %v2726
        %v2728 = vmul.f32 %v2698, 1.442695
        %v2729 = vpow.pop %v2728
        %v2730 = vmul.f32 %v2699, 1.442695
        %v2731 = vpow.pop %v2730
        %2732 = vadd.xlane.f32.xlu0 %v2701
        %v2733 = vpop.xlane.xlu0 %2732
        %2734 = vadd.xlane.f32.xlu0 %v2703
        %v2735 = vpop.xlane.xlu0 %2734
        %2736 = vadd.xlane.f32.xlu0 %v2705
        %v2737 = vpop.xlane.xlu0 %2736
        %2738 = vadd.xlane.f32.xlu0 %v2707
        %v2739 = vpop.xlane.xlu0 %2738
        %2740 = vadd.xlane.f32.xlu0 %v2709
        %v2741 = vpop.xlane.xlu0 %2740
        %2742 = vadd.xlane.f32.xlu0 %v2711
        %v2743 = vpop.xlane.xlu0 %2742
        %2744 = vadd.xlane.f32.xlu0 %v2713
        %v2745 = vpop.xlane.xlu0 %2744
        %2746 = vadd.xlane.f32.xlu0 %v2715
        %v2747 = vpop.xlane.xlu0 %2746
        %2748 = vadd.xlane.f32.xlu0 %v2717
        %v2749 = vpop.xlane.xlu0 %2748
        %2750 = vadd.xlane.f32.xlu0 %v2719
        %v2751 = vpop.xlane.xlu0 %2750
        %2752 = vadd.xlane.f32.xlu0 %v2721
        %v2753 = vpop.xlane.xlu0 %2752
        %2754 = vadd.xlane.f32.xlu0 %v2723
        %v2755 = vpop.xlane.xlu0 %2754
        %2756 = vadd.xlane.f32.xlu0 %v2725
        %v2757 = vpop.xlane.xlu0 %2756
        %2758 = vadd.xlane.f32.xlu0 %v2727
        %v2759 = vpop.xlane.xlu0 %2758
        %2760 = vadd.xlane.f32.xlu0 %v2729
        %v2761 = vpop.xlane.xlu0 %2760
        %2762 = vadd.xlane.f32.xlu0 %v2731
        %v2763 = vpop.xlane.xlu0 %2762
        %v2764 = vpack.c.bf16 %v2703, %v2701
        %v2765 = vpack.c.bf16 %v2707, %v2705
        %v2766 = vpack.c.bf16 %v2711, %v2709
        %v2767 = vpack.c.bf16 %v2715, %v2713
        %v2768 = vpack.c.bf16 %v2719, %v2717
        %v2769 = vpack.c.bf16 %v2723, %v2721
        %v2770 = vpack.c.bf16 %v2727, %v2725
        %v2771 = vpack.c.bf16 %v2731, %v2729
        %2780 = vrot.lane.b32.xlu0 %v2435, 32
        %v2781 = vpop.permute.xlu0 %2780
        %2782 = vrot.lane.b32.xlu0 %v2436, 32
        %v2783 = vpop.permute.xlu0 %2782
        %2784 = vrot.lane.b32.xlu0 %v2437, 32
        %v2785 = vpop.permute.xlu0 %2784
        %2786 = vrot.lane.b32.xlu0 %v2438, 32
        %v2787 = vpop.permute.xlu0 %2786
        %2788 = vrot.lane.b32.xlu0 %v2439, 32
        %v2789 = vpop.permute.xlu0 %2788
        %2790 = vrot.lane.b32.xlu0 %v2440, 32
        %v2791 = vpop.permute.xlu0 %2790
        %2792 = vrot.lane.b32.xlu0 %v2441, 32
        %v2793 = vpop.permute.xlu0 %2792
        %2794 = vrot.lane.b32.xlu0 %v2442, 32
        %v2795 = vpop.permute.xlu0 %2794
        %2804 = vmatprep.subr.bf16.mxu0 0
        %2805 = vmatpush1.bf16.msra.mxu0 %v2781
        %2806 = vmatprep.subr.bf16.mxu0 0
        %2807 = vmatpush1.bf16.msra.mxu0 %v2783
        %2808 = vmatprep.subr.bf16.mxu0 0
        %2809 = vmatpush1.bf16.msra.mxu0 %v2785
        %2810 = vmatprep.subr.bf16.mxu0 0
        %2811 = vmatpush1.bf16.msra.mxu0 %v2787
        %2812 = vmatprep.subr.bf16.mxu0 0
        %2813 = vmatpush1.bf16.msra.mxu0 %v2789
        %2814 = vmatprep.subr.bf16.mxu0 0
        %2815 = vmatpush1.bf16.msra.mxu0 %v2791
        %2816 = vmatprep.subr.bf16.mxu0 0
        %2817 = vmatpush1.bf16.msra.mxu0 %v2793
        %2818 = vmatprep.subr.bf16.mxu0 0
        %2819 = vmatpush1.bf16.msra.mxu0 %v2795
        %2820 = vmatprep.subr.bf16.mxu0 0
        %2821 = vmatpush1.bf16.msra.mxu0 0
        %2822 = vmatprep.subr.bf16.mxu0 0
        %2823 = vmatpush1.bf16.msra.mxu0 0
        %2824 = vmatprep.subr.bf16.mxu0 0
        %2825 = vmatpush1.bf16.msra.mxu0 0
        %2826 = vmatprep.subr.bf16.mxu0 0
        %2827 = vmatpush1.bf16.msra.mxu0 0
        %2828 = vmatprep.subr.bf16.mxu0 0
        %2829 = vmatpush1.bf16.msra.mxu0 0
        %2830 = vmatprep.subr.bf16.mxu0 0
        %2831 = vmatpush1.bf16.msra.mxu0 0
        %2832 = vmatprep.subr.bf16.mxu0 0
        %2833 = vmatpush1.bf16.msra.mxu0 0
        %2834 = vmatprep.subr.bf16.mxu0 0
        %2835 = vmatpush1.bf16.msra.mxu0 0
        %2836 = vmatprep.mubr.bf16.mxu0 0
        %2837 = vmatmul.mubr.bf16.gmra.mrb[0].mxu0 %v2764
        %v2838 = vpop.f32.mrb[0].mxu0
        %v2839 = vadd.f32 0.0, %v2838
        %v2840 = vpop.f32.mrb[0].mxu0
        %v2841 = vpop.f32.mrb[0].mxu0
        %v2842 = vadd.f32 0.0, %v2841
        %v2843 = vpop.f32.mrb[0].mxu0
        %2844 = vmatprep.mubr.bf16.mxu0 0
        %2845 = vmatmul.mubr.bf16.gmra.mrb[0].mxu0 %v2765
        %v2846 = vpop.f32.mrb[0].mxu0
        %v2847 = vadd.f32 0.0, %v2846
        %v2848 = vpop.f32.mrb[0].mxu0
        %v2849 = vpop.f32.mrb[0].mxu0
        %v2850 = vadd.f32 0.0, %v2849
        %v2851 = vpop.f32.mrb[0].mxu0
        %2852 = vmatprep.mubr.bf16.mxu0 0
        %2853 = vmatmul.mubr.bf16.gmra.mrb[0].mxu0 %v2766
        %v2854 = vpop.f32.mrb[0].mxu0
        %v2855 = vadd.f32 0.0, %v2854
        %v2856 = vpop.f32.mrb[0].mxu0
        %v2857 = vpop.f32.mrb[0].mxu0
        %v2858 = vadd.f32 0.0, %v2857
        %v2859 = vpop.f32.mrb[0].mxu0
        %2860 = vmatprep.mubr.bf16.mxu0 0
        %2861 = vmatmul.mubr.bf16.gmra.mrb[0].mxu0 %v2767
        %v2862 = vpop.f32.mrb[0].mxu0
        %v2863 = vadd.f32 0.0, %v2862
        %v2864 = vpop.f32.mrb[0].mxu0
        %v2865 = vpop.f32.mrb[0].mxu0
        %v2866 = vadd.f32 0.0, %v2865
        %v2867 = vpop.f32.mrb[0].mxu0
        %2868 = vmatprep.mubr.bf16.mxu0 0
        %2869 = vmatmul.mubr.bf16.gmra.mrb[0].mxu0 %v2768
        %v2870 = vpop.f32.mrb[0].mxu0
        %v2871 = vadd.f32 0.0, %v2870
        %v2872 = vpop.f32.mrb[0].mxu0
        %v2873 = vpop.f32.mrb[0].mxu0
        %v2874 = vadd.f32 0.0, %v2873
        %v2875 = vpop.f32.mrb[0].mxu0
        %2876 = vmatprep.mubr.bf16.mxu0 0
        %2877 = vmatmul.mubr.bf16.gmra.mrb[0].mxu0 %v2769
        %v2878 = vpop.f32.mrb[0].mxu0
        %v2879 = vadd.f32 0.0, %v2878
        %v2880 = vpop.f32.mrb[0].mxu0
        %v2881 = vpop.f32.mrb[0].mxu0
        %v2882 = vadd.f32 0.0, %v2881
        %v2883 = vpop.f32.mrb[0].mxu0
        %2884 = vmatprep.mubr.bf16.mxu0 0
        %2885 = vmatmul.mubr.bf16.gmra.mrb[0].mxu0 %v2770
        %v2886 = vpop.f32.mrb[0].mxu0
        %v2887 = vadd.f32 0.0, %v2886
        %v2888 = vpop.f32.mrb[0].mxu0
        %v2889 = vpop.f32.mrb[0].mxu0
        %v2890 = vadd.f32 0.0, %v2889
        %v2891 = vpop.f32.mrb[0].mxu0
        %2892 = vmatprep.mubr.bf16.mxu0 0
        %2893 = vmatmul.mubr.bf16.gmra.mrb[0].mxu0 %v2771
        %v2894 = vpop.f32.mrb[0].mxu0
        %v2895 = vadd.f32 0.0, %v2894
        %v2896 = vpop.f32.mrb[0].mxu0
        %v2897 = vpop.f32.mrb[0].mxu0
        %v2898 = vadd.f32 0.0, %v2897
        %v2899 = vpop.f32.mrb[0].mxu0
        %2900 = vdwg.mxu0
        %v2901 = vrcp.pop %v2733
        %v2902 = vrcp.pop %v2735
        %v2903 = vrcp.pop %v2737
        %v2904 = vrcp.pop %v2739
        %v2905 = vrcp.pop %v2741
        %v2906 = vrcp.pop %v2743
        %v2907 = vrcp.pop %v2745
        %v2908 = vrcp.pop %v2747
        %v2909 = vrcp.pop %v2749
        %v2910 = vrcp.pop %v2751
        %v2911 = vrcp.pop %v2753
        %v2912 = vrcp.pop %v2755
        %v2913 = vrcp.pop %v2757
        %v2914 = vrcp.pop %v2759
        %v2915 = vrcp.pop %v2761
        %v2916 = vrcp.pop %v2763
        %v2917 = vmul.f32 %v2839, %v2901
        %v2918 = vmul.f32 %v2842, %v2902
        %v2919 = vmul.f32 %v2847, %v2903
        %v2920 = vmul.f32 %v2850, %v2904
        %v2921 = vmul.f32 %v2855, %v2905
        %v2922 = vmul.f32 %v2858, %v2906
        %v2923 = vmul.f32 %v2863, %v2907
        %v2924 = vmul.f32 %v2866, %v2908
        %v2925 = vmul.f32 %v2871, %v2909
        %v2926 = vmul.f32 %v2874, %v2910
        %v2927 = vmul.f32 %v2879, %v2911
        %v2928 = vmul.f32 %v2882, %v2912
        %v2929 = vmul.f32 %v2887, %v2913
        %v2930 = vmul.f32 %v2890, %v2914
        %v2931 = vmul.f32 %v2895, %v2915
        %v2932 = vmul.f32 %v2898, %v2916
        %v2933 = vpack.c.bf16 %v2918, %v2917
        %v2934 = vpack.c.bf16 %v2920, %v2919
        %v2935 = vpack.c.bf16 %v2922, %v2921
        %v2936 = vpack.c.bf16 %v2924, %v2923
        %v2937 = vpack.c.bf16 %v2926, %v2925
        %v2938 = vpack.c.bf16 %v2928, %v2927
        %v2939 = vpack.c.bf16 %v2930, %v2929
        %v2940 = vpack.c.bf16 %v2932, %v2931
        %2949 = vrot.lane.b32.xlu0 %v2933, 96
        %v2950 = vpop.permute.xlu0 %2949
        %2951 = vrot.lane.b32.xlu0 %v2934, 96
        %v2952 = vpop.permute.xlu0 %2951
        %2953 = vrot.lane.b32.xlu0 %v2935, 96
        %v2954 = vpop.permute.xlu0 %2953
        %2955 = vrot.lane.b32.xlu0 %v2936, 96
        %v2956 = vpop.permute.xlu0 %2955
        %2957 = vrot.lane.b32.xlu0 %v2937, 96
        %v2958 = vpop.permute.xlu0 %2957
        %2959 = vrot.lane.b32.xlu0 %v2938, 96
        %v2960 = vpop.permute.xlu0 %2959
        %2961 = vrot.lane.b32.xlu0 %v2939, 96
        %v2962 = vpop.permute.xlu0 %2961
        %2963 = vrot.lane.b32.xlu0 %v2940, 96
        %v2964 = vpop.permute.xlu0 %2963
        %vm2973 = vcmask 1048320
        %2974 = vst.msk [vmem:[#allocation3] sm:$0xff] %vm2973, %v2950
        %2975 = vst.msk [vmem:[#allocation3 + $0x8] sm:$0xff] %vm2973, %v2952
        %2976 = vst.msk [vmem:[#allocation3 + $0x10] sm:$0xff] %vm2973, %v2954
        %2977 = vst.msk [vmem:[#allocation3 + $0x18] sm:$0xff] %vm2973, %v2956
        %2978 = vst.msk [vmem:[#allocation3 + $0x20] sm:$0xff] %vm2973, %v2958
        %2979 = vst.msk [vmem:[#allocation3 + $0x28] sm:$0xff] %vm2973, %v2960
        %2980 = vst.msk [vmem:[#allocation3 + $0x30] sm:$0xff] %vm2973, %v2962
        %2981 = vst.msk [vmem:[#allocation3 + $0x38] sm:$0xff] %vm2973, %v2964
        %v2982 = vld [vmem:[#allocation3] sm:$0xff]
        %v2983 = vld [vmem:[#allocation3 + $0x8] sm:$0xff]
        %v2984 = vld [vmem:[#allocation3 + $0x10] sm:$0xff]
        %v2985 = vld [vmem:[#allocation3 + $0x18] sm:$0xff]
        %v2986 = vld [vmem:[#allocation3 + $0x20] sm:$0xff]
        %v2987 = vld [vmem:[#allocation3 + $0x28] sm:$0xff]
        %v2988 = vld [vmem:[#allocation3 + $0x30] sm:$0xff]
        %v2989 = vld [vmem:[#allocation3 + $0x38] sm:$0xff]
        %v2990 = vld [vmem:[#allocation10] sm:$0xf]
        %v2991 = vld [vmem:[#allocation10 + $0x4] sm:$0xf]
        %v2992 = vld [vmem:[#allocation10 + $0x8] sm:$0xf]
        %v2993 = vld [vmem:[#allocation10 + $0xc] sm:$0xf]
        %v2994 = vld [vmem:[#allocation10 + $0x10] sm:$0xf]
        %v2995 = vld [vmem:[#allocation10 + $0x14] sm:$0xf]
        %v2996 = vld [vmem:[#allocation10 + $0x18] sm:$0xf]
        %v2997 = vld [vmem:[#allocation10 + $0x1c] sm:$0xf]
        %v2998 = vld [vmem:[#allocation10 + $0x20] sm:$0xf]
        %v2999 = vld [vmem:[#allocation10 + $0x24] sm:$0xf]
        %v3000 = vld [vmem:[#allocation10 + $0x28] sm:$0xf]
        %v3001 = vld [vmem:[#allocation10 + $0x2c] sm:$0xf]
        %v3002 = vld [vmem:[#allocation10 + $0x30] sm:$0xf]
        %v3003 = vld [vmem:[#allocation10 + $0x34] sm:$0xf]
        %v3004 = vld [vmem:[#allocation10 + $0x38] sm:$0xf]
        %v3005 = vld [vmem:[#allocation10 + $0x3c] sm:$0xf]
        %v3006 = vld [vmem:[%s5] sm:$0x1]
        %v3008 = vlaneseq
        %v3009 = vshrl.u32 %v3008, 7
        %v3010 = vsub.s32 0, %v3009
        %v3011 = vrot.slane %v3006, %v3010
        %v3029 = vunpack.c.l.b16 %v2990
        %v3030 = vunpack.c.l.b16 %v2991
        %v3031 = vunpack.c.l.b16 %v2992
        %v3032 = vunpack.c.l.b16 %v2993
        %v3033 = vunpack.c.l.b16 %v2994
        %v3034 = vunpack.c.l.b16 %v2995
        %v3035 = vunpack.c.l.b16 %v2996
        %v3036 = vunpack.c.l.b16 %v2997
        %v3037 = vunpack.c.l.b16 %v2998
        %v3038 = vunpack.c.l.b16 %v2999
        %v3039 = vunpack.c.l.b16 %v3000
        %v3040 = vunpack.c.l.b16 %v3001
        %v3041 = vunpack.c.l.b16 %v3002
        %v3042 = vunpack.c.l.b16 %v3003
        %v3043 = vunpack.c.l.b16 %v3004
        %v3044 = vunpack.c.l.b16 %v3005
        %v3045 = vpack.c.b16 %v3030, %v3029
        %v3046 = vpack.c.b16 %v3032, %v3031
        %v3047 = vpack.c.b16 %v3034, %v3033
        %v3048 = vpack.c.b16 %v3036, %v3035
        %v3049 = vpack.c.b16 %v3038, %v3037
        %v3050 = vpack.c.b16 %v3040, %v3039
        %v3051 = vpack.c.b16 %v3042, %v3041
        %v3052 = vpack.c.b16 %v3044, %v3043
        %3061 = vmatprep.subr.bf16.mxu0 0
        %3062 = vmatpush1.bf16.msra.mxu0 %v3045
        %3063 = vmatprep.subr.bf16.mxu0 0
        %3064 = vmatpush1.bf16.msra.mxu0 %v3046
        %3065 = vmatprep.subr.bf16.mxu0 0
        %3066 = vmatpush1.bf16.msra.mxu0 %v3047
        %3067 = vmatprep.subr.bf16.mxu0 0
        %3068 = vmatpush1.bf16.msra.mxu0 %v3048
        %3069 = vmatprep.subr.bf16.mxu0 0
        %3070 = vmatpush1.bf16.msra.mxu0 %v3049
        %3071 = vmatprep.subr.bf16.mxu0 0
        %3072 = vmatpush1.bf16.msra.mxu0 %v3050
        %3073 = vmatprep.subr.bf16.mxu0 0
        %3074 = vmatpush1.bf16.msra.mxu0 %v3051
        %3075 = vmatprep.subr.bf16.mxu0 0
        %3076 = vmatpush1.bf16.msra.mxu0 %v3052
        %3077 = vmatprep.subr.bf16.mxu0 0
        %3078 = vmatpush1.bf16.msra.mxu0 0
        %3079 = vmatprep.subr.bf16.mxu0 0
        %3080 = vmatpush1.bf16.msra.mxu0 0
        %3081 = vmatprep.subr.bf16.mxu0 0
        %3082 = vmatpush1.bf16.msra.mxu0 0
        %3083 = vmatprep.subr.bf16.mxu0 0
        %3084 = vmatpush1.bf16.msra.mxu0 0
        %3085 = vmatprep.subr.bf16.mxu0 0
        %3086 = vmatpush1.bf16.msra.mxu0 0
        %3087 = vmatprep.subr.bf16.mxu0 0
        %3088 = vmatpush1.bf16.msra.mxu0 0
        %3089 = vmatprep.subr.bf16.mxu0 0
        %3090 = vmatpush1.bf16.msra.mxu0 0
        %3091 = vmatprep.subr.bf16.mxu0 0
        %3092 = vmatpush1.bf16.msra.mxu0 0
        %3093 = vmatprep.mubr.bf16.mxu0 0
        %3094 = vmatmul.mubr.bf16.gmra.mrb[0].mxu0 %v2982
        %v3095 = vpop.f32.mrb[0].mxu0
        %v3096 = vadd.f32 %v3011, %v3095
        %v3097 = vpop.f32.mrb[0].mxu0
        %v3098 = vpop.f32.mrb[0].mxu0
        %v3099 = vadd.f32 %v3011, %v3098
        %v3100 = vpop.f32.mrb[0].mxu0
        %3101 = vmatprep.mubr.bf16.mxu0 0
        %3102 = vmatmul.mubr.bf16.gmra.mrb[0].mxu0 %v2983
        %v3103 = vpop.f32.mrb[0].mxu0
        %v3104 = vadd.f32 %v3011, %v3103
        %v3105 = vpop.f32.mrb[0].mxu0
        %v3106 = vpop.f32.mrb[0].mxu0
        %v3107 = vadd.f32 %v3011, %v3106
        %v3108 = vpop.f32.mrb[0].mxu0
        %3109 = vmatprep.mubr.bf16.mxu0 0
        %3110 = vmatmul.mubr.bf16.gmra.mrb[0].mxu0 %v2984
        %v3111 = vpop.f32.mrb[0].mxu0
        %v3112 = vadd.f32 %v3011, %v3111
        %v3113 = vpop.f32.mrb[0].mxu0
        %v3114 = vpop.f32.mrb[0].mxu0
        %v3115 = vadd.f32 %v3011, %v3114
        %v3116 = vpop.f32.mrb[0].mxu0
        %3117 = vmatprep.mubr.bf16.mxu0 0
        %3118 = vmatmul.mubr.bf16.gmra.mrb[0].mxu0 %v2985
        %v3119 = vpop.f32.mrb[0].mxu0
        %v3120 = vadd.f32 %v3011, %v3119
        %v3121 = vpop.f32.mrb[0].mxu0
        %v3122 = vpop.f32.mrb[0].mxu0
        %v3123 = vadd.f32 %v3011, %v3122
        %v3124 = vpop.f32.mrb[0].mxu0
        %3125 = vmatprep.mubr.bf16.mxu0 0
        %3126 = vmatmul.mubr.bf16.gmra.mrb[0].mxu0 %v2986
        %v3127 = vpop.f32.mrb[0].mxu0
        %v3128 = vadd.f32 %v3011, %v3127
        %v3129 = vpop.f32.mrb[0].mxu0
        %v3130 = vpop.f32.mrb[0].mxu0
        %v3131 = vadd.f32 %v3011, %v3130
        %v3132 = vpop.f32.mrb[0].mxu0
        %3133 = vmatprep.mubr.bf16.mxu0 0
        %3134 = vmatmul.mubr.bf16.gmra.mrb[0].mxu0 %v2987
        %v3135 = vpop.f32.mrb[0].mxu0
        %v3136 = vadd.f32 %v3011, %v3135
        %v3137 = vpop.f32.mrb[0].mxu0
        %v3138 = vpop.f32.mrb[0].mxu0
        %v3139 = vadd.f32 %v3011, %v3138
        %v3140 = vpop.f32.mrb[0].mxu0
        %3141 = vmatprep.mubr.bf16.mxu0 0
        %3142 = vmatmul.mubr.bf16.gmra.mrb[0].mxu0 %v2988
        %v3143 = vpop.f32.mrb[0].mxu0
        %v3144 = vadd.f32 %v3011, %v3143
        %v3145 = vpop.f32.mrb[0].mxu0
        %v3146 = vpop.f32.mrb[0].mxu0
        %v3147 = vadd.f32 %v3011, %v3146
        %v3148 = vpop.f32.mrb[0].mxu0
        %3149 = vmatprep.mubr.bf16.mxu0 0
        %3150 = vmatmul.mubr.bf16.gmra.mrb[0].mxu0 %v2989
        %v3151 = vpop.f32.mrb[0].mxu0
        %v3152 = vadd.f32 %v3011, %v3151
        %v3153 = vpop.f32.mrb[0].mxu0
        %v3154 = vpop.f32.mrb[0].mxu0
        %v3155 = vadd.f32 %v3011, %v3154
        %v3156 = vpop.f32.mrb[0].mxu0
        %3157 = vdwg.mxu0
        %v3158 = vld [vmem:[%s333] sm:$0xff]
        %v3159 = vld [vmem:[%s333 + $0x8] sm:$0xff]
        %v3160 = vld [vmem:[%s333 + $0x10] sm:$0xff]
        %v3161 = vld [vmem:[%s333 + $0x18] sm:$0xff]
        %v3162 = vld [vmem:[%s333 + $0x20] sm:$0xff]
        %v3163 = vld [vmem:[%s333 + $0x28] sm:$0xff]
        %v3164 = vld [vmem:[%s333 + $0x30] sm:$0xff]
        %v3165 = vld [vmem:[%s333 + $0x38] sm:$0xff]
        %v3166 = vld [vmem:[%s333 + $0x40] sm:$0xff]
        %v3167 = vld [vmem:[%s333 + $0x48] sm:$0xff]
        %v3168 = vld [vmem:[%s333 + $0x50] sm:$0xff]
        %v3169 = vld [vmem:[%s333 + $0x58] sm:$0xff]
        %v3170 = vld [vmem:[%s333 + $0x60] sm:$0xff]
        %v3171 = vld [vmem:[%s333 + $0x68] sm:$0xff]
        %v3172 = vld [vmem:[%s333 + $0x70] sm:$0xff]
        %v3173 = vld [vmem:[%s333 + $0x78] sm:$0xff]
        %v3174 = vadd.f32 %v3158, %v3096
        %v3175 = vadd.f32 %v3159, %v3099
        %v3176 = vadd.f32 %v3160, %v3104
        %v3177 = vadd.f32 %v3161, %v3107
        %v3178 = vadd.f32 %v3162, %v3112
        %v3179 = vadd.f32 %v3163, %v3115
        %v3180 = vadd.f32 %v3164, %v3120
        %v3181 = vadd.f32 %v3165, %v3123
        %v3182 = vadd.f32 %v3166, %v3128
        %v3183 = vadd.f32 %v3167, %v3131
        %v3184 = vadd.f32 %v3168, %v3136
        %v3185 = vadd.f32 %v3169, %v3139
        %v3186 = vadd.f32 %v3170, %v3144
        %v3187 = vadd.f32 %v3171, %v3147
        %v3188 = vadd.f32 %v3172, %v3152
        %v3189 = vadd.f32 %v3173, %v3155
        %v3190 = vpack.c.bf16 %v3175, %v3174
        %v3191 = vpack.c.bf16 %v3177, %v3176
        %v3192 = vpack.c.bf16 %v3179, %v3178
        %v3193 = vpack.c.bf16 %v3181, %v3180
        %v3194 = vpack.c.bf16 %v3183, %v3182
        %v3195 = vpack.c.bf16 %v3185, %v3184
        %v3196 = vpack.c.bf16 %v3187, %v3186
        %v3197 = vpack.c.bf16 %v3189, %v3188
        %v3198 = vld [vmem:[#allocation12] sm:$0xf]
        %v3199 = vld [vmem:[#allocation12 + $0x4] sm:$0xf]
        %v3200 = vld [vmem:[#allocation12 + $0x8] sm:$0xf]
        %v3201 = vld [vmem:[#allocation12 + $0xc] sm:$0xf]
        %v3202 = vld [vmem:[#allocation12 + $0x10] sm:$0xf]
        %v3203 = vld [vmem:[#allocation12 + $0x14] sm:$0xf]
        %v3204 = vld [vmem:[#allocation12 + $0x18] sm:$0xf]
        %v3205 = vld [vmem:[#allocation12 + $0x1c] sm:$0xf]
        %v3206 = vld [vmem:[#allocation12 + $0x20] sm:$0xf]
        %v3207 = vld [vmem:[#allocation12 + $0x24] sm:$0xf]
        %v3208 = vld [vmem:[#allocation12 + $0x28] sm:$0xf]
        %v3209 = vld [vmem:[#allocation12 + $0x2c] sm:$0xf]
        %v3210 = vld [vmem:[#allocation12 + $0x30] sm:$0xf]
        %v3211 = vld [vmem:[#allocation12 + $0x34] sm:$0xf]
        %v3212 = vld [vmem:[#allocation12 + $0x38] sm:$0xf]
        %v3213 = vld [vmem:[#allocation12 + $0x3c] sm:$0xf]
        %v3214 = vld [vmem:[%s7] sm:$0x1]
        %v3216 = vlaneseq
        %v3217 = vshrl.u32 %v3216, 7
        %v3218 = vsub.s32 0, %v3217
        %v3219 = vrot.slane %v3214, %v3218
        %v3237 = vunpack.c.l.b16 %v3198
        %v3238 = vunpack.c.l.b16 %v3199
        %v3239 = vunpack.c.l.b16 %v3200
        %v3240 = vunpack.c.l.b16 %v3201
        %v3241 = vunpack.c.l.b16 %v3202
        %v3242 = vunpack.c.l.b16 %v3203
        %v3243 = vunpack.c.l.b16 %v3204
        %v3244 = vunpack.c.l.b16 %v3205
        %v3245 = vunpack.c.l.b16 %v3206
        %v3246 = vunpack.c.l.b16 %v3207
        %v3247 = vunpack.c.l.b16 %v3208
        %v3248 = vunpack.c.l.b16 %v3209
        %v3249 = vunpack.c.l.b16 %v3210
        %v3250 = vunpack.c.l.b16 %v3211
        %v3251 = vunpack.c.l.b16 %v3212
        %v3252 = vunpack.c.l.b16 %v3213
        %v3253 = vpack.c.b16 %v3238, %v3237
        %v3254 = vpack.c.b16 %v3240, %v3239
        %v3255 = vpack.c.b16 %v3242, %v3241
        %v3256 = vpack.c.b16 %v3244, %v3243
        %v3257 = vpack.c.b16 %v3246, %v3245
        %v3258 = vpack.c.b16 %v3248, %v3247
        %v3259 = vpack.c.b16 %v3250, %v3249
        %v3260 = vpack.c.b16 %v3252, %v3251
        %3269 = vmatprep.subr.bf16.mxu0 0
        %3270 = vmatpush1.bf16.msra.mxu0 %v3253
        %3271 = vmatprep.subr.bf16.mxu0 0
        %3272 = vmatpush1.bf16.msra.mxu0 %v3254
        %3273 = vmatprep.subr.bf16.mxu0 0
        %3274 = vmatpush1.bf16.msra.mxu0 %v3255
        %3275 = vmatprep.subr.bf16.mxu0 0
        %3276 = vmatpush1.bf16.msra.mxu0 %v3256
        %3277 = vmatprep.subr.bf16.mxu0 0
        %3278 = vmatpush1.bf16.msra.mxu0 %v3257
        %3279 = vmatprep.subr.bf16.mxu0 0
        %3280 = vmatpush1.bf16.msra.mxu0 %v3258
        %3281 = vmatprep.subr.bf16.mxu0 0
        %3282 = vmatpush1.bf16.msra.mxu0 %v3259
        %3283 = vmatprep.subr.bf16.mxu0 0
        %3284 = vmatpush1.bf16.msra.mxu0 %v3260
        %3285 = vmatprep.subr.bf16.mxu0 0
        %3286 = vmatpush1.bf16.msra.mxu0 0
        %3287 = vmatprep.subr.bf16.mxu0 0
        %3288 = vmatpush1.bf16.msra.mxu0 0
        %3289 = vmatprep.subr.bf16.mxu0 0
        %3290 = vmatpush1.bf16.msra.mxu0 0
        %3291 = vmatprep.subr.bf16.mxu0 0
        %3292 = vmatpush1.bf16.msra.mxu0 0
        %3293 = vmatprep.subr.bf16.mxu0 0
        %3294 = vmatpush1.bf16.msra.mxu0 0
        %3295 = vmatprep.subr.bf16.mxu0 0
        %3296 = vmatpush1.bf16.msra.mxu0 0
        %3297 = vmatprep.subr.bf16.mxu0 0
        %3298 = vmatpush1.bf16.msra.mxu0 0
        %3299 = vmatprep.subr.bf16.mxu0 0
        %3300 = vmatpush1.bf16.msra.mxu0 0
        %3301 = vmatprep.mubr.bf16.mxu0 0
        %3302 = vmatmul.mubr.bf16.gmra.mrb[0].mxu0 %v3190
        %v3303 = vpop.f32.mrb[0].mxu0
        %v3304 = vadd.f32 %v3219, %v3303
        %v3305 = vpop.f32.mrb[0].mxu0
        %v3306 = vpop.f32.mrb[0].mxu0
        %v3307 = vadd.f32 %v3219, %v3306
        %v3308 = vpop.f32.mrb[0].mxu0
        %3309 = vmatprep.mubr.bf16.mxu0 0
        %3310 = vmatmul.mubr.bf16.gmra.mrb[0].mxu0 %v3191
        %v3311 = vpop.f32.mrb[0].mxu0
        %v3312 = vadd.f32 %v3219, %v3311
        %v3313 = vpop.f32.mrb[0].mxu0
        %v3314 = vpop.f32.mrb[0].mxu0
        %v3315 = vadd.f32 %v3219, %v3314
        %v3316 = vpop.f32.mrb[0].mxu0
        %3317 = vmatprep.mubr.bf16.mxu0 0
        %3318 = vmatmul.mubr.bf16.gmra.mrb[0].mxu0 %v3192
        %v3319 = vpop.f32.mrb[0].mxu0
        %v3320 = vadd.f32 %v3219, %v3319
        %v3321 = vpop.f32.mrb[0].mxu0
        %v3322 = vpop.f32.mrb[0].mxu0
        %v3323 = vadd.f32 %v3219, %v3322
        %v3324 = vpop.f32.mrb[0].mxu0
        %3325 = vmatprep.mubr.bf16.mxu0 0
        %3326 = vmatmul.mubr.bf16.gmra.mrb[0].mxu0 %v3193
        %v3327 = vpop.f32.mrb[0].mxu0
        %v3328 = vadd.f32 %v3219, %v3327
        %v3329 = vpop.f32.mrb[0].mxu0
        %v3330 = vpop.f32.mrb[0].mxu0
        %v3331 = vadd.f32 %v3219, %v3330
        %v3332 = vpop.f32.mrb[0].mxu0
        %3333 = vmatprep.mubr.bf16.mxu0 0
        %3334 = vmatmul.mubr.bf16.gmra.mrb[0].mxu0 %v3194
        %v3335 = vpop.f32.mrb[0].mxu0
        %v3336 = vadd.f32 %v3219, %v3335
        %v3337 = vpop.f32.mrb[0].mxu0
        %v3338 = vpop.f32.mrb[0].mxu0
        %v3339 = vadd.f32 %v3219, %v3338
        %v3340 = vpop.f32.mrb[0].mxu0
        %3341 = vmatprep.mubr.bf16.mxu0 0
        %3342 = vmatmul.mubr.bf16.gmra.mrb[0].mxu0 %v3195
        %v3343 = vpop.f32.mrb[0].mxu0
        %v3344 = vadd.f32 %v3219, %v3343
        %v3345 = vpop.f32.mrb[0].mxu0
        %v3346 = vpop.f32.mrb[0].mxu0
        %v3347 = vadd.f32 %v3219, %v3346
        %v3348 = vpop.f32.mrb[0].mxu0
        %3349 = vmatprep.mubr.bf16.mxu0 0
        %3350 = vmatmul.mubr.bf16.gmra.mrb[0].mxu0 %v3196
        %v3351 = vpop.f32.mrb[0].mxu0
        %v3352 = vadd.f32 %v3219, %v3351
        %v3353 = vpop.f32.mrb[0].mxu0
        %v3354 = vpop.f32.mrb[0].mxu0
        %v3355 = vadd.f32 %v3219, %v3354
        %v3356 = vpop.f32.mrb[0].mxu0
        %3357 = vmatprep.mubr.bf16.mxu0 0
        %3358 = vmatmul.mubr.bf16.gmra.mrb[0].mxu0 %v3197
        %v3359 = vpop.f32.mrb[0].mxu0
        %v3360 = vadd.f32 %v3219, %v3359
        %v3361 = vpop.f32.mrb[0].mxu0
        %v3362 = vpop.f32.mrb[0].mxu0
        %v3363 = vadd.f32 %v3219, %v3362
        %v3364 = vpop.f32.mrb[0].mxu0
        %3365 = vdwg.mxu0
        %v3366 = vadd.f32 %v3174, %v3304
        %v3367 = vadd.f32 %v3175, %v3307
        %v3368 = vadd.f32 %v3176, %v3312
        %v3369 = vadd.f32 %v3177, %v3315
        %v3370 = vadd.f32 %v3178, %v3320
        %v3371 = vadd.f32 %v3179, %v3323
        %v3372 = vadd.f32 %v3180, %v3328
        %v3373 = vadd.f32 %v3181, %v3331
        %v3374 = vadd.f32 %v3182, %v3336
        %v3375 = vadd.f32 %v3183, %v3339
        %v3376 = vadd.f32 %v3184, %v3344
        %v3377 = vadd.f32 %v3185, %v3347
        %v3378 = vadd.f32 %v3186, %v3352
        %v3379 = vadd.f32 %v3187, %v3355
        %v3380 = vadd.f32 %v3188, %v3360
        %v3381 = vadd.f32 %v3189, %v3363
        %3382 = vst [vmem:[%s381] sm:$0xff] %v3366
        %3383 = vst [vmem:[%s381 + $0x8] sm:$0xff] %v3367
        %3384 = vst [vmem:[%s381 + $0x10] sm:$0xff] %v3368
        %3385 = vst [vmem:[%s381 + $0x18] sm:$0xff] %v3369
        %3386 = vst [vmem:[%s381 + $0x20] sm:$0xff] %v3370
        %3387 = vst [vmem:[%s381 + $0x28] sm:$0xff] %v3371
        %3388 = vst [vmem:[%s381 + $0x30] sm:$0xff] %v3372
        %3389 = vst [vmem:[%s381 + $0x38] sm:$0xff] %v3373
        %3390 = vst [vmem:[%s381 + $0x40] sm:$0xff] %v3374
        %3391 = vst [vmem:[%s381 + $0x48] sm:$0xff] %v3375
        %3392 = vst [vmem:[%s381 + $0x50] sm:$0xff] %v3376
        %3393 = vst [vmem:[%s381 + $0x58] sm:$0xff] %v3377
        %3394 = vst [vmem:[%s381 + $0x60] sm:$0xff] %v3378
        %3395 = vst [vmem:[%s381 + $0x68] sm:$0xff] %v3379
        %3396 = vst [vmem:[%s381 + $0x70] sm:$0xff] %v3380
        %3397 = vst [vmem:[%s381 + $0x78] sm:$0xff] %v3381
        %s3398 = sand.u32 %s208, 1
        %s3399 = scalar_lea.sflag [#allocation6], %s3398
        %s3400 = sand.u32 %s208, 1
        %s3401 = smul.addr %s3400, 128
        %s3402 = scalar_lea.vmem [#allocation13], %s3401
        // Predicated region
        $region73: #{tpu_custom_call.1} parent=51 // pred_check
          %p3403 = pneg %p218
        $region74: #{tpu_custom_call.1} parent=51 // pred_check_branch
          %3405 = sbr.rel (%p3403) target = $region76
        $region75: #{tpu_custom_call.1} parent=51 // pred_region
          %s3407 = ssub.s32 2048, 2048
          %3408 = vsyncadd %s3399, %s3407
          %s3409 = smul.addr %s27, 16
          %s3410 = smul.addr %s3409, 128
          %s3411 = scalar_lea.hbm %s8, %s3410
          %s3412 = sshll.u32 %s3402, 4
          %s3413 = int_to_ptr.vmem [resolvable:$true] %s3412
          %3418 = dma.vmem_to_hbm [thread:$0]  %s3413, 2048, %s3411, %s3399, 128, 128, 8
        $region76: #{tpu_custom_call.1} parent=51 // pred_fallthru
          _
      $region52: #{tpu_custom_call.1} parent=5 // pred_fallthru
        _
      %p3419 = scmp.le.s32.totalorder 2, %s22
      // Predicated region
      $region77: #{tpu_custom_call.1} parent=5 // pred_check
        %p3420 = pneg %p3419
      $region78: #{tpu_custom_call.1} parent=5 // pred_check_branch
        %3422 = sbr.rel (%p3420) target = $region80
      $region79: #{tpu_custom_call.1} parent=5 // pred_region
        %s3423 = ssub.s32 %s22, 2
        // Predicated region
        $region81: #{tpu_custom_call.1} parent=79 // pred_check
          %p3424 = pneg %p224
        $region82: #{tpu_custom_call.1} parent=79 // pred_check_branch
          %3426 = sbr.rel (%p3424) target = $region84
        $region83: #{tpu_custom_call.1} parent=79 // pred_region
          %s3427 = sand.u32 %s209, 1
          %s3428 = scalar_lea.sflag [#allocation6], %s3427
          %s3429 = sand.u32 %s209, 1
          %s3430 = smul.addr %s3429, 128
          %s3431 = scalar_lea.vmem [#allocation13], %s3430
          %3432 = dma.done %s3428, 2048
        $region84: #{tpu_custom_call.1} parent=79 // pred_fallthru
          _
      $region80: #{tpu_custom_call.1} parent=5 // pred_fallthru
        _
    $region6: #{tpu_custom_call.1} parent=1 // loop_footer
      %s26 = sadd.s32 1, %s22
    $region7: #{tpu_custom_call.1} parent=1 // loop_footer_branch
      %21 = sbr.rel target = $region3
    $region8: #{tpu_custom_call.1} parent=1 // loop_exit
      _
    %3433 = vsyncpa [#allocation5], 1
    %s3434 = scalar_lea.sflag [#allocation5], 1
    %3435 = vsyncpa %s3434, 1
    %3436 = vsyncpa [#allocation8], 1
    %3437 = vsyncpa [#allocation11], 1
    %3438 = vsyncpa [#allocation6], 1
    %s3439 = scalar_lea.sflag [#allocation6], 1
    %3440 = vsyncpa %s3439, 1

</llo_original>
